<compile_context>
chip_gen: v6e
topology: v6e:2x2x1
jax: 0.10.0
libtpu: 0.0.40
codegen_flags: <defaults>
</compile_context>

<pallas_src>
import functools

import jax
import jax.numpy as jnp
from jax import lax
from jax.experimental import pallas as pl
from jax.experimental.pallas import tpu as pltpu


_TIME_CHUNK = 8     # recurrence time steps per grid iteration (also unroll factor)
_BATCH_BLOCK = 16   # batch rows per recurrence block (full bf16 sublane tile)


# --------------------------------------------------------------------------
# helpers
# --------------------------------------------------------------------------
def _round_up(x, m):
    return ((x + m - 1) // m) * m


def _choose_tile(dim, quantum, cap):
    """Return (tile, padded_dim): tile is a multiple of `quantum`, never exceeds
    `cap` for large dims, and divides padded_dim >= dim (pad instead of the old
    full-dimension fallback)."""
    if dim <= cap:
        t = _round_up(dim, quantum)
        return t, t
    best = 0
    for t in range(quantum, cap + 1, quantum):
        if dim % t == 0:
            best = t
    if best:
        return best, dim
    return cap, _round_up(dim, cap)


def _pad_gate_cols(w, h, h_pad):
    """Pad the 4H gate axis (last axis, PyTorch order i|f|g|o) gate-wise to 4*h_pad."""
    if h == h_pad:
        return w
    lead = w.shape[:-1]
    w4 = w.reshape(lead + (4, h))
    w4 = jnp.pad(w4, [(0, 0)] * len(lead) + [(0, 0), (0, h_pad - h)])
    return w4.reshape(lead + (4 * h_pad,))


# --------------------------------------------------------------------------
# 1 & 3) big tiled matmul + bias  (used for X@W_ih and H@W_lin)
# --------------------------------------------------------------------------
def _matmul_bias_kernel(a_ref, b_ref, bias_ref, o_ref):
    o_ref[...] = (
        jnp.dot(a_ref[...], b_ref[...], preferred_element_type=jnp.float32)
        + bias_ref[...]
    ).astype(o_ref.dtype)


def _matmul_bias(a, b, bias, *, out_dtype=jnp.float32, tm_cap=256, tn_cap=1024):
    """a: (M, K), b: (K, N), bias: (1, N) -> (M, N).  K kept as one block."""
    M, K = a.shape
    _, N = b.shape
    tm, m_pad = _choose_tile(M, 16, tm_cap)    # 16 rows: full bf16 sublane tiles
    tn, n_pad = _choose_tile(N, 128, tn_cap)   # lane-dense output stores
    if m_pad != M:
        a = jnp.pad(a, ((0, m_pad - M), (0, 0)))
    if n_pad != N:
        b = jnp.pad(b, ((0, 0), (0, n_pad - N)))
        bias = jnp.pad(bias, ((0, 0), (0, n_pad - N)))
    grid = (m_pad // tm, n_pad // tn)

    blk_bytes = (tm * K * a.dtype.itemsize + K * tn * b.dtype.itemsize
                 + tn * bias.dtype.itemsize + tm * tn * jnp.dtype(out_dtype).itemsize)
    vmem_limit = int(min(max(2 * blk_bytes + (4 << 20), 32 << 20), 64 << 20))

    out = pl.pallas_call(
        _matmul_bias_kernel,
        out_shape=jax.ShapeDtypeStruct((m_pad, n_pad), out_dtype),
        grid_spec=pltpu.PrefetchScalarGridSpec(
            num_scalar_prefetch=0,
            grid=grid,
            in_specs=[
                pl.BlockSpec((tm, K), lambda i, j: (i, 0)),
                pl.BlockSpec((K, tn), lambda i, j: (0, j)),
                pl.BlockSpec((1, tn), lambda i, j: (0, j)),
            ],
            out_specs=pl.BlockSpec((tm, tn), lambda i, j: (i, j)),
        ),
        compiler_params=pltpu.CompilerParams(
            dimension_semantics=("parallel", "parallel"),
            vmem_limit_bytes=vmem_limit,
        ),
    )(a, b, bias)
    if m_pad != M or n_pad != N:
        out = out[:M, :N]
    return out


# --------------------------------------------------------------------------
# 2) LSTM recurrence: time-chunked grid, h/c carried in persistent VMEM scratch
# --------------------------------------------------------------------------
def _lstm_recurrence_kernel(gx_ref, whh_ref, h_all_ref, h_sc, c_sc, *, hidden, chunk):
    # New batch block (time index restarts) -> reset carried (h, c) state.
    @pl.when(pl.program_id(1) == 0)
    def _():
        h_sc[...] = jnp.zeros_like(h_sc)
        c_sc[...] = jnp.zeros_like(c_sc)

    H = hidden
    w_hh = whh_ref[...]                       # (H_pad, 4H_pad) bf16, VMEM-resident

    def step(t, carry):
        h, c = carry                          # h: bf16 (MXU lhs), c: f32
        # gates = (x_t @ W_ih + b) [precomputed, bf16] + h @ W_hh   (order i,f,g,o)
        gates = gx_ref[t].astype(jnp.float32) + jnp.dot(
            h, w_hh, preferred_element_type=jnp.float32)
        i_g = jax.nn.sigmoid(gates[:, 0 * H:1 * H])
        f_g = jax.nn.sigmoid(gates[:, 1 * H:2 * H])
        g_g = jnp.tanh(gates[:, 2 * H:3 * H])
        o_g = jax.nn.sigmoid(gates[:, 3 * H:4 * H])
        c_new = f_g * c + i_g * g_g
        h_new = (o_g * jnp.tanh(c_new)).astype(jnp.bfloat16)
        h_all_ref[t] = h_new
        return h_new, c_new

    # Fully unrolled over the (small) chunk: keeps per-step matmul/EUP visible
    # to the LLO scheduler without exploding vreg live ranges.
    h_fin, c_fin = lax.fori_loop(0, chunk, step, (h_sc[...], c_sc[...]), unroll=True)
    h_sc[...] = h_fin
    c_sc[...] = c_fin


def _lstm_recurrence(gates_x, w_hh_bf16, *, hidden_pad, chunk, batch_block):
    T_pad, B_pad, G = gates_x.shape
    n_b = B_pad // batch_block
    n_t = T_pad // chunk
    kernel = functools.partial(
        _lstm_recurrence_kernel, hidden=hidden_pad, chunk=chunk)

    gx_bytes = chunk * batch_block * G * gates_x.dtype.itemsize
    ho_bytes = chunk * batch_block * hidden_pad * 2
    whh_bytes = hidden_pad * G * 2
    sc_bytes = batch_block * hidden_pad * (2 + 4)
    vmem_limit = int(min(max(2 * (gx_bytes + ho_bytes + whh_bytes) + sc_bytes
                             + (4 << 20), 32 << 20), 64 << 20))

    return pl.pallas_call(
        kernel,
        out_shape=jax.ShapeDtypeStruct((T_pad, B_pad, hidden_pad), jnp.bfloat16),
        grid_spec=pltpu.PrefetchScalarGridSpec(
            num_scalar_prefetch=0,
            grid=(n_b, n_t),
            in_specs=[
                pl.BlockSpec((chunk, batch_block, G), lambda b, t: (t, b, 0)),
                pl.BlockSpec((hidden_pad, G), lambda b, t: (0, 0)),
            ],
            out_specs=pl.BlockSpec((chunk, batch_block, hidden_pad),
                                   lambda b, t: (t, b, 0)),
            scratch_shapes=[
                pltpu.VMEM((batch_block, hidden_pad), jnp.bfloat16),  # h carry
                pltpu.VMEM((batch_block, hidden_pad), jnp.float32),   # c carry
            ],
        ),
        compiler_params=pltpu.CompilerParams(
            # batch blocks independent (megacore-splittable on v7x);
            # time chunks strictly sequential.
            dimension_semantics=("parallel", "arbitrary"),
            vmem_limit_bytes=vmem_limit,
        ),
    )(gates_x, w_hh_bf16)


# --------------------------------------------------------------------------
# full forward
# --------------------------------------------------------------------------
def image_captioning_forward(features, captions, params):
    """features: (B, E) f32, captions: (B, T) int32 -> (B, T+1, V) f32 logits."""
    embed_table = params["embed"]    # (V, E)
    w_ih_t = params["w_ih_t"]        # (E, 4H)   (transposed vs PyTorch)
    w_hh_t = params["w_hh_t"]        # (H, 4H)
    b_gates = params["b_gates"]      # (1, 4H)   (= b_ih + b_hh)
    w_lin_t = params["w_lin_t"]      # (H, V)
    b_lin = params["b_lin"]          # (1, V)

    B, E = features.shape
    _, T = captions.shape
    H = w_hh_t.shape[0]
    V = w_lin_t.shape[1]
    T_total = T + 1

    # TPU-friendly padded sizes: batch -> 16 (bf16 sublane tile), hidden/vocab ->
    # 128 lanes, time -> recurrence chunk multiple.
    B_pad = _round_up(B, _BATCH_BLOCK)
    H_pad = _round_up(H, 128)
    V_pad = _round_up(V, 128)
    T_pad = _round_up(T_total, _TIME_CHUNK)

    # ---- glue (plain JAX): embedding gather + concat + pad, time-major ----
    # TODO(synk): embedding gather stays in XLA (jnp.take); a Pallas DMA-gather
    # kernel is not worth it for this lookup.
    embeddings = jnp.take(embed_table, captions, axis=0)              # (B, T, E)
    x = jnp.concatenate([features[:, None, :], embeddings], axis=1)   # (B, T+1, E)
    x = jnp.pad(x, ((0, B_pad - B), (0, 0), (0, 0)))                  # (B_pad, T+1, E)
    x_tm = jnp.transpose(x, (1, 0, 2))                                # (T+1, B_pad, E)
    x_tm = jnp.pad(x_tm, ((0, T_pad - T_total), (0, 0), (0, 0)))      # (T_pad, B_pad, E)
    x_tm = x_tm.reshape(T_pad * B_pad, E)

    # ---- pad / cast weights (zero pads keep padded hidden/vocab units inert) ----
    w_ih_p = _pad_gate_cols(w_ih_t, H, H_pad).astype(jnp.bfloat16)            # (E, 4H_pad)
    w_hh_p = _pad_gate_cols(
        jnp.pad(w_hh_t, ((0, H_pad - H), (0, 0))), H, H_pad
    ).astype(jnp.bfloat16)                                                    # (H_pad, 4H_pad)
    b_gates_p = _pad_gate_cols(b_gates, H, H_pad).astype(jnp.float32)         # (1, 4H_pad)
    w_lin_p = jnp.pad(
        w_lin_t, ((0, H_pad - H), (0, V_pad - V))
    ).astype(jnp.bfloat16)                                                    # (H_pad, V_pad)
    b_lin_p = jnp.pad(b_lin, ((0, 0), (0, V_pad - V))).astype(jnp.float32)    # (1, V_pad)

    # ---- 1) input-side gates for every step: one big MXU matmul (bf16 out) ----
    gates_x = _matmul_bias(
        x_tm.astype(jnp.bfloat16), w_ih_p, b_gates_p, out_dtype=jnp.bfloat16
    ).reshape(T_pad, B_pad, 4 * H_pad)

    # ---- 2) sequential recurrence (only h @ W_hh per step), time-chunked ----
    h_all = _lstm_recurrence(
        gates_x, w_hh_p, hidden_pad=H_pad,
        chunk=_TIME_CHUNK, batch_block=min(_BATCH_BLOCK, B_pad),
    )                                                       # (T_pad, B_pad, H_pad) bf16

    # ---- 3) vocab projection directly in (batch, time, vocab) layout ----
    # Transpose the small bf16 hidden states (≈ H/V of the logits' size) instead
    # of the f32 logits, so the projection output needs no HBM transpose pass.
    h_bm = jnp.transpose(h_all[:T_total], (1, 0, 2)).reshape(B_pad * T_total, H_pad)
    logits = _matmul_bias(
        h_bm, w_lin_p, b_lin_p, out_dtype=jnp.float32
    ).reshape(B_pad, T_total, V_pad)

    return logits[:B, :, :V]                                 # (B, T+1, V)


# --------------------------------------------------------------------------
# pure-JAX f32 reference (mirrors the PyTorch module) + params
# --------------------------------------------------------------------------
def _reference_forward(features, captions, params):
    emb = jnp.take(params["embed"], captions, axis=0)
    x = jnp.concatenate([features[:, None, :], emb], axis=1)
    B = x.shape[0]
    H = params["w_hh_t"].shape[0]

    def step(carry, x_t):
        h, c = carry
        g = x_t @ params["w_ih_t"] + h @ params["w_hh_t"] + params["b_gates"][0]
        i, f, gg, o = jnp.split(g, 4, axis=-1)
        c = jax.nn.sigmoid(f) * c + jax.nn.sigmoid(i) * jnp.tanh(gg)
        h = jax.nn.sigmoid(o) * jnp.tanh(c)
        return (h, c), h

    init = (jnp.zeros((B, H), jnp.float32), jnp.zeros((B, H), jnp.float32))
    _, hs = lax.scan(step, init, jnp.transpose(x, (1, 0, 2)))
    hs = jnp.transpose(hs, (1, 0, 2))
    return hs @ params["w_lin_t"] + params["b_lin"][0]


def init_params(key, embed_size, hidden_size, vocab_size):
    ks = jax.random.split(key, 6)
    scale = 0.1
    return {
        "embed":   scale * jax.random.normal(ks[0], (vocab_size, embed_size), jnp.float32),
        # stored transposed relative to PyTorch's (4H, E)/(4H, H); gate order i,f,g,o
        "w_ih_t":  scale * jax.random.normal(ks[1], (embed_size, 4 * hidden_size), jnp.float32),
        "w_hh_t":  scale * jax.random.normal(ks[2], (hidden_size, 4 * hidden_size), jnp.float32),
        "b_gates": scale * jax.random.normal(ks[3], (1, 4 * hidden_size), jnp.float32),
        "w_lin_t": scale * jax.random.normal(ks[4], (hidden_size, vocab_size), jnp.float32),
        "b_lin":   scale * jax.random.normal(ks[5], (1, vocab_size), jnp.float32),
    }


if __name__ == "__main__":
    # Small shapes consistent with the module's forward (exercise the padding
    # paths: B=2 -> 16, H=32 -> 128, V=1000 -> 1024, T+1=9 -> 16 time steps).
    B = 2         # batch
    T = 8         # caption length
    EMBED = 32    # embed_size
    HIDDEN = 32   # hidden_size
    VOCAB = 1000  # vocab_size (small stand-in for 10000; not lane-aligned on purpose)

    key = jax.random.PRNGKey(0)
    k_par, k_feat, k_cap = jax.random.split(key, 3)

    params = init_params(k_par, EMBED, HIDDEN, VOCAB)
    features = jax.random.normal(k_feat, (B, EMBED), jnp.float32)
    captions = jax.random.randint(k_cap, (B, T), 0, VOCAB, dtype=jnp.int32)

    fwd = jax.jit(image_captioning_forward)
    out = jax.block_until_ready(fwd(features, captions, params))
    assert out.shape == (B, T + 1, VOCAB), out.shape
    assert bool(jnp.all(jnp.isfinite(out)))

    # tolerance-check against the pure-f32 reference (bf16 matmul inputs/weights)
    ref = _reference_forward(features, captions, params)
    assert bool(jnp.allclose(out, ref, atol=5e-2, rtol=5e-2)), float(
        jnp.max(jnp.abs(out - ref)))

    print("KERNEL_OK")
</pallas_src>

<mosaic_0001>
module attributes {stable_mosaic.version = 11 : i64} {
  func.func @_lstm_recurrence_kernel(%arg0: i32, %arg1: i32, %arg2: memref<8x16x512xbf16, #tpu.memory_space<vmem>>, %arg3: memref<128x512xbf16, #tpu.memory_space<vmem>>, %arg4: memref<8x16x128xbf16, #tpu.memory_space<vmem>>, %arg5: memref<16x128xbf16, #tpu.memory_space<vmem>>, %arg6: memref<16x128xf32, #tpu.memory_space<vmem>>) attributes {dimension_semantics = [#tpu.dimension_semantics<parallel>, #tpu.dimension_semantics<arbitrary>], iteration_bounds = array<i64: 1, 2>, scalar_prefetch = 0 : i64, scratch_operands = 2 : i64, tpu.core_type = #tpu.core_type<tc>, window_params = [{transform_indices = @transform_0, window_bounds = array<i64: 8, 16, 512>}, {pipeline_mode = #tpu.pipeline_mode<synchronous>, transform_indices = @transform_1, window_bounds = array<i64: 128, 512>}, {transform_indices = @transform_2, window_bounds = array<i64: 8, 16, 128>}]} {
    %c0_i32 = arith.constant 0 : i32
    %0 = arith.cmpi eq, %arg1, %c0_i32 : i32
    %1 = arith.extui %0 : i1 to i32
    %c0_i32_0 = arith.constant 0 : i32
    %2 = arith.cmpi ne, %1, %c0_i32_0 : i32
    scf.if %2 {
      %cst_74 = arith.constant 0.000000e+00 : bf16
      %296 = vector.broadcast %cst_74 : bf16 to vector<16x128xbf16>
      %c0_75 = arith.constant 0 : index
      %c0_76 = arith.constant 0 : index
      %297 = vector.load %arg5[%c0_75, %c0_76] : memref<16x128xbf16, #tpu.memory_space<vmem>>, vector<16x128xbf16>
      tpu.vector_store %arg5[%c0_75, %c0_76], %296 {strides = array<i32>} : memref<16x128xbf16, #tpu.memory_space<vmem>>, vector<16x128xbf16>,
      %cst_77 = arith.constant 0.000000e+00 : f32
      %298 = vector.broadcast %cst_77 : f32 to vector<16x128xf32>
      %c0_78 = arith.constant 0 : index
      %c0_79 = arith.constant 0 : index
      %299 = vector.load %arg6[%c0_78, %c0_79] : memref<16x128xf32, #tpu.memory_space<vmem>>, vector<16x128xf32>
      tpu.vector_store %arg6[%c0_78, %c0_79], %298 {strides = array<i32>} : memref<16x128xf32, #tpu.memory_space<vmem>>, vector<16x128xf32>,
    } else {
    }
    %c0 = arith.constant 0 : index
    %c0_1 = arith.constant 0 : index
    %3 = vector.load %arg3[%c0, %c0_1] : memref<128x512xbf16, #tpu.memory_space<vmem>>, vector<128x512xbf16>
    %c0_2 = arith.constant 0 : index
    %c0_3 = arith.constant 0 : index
    %4 = vector.load %arg5[%c0_2, %c0_3] : memref<16x128xbf16, #tpu.memory_space<vmem>>, vector<16x128xbf16>
    %c0_4 = arith.constant 0 : index
    %c0_5 = arith.constant 0 : index
    %5 = vector.load %arg6[%c0_4, %c0_5] : memref<16x128xf32, #tpu.memory_space<vmem>>, vector<16x128xf32>
    %c0_i32_6 = arith.constant 0 : i32
    %6 = arith.index_cast %c0_i32_6 : i32 to index
    %c0_7 = arith.constant 0 : index
    %c0_8 = arith.constant 0 : index
    %7 = vector.load %arg2[%6, %c0_7, %c0_8] : memref<8x16x512xbf16, #tpu.memory_space<vmem>>, vector<1x16x512xbf16>
    %8 = vector.shape_cast %7 : vector<1x16x512xbf16> to vector<16x512xbf16>
    %9 = arith.extf %8 : vector<16x512xbf16> to vector<16x512xf32>
    %cst = arith.constant dense<0.000000e+00> : vector<16x512xf32>
    %10 = tpu.matmul %4, %3, %cst {dimension_numbers = #tpu.dot_dimension_numbers<[1], [0], [0], [1], [0, 0, 1, 1], [], []>} : vector<16x128xbf16>, vector<128x512xbf16>, vector<16x512xf32> -> vector<16x512xf32>
    %11 = arith.addf %9, %10 : vector<16x512xf32>
    %12 = vector.extract_strided_slice %11 {offsets = [0, 0], sizes = [16, 128], strides = [1, 1]} : vector<16x512xf32> to vector<16x128xf32>
    %13 = arith.negf %12 : vector<16x128xf32>
    %14 = math.exp %13 : vector<16x128xf32>
    %cst_9 = arith.constant 1.000000e+00 : f32
    %15 = vector.broadcast %cst_9 : f32 to vector<16x128xf32>
    %16 = arith.addf %15, %14 : vector<16x128xf32>
    %17 = arith.divf %15, %16 : vector<16x128xf32>
    %18 = vector.extract_strided_slice %11 {offsets = [0, 128], sizes = [16, 128], strides = [1, 1]} : vector<16x512xf32> to vector<16x128xf32>
    %19 = arith.negf %18 : vector<16x128xf32>
    %20 = math.exp %19 : vector<16x128xf32>
    %cst_10 = arith.constant 1.000000e+00 : f32
    %21 = vector.broadcast %cst_10 : f32 to vector<16x128xf32>
    %22 = arith.addf %21, %20 : vector<16x128xf32>
    %23 = arith.divf %21, %22 : vector<16x128xf32>
    %24 = vector.extract_strided_slice %11 {offsets = [0, 256], sizes = [16, 128], strides = [1, 1]} : vector<16x512xf32> to vector<16x128xf32>
    %25 = math.tanh %24 : vector<16x128xf32>
    %26 = vector.extract_strided_slice %11 {offsets = [0, 384], sizes = [16, 128], strides = [1, 1]} : vector<16x512xf32> to vector<16x128xf32>
    %27 = arith.negf %26 : vector<16x128xf32>
    %28 = math.exp %27 : vector<16x128xf32>
    %cst_11 = arith.constant 1.000000e+00 : f32
    %29 = vector.broadcast %cst_11 : f32 to vector<16x128xf32>
    %30 = arith.addf %29, %28 : vector<16x128xf32>
    %31 = arith.divf %29, %30 : vector<16x128xf32>
    %32 = arith.mulf %23, %5 : vector<16x128xf32>
    %33 = arith.mulf %17, %25 : vector<16x128xf32>
    %34 = arith.addf %32, %33 : vector<16x128xf32>
    %35 = math.tanh %34 : vector<16x128xf32>
    %36 = arith.mulf %31, %35 : vector<16x128xf32>
    %37 = arith.truncf %36 : vector<16x128xf32> to vector<16x128xbf16>
    %38 = arith.index_cast %c0_i32_6 : i32 to index
    %c0_12 = arith.constant 0 : index
    %c0_13 = arith.constant 0 : index
    %39 = vector.load %arg4[%38, %c0_12, %c0_13] : memref<8x16x128xbf16, #tpu.memory_space<vmem>>, vector<1x16x128xbf16>
    %40 = vector.shape_cast %39 : vector<1x16x128xbf16> to vector<16x128xbf16>
    %41 = vector.shape_cast %37 : vector<16x128xbf16> to vector<1x16x128xbf16>
    tpu.vector_store %arg4[%38, %c0_12, %c0_13], %41 {strides = array<i32>} : memref<8x16x128xbf16, #tpu.memory_space<vmem>>, vector<1x16x128xbf16>,
    %c1_i32 = arith.constant 1 : i32
    %42 = arith.index_cast %c1_i32 : i32 to index
    %c0_14 = arith.constant 0 : index
    %c0_15 = arith.constant 0 : index
    %43 = vector.load %arg2[%42, %c0_14, %c0_15] : memref<8x16x512xbf16, #tpu.memory_space<vmem>>, vector<1x16x512xbf16>
    %44 = vector.shape_cast %43 : vector<1x16x512xbf16> to vector<16x512xbf16>
    %45 = arith.extf %44 : vector<16x512xbf16> to vector<16x512xf32>
    %cst_16 = arith.constant dense<0.000000e+00> : vector<16x512xf32>
    %46 = tpu.matmul %37, %3, %cst_16 {dimension_numbers = #tpu.dot_dimension_numbers<[1], [0], [0], [1], [0, 0, 1, 1], [], []>} : vector<16x128xbf16>, vector<128x512xbf16>, vector<16x512xf32> -> vector<16x512xf32>
    %47 = arith.addf %45, %46 : vector<16x512xf32>
    %48 = vector.extract_strided_slice %47 {offsets = [0, 0], sizes = [16, 128], strides = [1, 1]} : vector<16x512xf32> to vector<16x128xf32>
    %49 = arith.negf %48 : vector<16x128xf32>
    %50 = math.exp %49 : vector<16x128xf32>
    %cst_17 = arith.constant 1.000000e+00 : f32
    %51 = vector.broadcast %cst_17 : f32 to vector<16x128xf32>
    %52 = arith.addf %51, %50 : vector<16x128xf32>
    %53 = arith.divf %51, %52 : vector<16x128xf32>
    %54 = vector.extract_strided_slice %47 {offsets = [0, 128], sizes = [16, 128], strides = [1, 1]} : vector<16x512xf32> to vector<16x128xf32>
    %55 = arith.negf %54 : vector<16x128xf32>
    %56 = math.exp %55 : vector<16x128xf32>
    %cst_18 = arith.constant 1.000000e+00 : f32
    %57 = vector.broadcast %cst_18 : f32 to vector<16x128xf32>
    %58 = arith.addf %57, %56 : vector<16x128xf32>
    %59 = arith.divf %57, %58 : vector<16x128xf32>
    %60 = vector.extract_strided_slice %47 {offsets = [0, 256], sizes = [16, 128], strides = [1, 1]} : vector<16x512xf32> to vector<16x128xf32>
    %61 = math.tanh %60 : vector<16x128xf32>
    %62 = vector.extract_strided_slice %47 {offsets = [0, 384], sizes = [16, 128], strides = [1, 1]} : vector<16x512xf32> to vector<16x128xf32>
    %63 = arith.negf %62 : vector<16x128xf32>
    %64 = math.exp %63 : vector<16x128xf32>
    %cst_19 = arith.constant 1.000000e+00 : f32
    %65 = vector.broadcast %cst_19 : f32 to vector<16x128xf32>
    %66 = arith.addf %65, %64 : vector<16x128xf32>
    %67 = arith.divf %65, %66 : vector<16x128xf32>
    %68 = arith.mulf %59, %34 : vector<16x128xf32>
    %69 = arith.mulf %53, %61 : vector<16x128xf32>
    %70 = arith.addf %68, %69 : vector<16x128xf32>
    %71 = math.tanh %70 : vector<16x128xf32>
    %72 = arith.mulf %67, %71 : vector<16x128xf32>
    %73 = arith.truncf %72 : vector<16x128xf32> to vector<16x128xbf16>
    %74 = arith.index_cast %c1_i32 : i32 to index
    %c0_20 = arith.constant 0 : index
    %c0_21 = arith.constant 0 : index
    %75 = vector.load %arg4[%74, %c0_20, %c0_21] : memref<8x16x128xbf16, #tpu.memory_space<vmem>>, vector<1x16x128xbf16>
    %76 = vector.shape_cast %75 : vector<1x16x128xbf16> to vector<16x128xbf16>
    %77 = vector.shape_cast %73 : vector<16x128xbf16> to vector<1x16x128xbf16>
    tpu.vector_store %arg4[%74, %c0_20, %c0_21], %77 {strides = array<i32>} : memref<8x16x128xbf16, #tpu.memory_space<vmem>>, vector<1x16x128xbf16>,
    %c2_i32 = arith.constant 2 : i32
    %78 = arith.index_cast %c2_i32 : i32 to index
    %c0_22 = arith.constant 0 : index
    %c0_23 = arith.constant 0 : index
    %79 = vector.load %arg2[%78, %c0_22, %c0_23] : memref<8x16x512xbf16, #tpu.memory_space<vmem>>, vector<1x16x512xbf16>
    %80 = vector.shape_cast %79 : vector<1x16x512xbf16> to vector<16x512xbf16>
    %81 = arith.extf %80 : vector<16x512xbf16> to vector<16x512xf32>
    %cst_24 = arith.constant dense<0.000000e+00> : vector<16x512xf32>
    %82 = tpu.matmul %73, %3, %cst_24 {dimension_numbers = #tpu.dot_dimension_numbers<[1], [0], [0], [1], [0, 0, 1, 1], [], []>} : vector<16x128xbf16>, vector<128x512xbf16>, vector<16x512xf32> -> vector<16x512xf32>
    %83 = arith.addf %81, %82 : vector<16x512xf32>
    %84 = vector.extract_strided_slice %83 {offsets = [0, 0], sizes = [16, 128], strides = [1, 1]} : vector<16x512xf32> to vector<16x128xf32>
    %85 = arith.negf %84 : vector<16x128xf32>
    %86 = math.exp %85 : vector<16x128xf32>
    %cst_25 = arith.constant 1.000000e+00 : f32
    %87 = vector.broadcast %cst_25 : f32 to vector<16x128xf32>
    %88 = arith.addf %87, %86 : vector<16x128xf32>
    %89 = arith.divf %87, %88 : vector<16x128xf32>
    %90 = vector.extract_strided_slice %83 {offsets = [0, 128], sizes = [16, 128], strides = [1, 1]} : vector<16x512xf32> to vector<16x128xf32>
    %91 = arith.negf %90 : vector<16x128xf32>
    %92 = math.exp %91 : vector<16x128xf32>
    %cst_26 = arith.constant 1.000000e+00 : f32
    %93 = vector.broadcast %cst_26 : f32 to vector<16x128xf32>
    %94 = arith.addf %93, %92 : vector<16x128xf32>
    %95 = arith.divf %93, %94 : vector<16x128xf32>
    %96 = vector.extract_strided_slice %83 {offsets = [0, 256], sizes = [16, 128], strides = [1, 1]} : vector<16x512xf32> to vector<16x128xf32>
    %97 = math.tanh %96 : vector<16x128xf32>
    %98 = vector.extract_strided_slice %83 {offsets = [0, 384], sizes = [16, 128], strides = [1, 1]} : vector<16x512xf32> to vector<16x128xf32>
    %99 = arith.negf %98 : vector<16x128xf32>
    %100 = math.exp %99 : vector<16x128xf32>
    %cst_27 = arith.constant 1.000000e+00 : f32
    %101 = vector.broadcast %cst_27 : f32 to vector<16x128xf32>
    %102 = arith.addf %101, %100 : vector<16x128xf32>
    %103 = arith.divf %101, %102 : vector<16x128xf32>
    %104 = arith.mulf %95, %70 : vector<16x128xf32>
    %105 = arith.mulf %89, %97 : vector<16x128xf32>
    %106 = arith.addf %104, %105 : vector<16x128xf32>
    %107 = math.tanh %106 : vector<16x128xf32>
    %108 = arith.mulf %103, %107 : vector<16x128xf32>
    %109 = arith.truncf %108 : vector<16x128xf32> to vector<16x128xbf16>
    %110 = arith.index_cast %c2_i32 : i32 to index
    %c0_28 = arith.constant 0 : index
    %c0_29 = arith.constant 0 : index
    %111 = vector.load %arg4[%110, %c0_28, %c0_29] : memref<8x16x128xbf16, #tpu.memory_space<vmem>>, vector<1x16x128xbf16>
    %112 = vector.shape_cast %111 : vector<1x16x128xbf16> to vector<16x128xbf16>
    %113 = vector.shape_cast %109 : vector<16x128xbf16> to vector<1x16x128xbf16>
    tpu.vector_store %arg4[%110, %c0_28, %c0_29], %113 {strides = array<i32>} : memref<8x16x128xbf16, #tpu.memory_space<vmem>>, vector<1x16x128xbf16>,
    %c3_i32 = arith.constant 3 : i32
    %114 = arith.index_cast %c3_i32 : i32 to index
    %c0_30 = arith.constant 0 : index
    %c0_31 = arith.constant 0 : index
    %115 = vector.load %arg2[%114, %c0_30, %c0_31] : memref<8x16x512xbf16, #tpu.memory_space<vmem>>, vector<1x16x512xbf16>
    %116 = vector.shape_cast %115 : vector<1x16x512xbf16> to vector<16x512xbf16>
    %117 = arith.extf %116 : vector<16x512xbf16> to vector<16x512xf32>
    %cst_32 = arith.constant dense<0.000000e+00> : vector<16x512xf32>
    %118 = tpu.matmul %109, %3, %cst_32 {dimension_numbers = #tpu.dot_dimension_numbers<[1], [0], [0], [1], [0, 0, 1, 1], [], []>} : vector<16x128xbf16>, vector<128x512xbf16>, vector<16x512xf32> -> vector<16x512xf32>
    %119 = arith.addf %117, %118 : vector<16x512xf32>
    %120 = vector.extract_strided_slice %119 {offsets = [0, 0], sizes = [16, 128], strides = [1, 1]} : vector<16x512xf32> to vector<16x128xf32>
    %121 = arith.negf %120 : vector<16x128xf32>
    %122 = math.exp %121 : vector<16x128xf32>
    %cst_33 = arith.constant 1.000000e+00 : f32
    %123 = vector.broadcast %cst_33 : f32 to vector<16x128xf32>
    %124 = arith.addf %123, %122 : vector<16x128xf32>
    %125 = arith.divf %123, %124 : vector<16x128xf32>
    %126 = vector.extract_strided_slice %119 {offsets = [0, 128], sizes = [16, 128], strides = [1, 1]} : vector<16x512xf32> to vector<16x128xf32>
    %127 = arith.negf %126 : vector<16x128xf32>
    %128 = math.exp %127 : vector<16x128xf32>
    %cst_34 = arith.constant 1.000000e+00 : f32
    %129 = vector.broadcast %cst_34 : f32 to vector<16x128xf32>
    %130 = arith.addf %129, %128 : vector<16x128xf32>
    %131 = arith.divf %129, %130 : vector<16x128xf32>
    %132 = vector.extract_strided_slice %119 {offsets = [0, 256], sizes = [16, 128], strides = [1, 1]} : vector<16x512xf32> to vector<16x128xf32>
    %133 = math.tanh %132 : vector<16x128xf32>
    %134 = vector.extract_strided_slice %119 {offsets = [0, 384], sizes = [16, 128], strides = [1, 1]} : vector<16x512xf32> to vector<16x128xf32>
    %135 = arith.negf %134 : vector<16x128xf32>
    %136 = math.exp %135 : vector<16x128xf32>
    %cst_35 = arith.constant 1.000000e+00 : f32
    %137 = vector.broadcast %cst_35 : f32 to vector<16x128xf32>
    %138 = arith.addf %137, %136 : vector<16x128xf32>
    %139 = arith.divf %137, %138 : vector<16x128xf32>
    %140 = arith.mulf %131, %106 : vector<16x128xf32>
    %141 = arith.mulf %125, %133 : vector<16x128xf32>
    %142 = arith.addf %140, %141 : vector<16x128xf32>
    %143 = math.tanh %142 : vector<16x128xf32>
    %144 = arith.mulf %139, %143 : vector<16x128xf32>
    %145 = arith.truncf %144 : vector<16x128xf32> to vector<16x128xbf16>
    %146 = arith.index_cast %c3_i32 : i32 to index
    %c0_36 = arith.constant 0 : index
    %c0_37 = arith.constant 0 : index
    %147 = vector.load %arg4[%146, %c0_36, %c0_37] : memref<8x16x128xbf16, #tpu.memory_space<vmem>>, vector<1x16x128xbf16>
    %148 = vector.shape_cast %147 : vector<1x16x128xbf16> to vector<16x128xbf16>
    %149 = vector.shape_cast %145 : vector<16x128xbf16> to vector<1x16x128xbf16>
    tpu.vector_store %arg4[%146, %c0_36, %c0_37], %149 {strides = array<i32>} : memref<8x16x128xbf16, #tpu.memory_space<vmem>>, vector<1x16x128xbf16>,
    %c4_i32 = arith.constant 4 : i32
    %150 = arith.index_cast %c4_i32 : i32 to index
    %c0_38 = arith.constant 0 : index
    %c0_39 = arith.constant 0 : index
    %151 = vector.load %arg2[%150, %c0_38, %c0_39] : memref<8x16x512xbf16, #tpu.memory_space<vmem>>, vector<1x16x512xbf16>
    %152 = vector.shape_cast %151 : vector<1x16x512xbf16> to vector<16x512xbf16>
    %153 = arith.extf %152 : vector<16x512xbf16> to vector<16x512xf32>
    %cst_40 = arith.constant dense<0.000000e+00> : vector<16x512xf32>
    %154 = tpu.matmul %145, %3, %cst_40 {dimension_numbers = #tpu.dot_dimension_numbers<[1], [0], [0], [1], [0, 0, 1, 1], [], []>} : vector<16x128xbf16>, vector<128x512xbf16>, vector<16x512xf32> -> vector<16x512xf32>
    %155 = arith.addf %153, %154 : vector<16x512xf32>
    %156 = vector.extract_strided_slice %155 {offsets = [0, 0], sizes = [16, 128], strides = [1, 1]} : vector<16x512xf32> to vector<16x128xf32>
    %157 = arith.negf %156 : vector<16x128xf32>
    %158 = math.exp %157 : vector<16x128xf32>
    %cst_41 = arith.constant 1.000000e+00 : f32
    %159 = vector.broadcast %cst_41 : f32 to vector<16x128xf32>
    %160 = arith.addf %159, %158 : vector<16x128xf32>
    %161 = arith.divf %159, %160 : vector<16x128xf32>
    %162 = vector.extract_strided_slice %155 {offsets = [0, 128], sizes = [16, 128], strides = [1, 1]} : vector<16x512xf32> to vector<16x128xf32>
    %163 = arith.negf %162 : vector<16x128xf32>
    %164 = math.exp %163 : vector<16x128xf32>
    %cst_42 = arith.constant 1.000000e+00 : f32
    %165 = vector.broadcast %cst_42 : f32 to vector<16x128xf32>
    %166 = arith.addf %165, %164 : vector<16x128xf32>
    %167 = arith.divf %165, %166 : vector<16x128xf32>
    %168 = vector.extract_strided_slice %155 {offsets = [0, 256], sizes = [16, 128], strides = [1, 1]} : vector<16x512xf32> to vector<16x128xf32>
    %169 = math.tanh %168 : vector<16x128xf32>
    %170 = vector.extract_strided_slice %155 {offsets = [0, 384], sizes = [16, 128], strides = [1, 1]} : vector<16x512xf32> to vector<16x128xf32>
    %171 = arith.negf %170 : vector<16x128xf32>
    %172 = math.exp %171 : vector<16x128xf32>
    %cst_43 = arith.constant 1.000000e+00 : f32
    %173 = vector.broadcast %cst_43 : f32 to vector<16x128xf32>
    %174 = arith.addf %173, %172 : vector<16x128xf32>
    %175 = arith.divf %173, %174 : vector<16x128xf32>
    %176 = arith.mulf %167, %142 : vector<16x128xf32>
    %177 = arith.mulf %161, %169 : vector<16x128xf32>
    %178 = arith.addf %176, %177 : vector<16x128xf32>
    %179 = math.tanh %178 : vector<16x128xf32>
    %180 = arith.mulf %175, %179 : vector<16x128xf32>
    %181 = arith.truncf %180 : vector<16x128xf32> to vector<16x128xbf16>
    %182 = arith.index_cast %c4_i32 : i32 to index
    %c0_44 = arith.constant 0 : index
    %c0_45 = arith.constant 0 : index
    %183 = vector.load %arg4[%182, %c0_44, %c0_45] : memref<8x16x128xbf16, #tpu.memory_space<vmem>>, vector<1x16x128xbf16>
    %184 = vector.shape_cast %183 : vector<1x16x128xbf16> to vector<16x128xbf16>
    %185 = vector.shape_cast %181 : vector<16x128xbf16> to vector<1x16x128xbf16>
    tpu.vector_store %arg4[%182, %c0_44, %c0_45], %185 {strides = array<i32>} : memref<8x16x128xbf16, #tpu.memory_space<vmem>>, vector<1x16x128xbf16>,
    %c5_i32 = arith.constant 5 : i32
    %186 = arith.index_cast %c5_i32 : i32 to index
    %c0_46 = arith.constant 0 : index
    %c0_47 = arith.constant 0 : index
    %187 = vector.load %arg2[%186, %c0_46, %c0_47] : memref<8x16x512xbf16, #tpu.memory_space<vmem>>, vector<1x16x512xbf16>
    %188 = vector.shape_cast %187 : vector<1x16x512xbf16> to vector<16x512xbf16>
    %189 = arith.extf %188 : vector<16x512xbf16> to vector<16x512xf32>
    %cst_48 = arith.constant dense<0.000000e+00> : vector<16x512xf32>
    %190 = tpu.matmul %181, %3, %cst_48 {dimension_numbers = #tpu.dot_dimension_numbers<[1], [0], [0], [1], [0, 0, 1, 1], [], []>} : vector<16x128xbf16>, vector<128x512xbf16>, vector<16x512xf32> -> vector<16x512xf32>
    %191 = arith.addf %189, %190 : vector<16x512xf32>
    %192 = vector.extract_strided_slice %191 {offsets = [0, 0], sizes = [16, 128], strides = [1, 1]} : vector<16x512xf32> to vector<16x128xf32>
    %193 = arith.negf %192 : vector<16x128xf32>
    %194 = math.exp %193 : vector<16x128xf32>
    %cst_49 = arith.constant 1.000000e+00 : f32
    %195 = vector.broadcast %cst_49 : f32 to vector<16x128xf32>
    %196 = arith.addf %195, %194 : vector<16x128xf32>
    %197 = arith.divf %195, %196 : vector<16x128xf32>
    %198 = vector.extract_strided_slice %191 {offsets = [0, 128], sizes = [16, 128], strides = [1, 1]} : vector<16x512xf32> to vector<16x128xf32>
    %199 = arith.negf %198 : vector<16x128xf32>
    %200 = math.exp %199 : vector<16x128xf32>
    %cst_50 = arith.constant 1.000000e+00 : f32
    %201 = vector.broadcast %cst_50 : f32 to vector<16x128xf32>
    %202 = arith.addf %201, %200 : vector<16x128xf32>
    %203 = arith.divf %201, %202 : vector<16x128xf32>
    %204 = vector.extract_strided_slice %191 {offsets = [0, 256], sizes = [16, 128], strides = [1, 1]} : vector<16x512xf32> to vector<16x128xf32>
    %205 = math.tanh %204 : vector<16x128xf32>
    %206 = vector.extract_strided_slice %191 {offsets = [0, 384], sizes = [16, 128], strides = [1, 1]} : vector<16x512xf32> to vector<16x128xf32>
    %207 = arith.negf %206 : vector<16x128xf32>
    %208 = math.exp %207 : vector<16x128xf32>
    %cst_51 = arith.constant 1.000000e+00 : f32
    %209 = vector.broadcast %cst_51 : f32 to vector<16x128xf32>
    %210 = arith.addf %209, %208 : vector<16x128xf32>
    %211 = arith.divf %209, %210 : vector<16x128xf32>
    %212 = arith.mulf %203, %178 : vector<16x128xf32>
    %213 = arith.mulf %197, %205 : vector<16x128xf32>
    %214 = arith.addf %212, %213 : vector<16x128xf32>
    %215 = math.tanh %214 : vector<16x128xf32>
    %216 = arith.mulf %211, %215 : vector<16x128xf32>
    %217 = arith.truncf %216 : vector<16x128xf32> to vector<16x128xbf16>
    %218 = arith.index_cast %c5_i32 : i32 to index
    %c0_52 = arith.constant 0 : index
    %c0_53 = arith.constant 0 : index
    %219 = vector.load %arg4[%218, %c0_52, %c0_53] : memref<8x16x128xbf16, #tpu.memory_space<vmem>>, vector<1x16x128xbf16>
    %220 = vector.shape_cast %219 : vector<1x16x128xbf16> to vector<16x128xbf16>
    %221 = vector.shape_cast %217 : vector<16x128xbf16> to vector<1x16x128xbf16>
    tpu.vector_store %arg4[%218, %c0_52, %c0_53], %221 {strides = array<i32>} : memref<8x16x128xbf16, #tpu.memory_space<vmem>>, vector<1x16x128xbf16>,
    %c6_i32 = arith.constant 6 : i32
    %222 = arith.index_cast %c6_i32 : i32 to index
    %c0_54 = arith.constant 0 : index
    %c0_55 = arith.constant 0 : index
    %223 = vector.load %arg2[%222, %c0_54, %c0_55] : memref<8x16x512xbf16, #tpu.memory_space<vmem>>, vector<1x16x512xbf16>
    %224 = vector.shape_cast %223 : vector<1x16x512xbf16> to vector<16x512xbf16>
    %225 = arith.extf %224 : vector<16x512xbf16> to vector<16x512xf32>
    %cst_56 = arith.constant dense<0.000000e+00> : vector<16x512xf32>
    %226 = tpu.matmul %217, %3, %cst_56 {dimension_numbers = #tpu.dot_dimension_numbers<[1], [0], [0], [1], [0, 0, 1, 1], [], []>} : vector<16x128xbf16>, vector<128x512xbf16>, vector<16x512xf32> -> vector<16x512xf32>
    %227 = arith.addf %225, %226 : vector<16x512xf32>
    %228 = vector.extract_strided_slice %227 {offsets = [0, 0], sizes = [16, 128], strides = [1, 1]} : vector<16x512xf32> to vector<16x128xf32>
    %229 = arith.negf %228 : vector<16x128xf32>
    %230 = math.exp %229 : vector<16x128xf32>
    %cst_57 = arith.constant 1.000000e+00 : f32
    %231 = vector.broadcast %cst_57 : f32 to vector<16x128xf32>
    %232 = arith.addf %231, %230 : vector<16x128xf32>
    %233 = arith.divf %231, %232 : vector<16x128xf32>
    %234 = vector.extract_strided_slice %227 {offsets = [0, 128], sizes = [16, 128], strides = [1, 1]} : vector<16x512xf32> to vector<16x128xf32>
    %235 = arith.negf %234 : vector<16x128xf32>
    %236 = math.exp %235 : vector<16x128xf32>
    %cst_58 = arith.constant 1.000000e+00 : f32
    %237 = vector.broadcast %cst_58 : f32 to vector<16x128xf32>
    %238 = arith.addf %237, %236 : vector<16x128xf32>
    %239 = arith.divf %237, %238 : vector<16x128xf32>
    %240 = vector.extract_strided_slice %227 {offsets = [0, 256], sizes = [16, 128], strides = [1, 1]} : vector<16x512xf32> to vector<16x128xf32>
    %241 = math.tanh %240 : vector<16x128xf32>
    %242 = vector.extract_strided_slice %227 {offsets = [0, 384], sizes = [16, 128], strides = [1, 1]} : vector<16x512xf32> to vector<16x128xf32>
    %243 = arith.negf %242 : vector<16x128xf32>
    %244 = math.exp %243 : vector<16x128xf32>
    %cst_59 = arith.constant 1.000000e+00 : f32
    %245 = vector.broadcast %cst_59 : f32 to vector<16x128xf32>
    %246 = arith.addf %245, %244 : vector<16x128xf32>
    %247 = arith.divf %245, %246 : vector<16x128xf32>
    %248 = arith.mulf %239, %214 : vector<16x128xf32>
    %249 = arith.mulf %233, %241 : vector<16x128xf32>
    %250 = arith.addf %248, %249 : vector<16x128xf32>
    %251 = math.tanh %250 : vector<16x128xf32>
    %252 = arith.mulf %247, %251 : vector<16x128xf32>
    %253 = arith.truncf %252 : vector<16x128xf32> to vector<16x128xbf16>
    %254 = arith.index_cast %c6_i32 : i32 to index
    %c0_60 = arith.constant 0 : index
    %c0_61 = arith.constant 0 : index
    %255 = vector.load %arg4[%254, %c0_60, %c0_61] : memref<8x16x128xbf16, #tpu.memory_space<vmem>>, vector<1x16x128xbf16>
    %256 = vector.shape_cast %255 : vector<1x16x128xbf16> to vector<16x128xbf16>
    %257 = vector.shape_cast %253 : vector<16x128xbf16> to vector<1x16x128xbf16>
    tpu.vector_store %arg4[%254, %c0_60, %c0_61], %257 {strides = array<i32>} : memref<8x16x128xbf16, #tpu.memory_space<vmem>>, vector<1x16x128xbf16>,
    %c7_i32 = arith.constant 7 : i32
    %258 = arith.index_cast %c7_i32 : i32 to index
    %c0_62 = arith.constant 0 : index
    %c0_63 = arith.constant 0 : index
    %259 = vector.load %arg2[%258, %c0_62, %c0_63] : memref<8x16x512xbf16, #tpu.memory_space<vmem>>, vector<1x16x512xbf16>
    %260 = vector.shape_cast %259 : vector<1x16x512xbf16> to vector<16x512xbf16>
    %261 = arith.extf %260 : vector<16x512xbf16> to vector<16x512xf32>
    %cst_64 = arith.constant dense<0.000000e+00> : vector<16x512xf32>
    %262 = tpu.matmul %253, %3, %cst_64 {dimension_numbers = #tpu.dot_dimension_numbers<[1], [0], [0], [1], [0, 0, 1, 1], [], []>} : vector<16x128xbf16>, vector<128x512xbf16>, vector<16x512xf32> -> vector<16x512xf32>
    %263 = arith.addf %261, %262 : vector<16x512xf32>
    %264 = vector.extract_strided_slice %263 {offsets = [0, 0], sizes = [16, 128], strides = [1, 1]} : vector<16x512xf32> to vector<16x128xf32>
    %265 = arith.negf %264 : vector<16x128xf32>
    %266 = math.exp %265 : vector<16x128xf32>
    %cst_65 = arith.constant 1.000000e+00 : f32
    %267 = vector.broadcast %cst_65 : f32 to vector<16x128xf32>
    %268 = arith.addf %267, %266 : vector<16x128xf32>
    %269 = arith.divf %267, %268 : vector<16x128xf32>
    %270 = vector.extract_strided_slice %263 {offsets = [0, 128], sizes = [16, 128], strides = [1, 1]} : vector<16x512xf32> to vector<16x128xf32>
    %271 = arith.negf %270 : vector<16x128xf32>
    %272 = math.exp %271 : vector<16x128xf32>
    %cst_66 = arith.constant 1.000000e+00 : f32
    %273 = vector.broadcast %cst_66 : f32 to vector<16x128xf32>
    %274 = arith.addf %273, %272 : vector<16x128xf32>
    %275 = arith.divf %273, %274 : vector<16x128xf32>
    %276 = vector.extract_strided_slice %263 {offsets = [0, 256], sizes = [16, 128], strides = [1, 1]} : vector<16x512xf32> to vector<16x128xf32>
    %277 = math.tanh %276 : vector<16x128xf32>
    %278 = vector.extract_strided_slice %263 {offsets = [0, 384], sizes = [16, 128], strides = [1, 1]} : vector<16x512xf32> to vector<16x128xf32>
    %279 = arith.negf %278 : vector<16x128xf32>
    %280 = math.exp %279 : vector<16x128xf32>
    %cst_67 = arith.constant 1.000000e+00 : f32
    %281 = vector.broadcast %cst_67 : f32 to vector<16x128xf32>
    %282 = arith.addf %281, %280 : vector<16x128xf32>
    %283 = arith.divf %281, %282 : vector<16x128xf32>
    %284 = arith.mulf %275, %250 : vector<16x128xf32>
    %285 = arith.mulf %269, %277 : vector<16x128xf32>
    %286 = arith.addf %284, %285 : vector<16x128xf32>
    %287 = math.tanh %286 : vector<16x128xf32>
    %288 = arith.mulf %283, %287 : vector<16x128xf32>
    %289 = arith.truncf %288 : vector<16x128xf32> to vector<16x128xbf16>
    %290 = arith.index_cast %c7_i32 : i32 to index
    %c0_68 = arith.constant 0 : index
    %c0_69 = arith.constant 0 : index
    %291 = vector.load %arg4[%290, %c0_68, %c0_69] : memref<8x16x128xbf16, #tpu.memory_space<vmem>>, vector<1x16x128xbf16>
    %292 = vector.shape_cast %291 : vector<1x16x128xbf16> to vector<16x128xbf16>
    %293 = vector.shape_cast %289 : vector<16x128xbf16> to vector<1x16x128xbf16>
    tpu.vector_store %arg4[%290, %c0_68, %c0_69], %293 {strides = array<i32>} : memref<8x16x128xbf16, #tpu.memory_space<vmem>>, vector<1x16x128xbf16>,
    %c8_i32 = arith.constant 8 : i32
    %c0_70 = arith.constant 0 : index
    %c0_71 = arith.constant 0 : index
    %294 = vector.load %arg5[%c0_70, %c0_71] : memref<16x128xbf16, #tpu.memory_space<vmem>>, vector<16x128xbf16>
    tpu.vector_store %arg5[%c0_70, %c0_71], %289 {strides = array<i32>} : memref<16x128xbf16, #tpu.memory_space<vmem>>, vector<16x128xbf16>,
    %c0_72 = arith.constant 0 : index
    %c0_73 = arith.constant 0 : index
    %295 = vector.load %arg6[%c0_72, %c0_73] : memref<16x128xf32, #tpu.memory_space<vmem>>, vector<16x128xf32>
    tpu.vector_store %arg6[%c0_72, %c0_73], %286 {strides = array<i32>} : memref<16x128xf32, #tpu.memory_space<vmem>>, vector<16x128xf32>,
    return
  }
  func.func @transform_0(%arg0: i32, %arg1: i32) -> (i32, i32, i32) {
    %c0_i32 = arith.constant 0 : i32
    %c0_i32_0 = arith.constant 0 : i32
    return %arg1, %arg0, %c0_i32 : i32, i32, i32
  }
  func.func @transform_1(%arg0: i32, %arg1: i32) -> (i32, i32) {
    %c0_i32 = arith.constant 0 : i32
    %c0_i32_0 = arith.constant 0 : i32
    %c0_i32_1 = arith.constant 0 : i32
    return %c0_i32, %c0_i32_0 : i32, i32
  }
  func.func @transform_2(%arg0: i32, %arg1: i32) -> (i32, i32, i32) {
    %c0_i32 = arith.constant 0 : i32
    %c0_i32_0 = arith.constant 0 : i32
    return %arg1, %arg0, %c0_i32 : i32, i32, i32
  }
}

module attributes {stable_mosaic.version = 11 : i64} {
  func.func @_matmul_bias_kernel(%arg0: i32, %arg1: i32, %arg2: memref<256x32xbf16, #tpu.memory_space<vmem>>, %arg3: memref<32x512xbf16, #tpu.memory_space<vmem>>, %arg4: memref<1x512xf32, #tpu.memory_space<vmem>>, %arg5: memref<256x512xbf16, #tpu.memory_space<vmem>>) attributes {dimension_semantics = [#tpu.dimension_semantics<parallel>, #tpu.dimension_semantics<parallel>], iteration_bounds = array<i64: 1, 1>, scalar_prefetch = 0 : i64, scratch_operands = 0 : i64, tpu.core_type = #tpu.core_type<tc>, window_params = [{transform_indices = @transform_0, window_bounds = array<i64: 256, 32>}, {transform_indices = @transform_1, window_bounds = array<i64: 32, 512>}, {transform_indices = @transform_2, window_bounds = array<i64: 1, 512>}, {transform_indices = @transform_3, window_bounds = array<i64: 256, 512>}]} {
    %c0 = arith.constant 0 : index
    %c0_0 = arith.constant 0 : index
    %0 = vector.load %arg2[%c0, %c0_0] : memref<256x32xbf16, #tpu.memory_space<vmem>>, vector<256x32xbf16>
    %c0_1 = arith.constant 0 : index
    %c0_2 = arith.constant 0 : index
    %1 = vector.load %arg3[%c0_1, %c0_2] : memref<32x512xbf16, #tpu.memory_space<vmem>>, vector<32x512xbf16>
    %cst = arith.constant dense<0.000000e+00> : vector<256x512xf32>
    %2 = tpu.matmul %0, %1, %cst {dimension_numbers = #tpu.dot_dimension_numbers<[1], [0], [0], [1], [0, 0, 1, 1], [], []>} : vector<256x32xbf16>, vector<32x512xbf16>, vector<256x512xf32> -> vector<256x512xf32>
    %c0_3 = arith.constant 0 : index
    %c0_4 = arith.constant 0 : index
    %3 = vector.load %arg4[%c0_3, %c0_4] : memref<1x512xf32, #tpu.memory_space<vmem>>, vector<1x512xf32>
    %4 = vector.broadcast %3 : vector<1x512xf32> to vector<256x512xf32>
    %5 = arith.addf %2, %4 : vector<256x512xf32>
    %6 = arith.truncf %5 : vector<256x512xf32> to vector<256x512xbf16>
    %c0_5 = arith.constant 0 : index
    %c0_6 = arith.constant 0 : index
    %7 = vector.load %arg5[%c0_5, %c0_6] : memref<256x512xbf16, #tpu.memory_space<vmem>>, vector<256x512xbf16>
    tpu.vector_store %arg5[%c0_5, %c0_6], %6 {strides = array<i32>} : memref<256x512xbf16, #tpu.memory_space<vmem>>, vector<256x512xbf16>,
    return
  }
  func.func @transform_0(%arg0: i32, %arg1: i32) -> (i32, i32) {
    %c0_i32 = arith.constant 0 : i32
    %c0_i32_0 = arith.constant 0 : i32
    return %arg0, %c0_i32 : i32, i32
  }
  func.func @transform_1(%arg0: i32, %arg1: i32) -> (i32, i32) {
    %c0_i32 = arith.constant 0 : i32
    %c0_i32_0 = arith.constant 0 : i32
    return %c0_i32, %arg1 : i32, i32
  }
  func.func @transform_2(%arg0: i32, %arg1: i32) -> (i32, i32) {
    %c0_i32 = arith.constant 0 : i32
    %c0_i32_0 = arith.constant 0 : i32
    return %c0_i32, %arg1 : i32, i32
  }
  func.func @transform_3(%arg0: i32, %arg1: i32) -> (i32, i32) {
    %c0_i32 = arith.constant 0 : i32
    return %arg0, %arg1 : i32, i32
  }
}

module attributes {stable_mosaic.version = 11 : i64} {
  func.func @_matmul_bias_kernel(%arg0: i32, %arg1: i32, %arg2: memref<144x128xbf16, #tpu.memory_space<vmem>>, %arg3: memref<128x1024xbf16, #tpu.memory_space<vmem>>, %arg4: memref<1x1024xf32, #tpu.memory_space<vmem>>, %arg5: memref<144x1024xf32, #tpu.memory_space<vmem>>) attributes {dimension_semantics = [#tpu.dimension_semantics<parallel>, #tpu.dimension_semantics<parallel>], iteration_bounds = array<i64: 1, 1>, scalar_prefetch = 0 : i64, scratch_operands = 0 : i64, tpu.core_type = #tpu.core_type<tc>, window_params = [{transform_indices = @transform_0, window_bounds = array<i64: 144, 128>}, {transform_indices = @transform_1, window_bounds = array<i64: 128, 1024>}, {transform_indices = @transform_2, window_bounds = array<i64: 1, 1024>}, {transform_indices = @transform_3, window_bounds = array<i64: 144, 1024>}]} {
    %c0 = arith.constant 0 : index
    %c0_0 = arith.constant 0 : index
    %0 = vector.load %arg2[%c0, %c0_0] : memref<144x128xbf16, #tpu.memory_space<vmem>>, vector<144x128xbf16>
    %c0_1 = arith.constant 0 : index
    %c0_2 = arith.constant 0 : index
    %1 = vector.load %arg3[%c0_1, %c0_2] : memref<128x1024xbf16, #tpu.memory_space<vmem>>, vector<128x1024xbf16>
    %cst = arith.constant dense<0.000000e+00> : vector<144x1024xf32>
    %2 = tpu.matmul %0, %1, %cst {dimension_numbers = #tpu.dot_dimension_numbers<[1], [0], [0], [1], [0, 0, 1, 1], [], []>} : vector<144x128xbf16>, vector<128x1024xbf16>, vector<144x1024xf32> -> vector<144x1024xf32>
    %c0_3 = arith.constant 0 : index
    %c0_4 = arith.constant 0 : index
    %3 = vector.load %arg4[%c0_3, %c0_4] : memref<1x1024xf32, #tpu.memory_space<vmem>>, vector<1x1024xf32>
    %4 = vector.broadcast %3 : vector<1x1024xf32> to vector<144x1024xf32>
    %5 = arith.addf %2, %4 : vector<144x1024xf32>
    %c0_5 = arith.constant 0 : index
    %c0_6 = arith.constant 0 : index
    %6 = vector.load %arg5[%c0_5, %c0_6] : memref<144x1024xf32, #tpu.memory_space<vmem>>, vector<144x1024xf32>
    tpu.vector_store %arg5[%c0_5, %c0_6], %5 {strides = array<i32>} : memref<144x1024xf32, #tpu.memory_space<vmem>>, vector<144x1024xf32>,
    return
  }
  func.func @transform_0(%arg0: i32, %arg1: i32) -> (i32, i32) {
    %c0_i32 = arith.constant 0 : i32
    %c0_i32_0 = arith.constant 0 : i32
    return %arg0, %c0_i32 : i32, i32
  }
  func.func @transform_1(%arg0: i32, %arg1: i32) -> (i32, i32) {
    %c0_i32 = arith.constant 0 : i32
    %c0_i32_0 = arith.constant 0 : i32
    return %c0_i32, %arg1 : i32, i32
  }
  func.func @transform_2(%arg0: i32, %arg1: i32) -> (i32, i32) {
    %c0_i32 = arith.constant 0 : i32
    %c0_i32_0 = arith.constant 0 : i32
    return %c0_i32, %arg1 : i32, i32
  }
  func.func @transform_3(%arg0: i32, %arg1: i32) -> (i32, i32) {
    %c0_i32 = arith.constant 0 : i32
    return %arg0, %arg1 : i32, i32
  }
}

</mosaic_0001>

<llo_original>
// kernel: image_captioning_forward.3
$region0: #{image_captioning_forward.3}
  #allocation0 [shape = 'u32[]', space=smem, size = 0x4, offset = 0x4, fixed_abs, tag = 'smem constant byte address 0x4 - core index']
  #allocation1 [shape = 'u32[144,128]{1,0:T(1,128)}', space=vmem, size = 0x12000, scoped, tag = 'internal scratch']
  %s0 = inlined_call_operand.vmem [shape: bf16[256,32], index: 0, kind: input, shape index: {}]
  %s1 = inlined_call_operand.vmem [shape: bf16[32,512], index: 1, kind: input, shape index: {}]
  %s2 = inlined_call_operand.vmem [shape: f32[1,512], index: 2, kind: input, shape index: {}]
  %s3 = inlined_call_operand.vmem [shape: bf16[256,512], index: 3, kind: output, shape index: {}]
  %s4 = sld [smem:[#allocation0]]
  $region22: #{image_captioning_forward.3} parent=0
    _
  %s6 = ssub.s32 1, %s4
  %s7 = scalar_select 0, %s6, %s4
  // Predicated region
  $region2: #{image_captioning_forward.3} parent=0 // pred_check
    _
  $region3: #{image_captioning_forward.3} parent=0 // pred_check_branch
    %9 = sbr.rel (0) target = $region5
  $region4: #{image_captioning_forward.3} parent=0 // pred_region
    _
  $region5: #{image_captioning_forward.3} parent=0 // pred_fallthru
    _
  // Predicated region
  $region6: #{image_captioning_forward.3} parent=0 // pred_check
    _
  $region7: #{image_captioning_forward.3} parent=0 // pred_check_branch
    %11 = sbr.rel (0) target = $region9
  $region8: #{image_captioning_forward.3} parent=0 // pred_region
    _
  $region9: #{image_captioning_forward.3} parent=0 // pred_fallthru
    _
  // Predicated region
  $region10: #{image_captioning_forward.3} parent=0 // pred_check
    _
  $region11: #{image_captioning_forward.3} parent=0 // pred_check_branch
    %13 = sbr.rel (0) target = $region13
  $region12: #{image_captioning_forward.3} parent=0 // pred_region
    _
  $region13: #{image_captioning_forward.3} parent=0 // pred_fallthru
    _
  %v15 = vld [vmem:[%s0] sm:$0xf]
  %v16 = vld [vmem:[%s0 + $0x4] sm:$0xf]
  %v17 = vld [vmem:[%s0 + $0x8] sm:$0xf]
  %v18 = vld [vmem:[%s0 + $0xc] sm:$0xf]
  %v19 = vld [vmem:[%s0 + $0x10] sm:$0xf]
  %v20 = vld [vmem:[%s0 + $0x14] sm:$0xf]
  %v21 = vld [vmem:[%s0 + $0x18] sm:$0xf]
  %v22 = vld [vmem:[%s0 + $0x1c] sm:$0xf]
  %v23 = vld [vmem:[%s0 + $0x20] sm:$0xf]
  %v24 = vld [vmem:[%s0 + $0x24] sm:$0xf]
  %v25 = vld [vmem:[%s0 + $0x28] sm:$0xf]
  %v26 = vld [vmem:[%s0 + $0x2c] sm:$0xf]
  %v27 = vld [vmem:[%s0 + $0x30] sm:$0xf]
  %v28 = vld [vmem:[%s0 + $0x34] sm:$0xf]
  %v29 = vld [vmem:[%s0 + $0x38] sm:$0xf]
  %v30 = vld [vmem:[%s0 + $0x3c] sm:$0xf]
  %v31 = vld [vmem:[%s0 + $0x40] sm:$0xf]
  %v32 = vld [vmem:[%s0 + $0x44] sm:$0xf]
  %v33 = vld [vmem:[%s0 + $0x48] sm:$0xf]
  %v34 = vld [vmem:[%s0 + $0x4c] sm:$0xf]
  %v35 = vld [vmem:[%s0 + $0x50] sm:$0xf]
  %v36 = vld [vmem:[%s0 + $0x54] sm:$0xf]
  %v37 = vld [vmem:[%s0 + $0x58] sm:$0xf]
  %v38 = vld [vmem:[%s0 + $0x5c] sm:$0xf]
  %v39 = vld [vmem:[%s0 + $0x60] sm:$0xf]
  %v40 = vld [vmem:[%s0 + $0x64] sm:$0xf]
  %v41 = vld [vmem:[%s0 + $0x68] sm:$0xf]
  %v42 = vld [vmem:[%s0 + $0x6c] sm:$0xf]
  %v43 = vld [vmem:[%s0 + $0x70] sm:$0xf]
  %v44 = vld [vmem:[%s0 + $0x74] sm:$0xf]
  %v45 = vld [vmem:[%s0 + $0x78] sm:$0xf]
  %v46 = vld [vmem:[%s0 + $0x7c] sm:$0xf]
  %v47 = vld [vmem:[%s1] sm:$0xff]
  %v48 = vld [vmem:[%s1 + $0x8] sm:$0xff]
  %v49 = vld [vmem:[%s1 + $0x10] sm:$0xff]
  %v50 = vld [vmem:[%s1 + $0x18] sm:$0xff]
  %v51 = vld [vmem:[%s1 + $0x20] sm:$0xff]
  %v52 = vld [vmem:[%s1 + $0x28] sm:$0xff]
  %v53 = vld [vmem:[%s1 + $0x30] sm:$0xff]
  %v54 = vld [vmem:[%s1 + $0x38] sm:$0xff]
  %v55 = vld [vmem:[%s2] sm:$0xf]
  %v57 = vlaneseq
  %v58 = vshrl.u32 %v57, 7
  %v59 = vsub.s32 0, %v58
  %v60 = vrot.slane %v55, %v59
  %v61 = vlaneseq
  %v62 = vshrl.u32 %v61, 7
  %v63 = vsub.s32 1, %v62
  %v64 = vrot.slane %v55, %v63
  %v65 = vlaneseq
  %v66 = vshrl.u32 %v65, 7
  %v67 = vsub.s32 2, %v66
  %v68 = vrot.slane %v55, %v67
  %v69 = vlaneseq
  %v70 = vshrl.u32 %v69, 7
  %v71 = vsub.s32 3, %v70
  %v72 = vrot.slane %v55, %v71
  %v109 = vunpack.c.l.b16 %v15
  %v110 = vunpack.c.l.b16 %v16
  %v111 = vunpack.c.l.b16 %v17
  %v112 = vunpack.c.l.b16 %v18
  %v113 = vunpack.c.l.b16 %v19
  %v114 = vunpack.c.l.b16 %v20
  %v115 = vunpack.c.l.b16 %v21
  %v116 = vunpack.c.l.b16 %v22
  %v117 = vunpack.c.l.b16 %v23
  %v118 = vunpack.c.l.b16 %v24
  %v119 = vunpack.c.l.b16 %v25
  %v120 = vunpack.c.l.b16 %v26
  %v121 = vunpack.c.l.b16 %v27
  %v122 = vunpack.c.l.b16 %v28
  %v123 = vunpack.c.l.b16 %v29
  %v124 = vunpack.c.l.b16 %v30
  %v125 = vunpack.c.l.b16 %v31
  %v126 = vunpack.c.l.b16 %v32
  %v127 = vunpack.c.l.b16 %v33
  %v128 = vunpack.c.l.b16 %v34
  %v129 = vunpack.c.l.b16 %v35
  %v130 = vunpack.c.l.b16 %v36
  %v131 = vunpack.c.l.b16 %v37
  %v132 = vunpack.c.l.b16 %v38
  %v133 = vunpack.c.l.b16 %v39
  %v134 = vunpack.c.l.b16 %v40
  %v135 = vunpack.c.l.b16 %v41
  %v136 = vunpack.c.l.b16 %v42
  %v137 = vunpack.c.l.b16 %v43
  %v138 = vunpack.c.l.b16 %v44
  %v139 = vunpack.c.l.b16 %v45
  %v140 = vunpack.c.l.b16 %v46
  %v141 = vpack.c.b16 %v110, %v109
  %v142 = vpack.c.b16 %v112, %v111
  %v143 = vpack.c.b16 %v114, %v113
  %v144 = vpack.c.b16 %v116, %v115
  %v145 = vpack.c.b16 %v118, %v117
  %v146 = vpack.c.b16 %v120, %v119
  %v147 = vpack.c.b16 %v122, %v121
  %v148 = vpack.c.b16 %v124, %v123
  %v149 = vpack.c.b16 %v126, %v125
  %v150 = vpack.c.b16 %v128, %v127
  %v151 = vpack.c.b16 %v130, %v129
  %v152 = vpack.c.b16 %v132, %v131
  %v153 = vpack.c.b16 %v134, %v133
  %v154 = vpack.c.b16 %v136, %v135
  %v155 = vpack.c.b16 %v138, %v137
  %v156 = vpack.c.b16 %v140, %v139
  %v165 = vunpack.c.l.b16 %v47
  %v166 = vunpack.c.h.b16 %v47
  %v167 = vunpack.c.l.b16 %v48
  %v168 = vunpack.c.h.b16 %v48
  %v169 = vunpack.c.l.b16 %v49
  %v170 = vunpack.c.h.b16 %v49
  %v171 = vunpack.c.l.b16 %v50
  %v172 = vunpack.c.h.b16 %v50
  %v173 = vunpack.c.l.b16 %v51
  %v174 = vunpack.c.h.b16 %v51
  %v175 = vunpack.c.l.b16 %v52
  %v176 = vunpack.c.h.b16 %v52
  %v177 = vunpack.c.l.b16 %v53
  %v178 = vunpack.c.h.b16 %v53
  %v179 = vunpack.c.l.b16 %v54
  %v180 = vunpack.c.h.b16 %v54
  %v181 = vpack.c.b16 %v169, %v165
  %v182 = vpack.c.b16 %v170, %v166
  %v183 = vpack.c.b16 %v171, %v167
  %v184 = vpack.c.b16 %v172, %v168
  %v185 = vpack.c.b16 %v177, %v173
  %v186 = vpack.c.b16 %v178, %v174
  %v187 = vpack.c.b16 %v179, %v175
  %v188 = vpack.c.b16 %v180, %v176
  %vm197 = vcmask 261120
  %v199 = vsel %vm197, %v141, 0
  %v202 = vsel %vm197, %v142, 0
  %v205 = vsel %vm197, %v143, 0
  %v208 = vsel %vm197, %v144, 0
  %v211 = vsel %vm197, %v145, 0
  %v214 = vsel %vm197, %v146, 0
  %v217 = vsel %vm197, %v147, 0
  %v220 = vsel %vm197, %v148, 0
  %v223 = vsel %vm197, %v149, 0
  %v226 = vsel %vm197, %v150, 0
  %v229 = vsel %vm197, %v151, 0
  %v232 = vsel %vm197, %v152, 0
  %v235 = vsel %vm197, %v153, 0
  %v238 = vsel %vm197, %v154, 0
  %v241 = vsel %vm197, %v155, 0
  %v244 = vsel %vm197, %v156, 0
  %246 = vmatprep.subr.bf16.mxu0 0
  %247 = vmatpush1.bf16.msra.mxu0 0
  %248 = vmatprep.subr.bf16.mxu0 0
  %249 = vmatpush1.bf16.msra.mxu0 0
  %250 = vmatprep.subr.bf16.mxu0 0
  %251 = vmatpush1.bf16.msra.mxu0 0
  %252 = vmatprep.subr.bf16.mxu0 0
  %253 = vmatpush1.bf16.msra.mxu0 0
  %254 = vmatprep.subr.bf16.mxu0 0
  %255 = vmatpush1.bf16.msra.mxu0 0
  %256 = vmatprep.subr.bf16.mxu0 0
  %257 = vmatpush1.bf16.msra.mxu0 0
  %258 = vmatprep.subr.bf16.mxu0 %v186
  %259 = vmatpush1.bf16.msra.mxu0 %v185
  %260 = vmatprep.subr.bf16.mxu0 %v182
  %261 = vmatpush1.bf16.msra.mxu0 %v181
  %262 = vmatprep.subr.bf16.mxu0 0
  %263 = vmatpush2.bf16.msra.mxu0 0
  %264 = vmatprep.subr.bf16.mxu0 0
  %265 = vmatpush2.bf16.msra.mxu0 0
  %266 = vmatprep.subr.bf16.mxu0 0
  %267 = vmatpush2.bf16.msra.mxu0 0
  %268 = vmatprep.subr.bf16.mxu0 0
  %269 = vmatpush2.bf16.msra.mxu0 0
  %270 = vmatprep.subr.bf16.mxu0 0
  %271 = vmatpush2.bf16.msra.mxu0 0
  %272 = vmatprep.subr.bf16.mxu0 0
  %273 = vmatpush2.bf16.msra.mxu0 0
  %274 = vmatprep.subr.bf16.mxu0 0
  %275 = vmatpush2.bf16.msra.mxu0 0
  %276 = vmatprep.subr.bf16.mxu0 0
  %277 = vmatpush2.bf16.msra.mxu0 0
  %278 = vmatprep.mubr.bf16.mxu0 0
  %279 = vmatmul.mubr.bf16.gmra.mxu0 %v199
  %v280 = vpop.f32.mrf.mxu0
  %v281 = vadd.f32 %v60, %v280
  %v282 = vpop.f32.mrf.mxu0
  %v283 = vadd.f32 %v64, %v282
  %v284 = vpop.f32.mrf.mxu0
  %v285 = vadd.f32 %v60, %v284
  %v286 = vpop.f32.mrf.mxu0
  %v287 = vadd.f32 %v64, %v286
  %288 = vmatprep.mubr.bf16.mxu0 0
  %289 = vmatmul.mubr.bf16.gmra.mxu0 %v202
  %v290 = vpop.f32.mrf.mxu0
  %v291 = vadd.f32 %v60, %v290
  %v292 = vpop.f32.mrf.mxu0
  %v293 = vadd.f32 %v64, %v292
  %v294 = vpop.f32.mrf.mxu0
  %v295 = vadd.f32 %v60, %v294
  %v296 = vpop.f32.mrf.mxu0
  %v297 = vadd.f32 %v64, %v296
  %298 = vmatprep.mubr.bf16.mxu0 0
  %299 = vmatmul.mubr.bf16.gmra.mxu0 %v205
  %v300 = vpop.f32.mrf.mxu0
  %v301 = vadd.f32 %v60, %v300
  %v302 = vpop.f32.mrf.mxu0
  %v303 = vadd.f32 %v64, %v302
  %v304 = vpop.f32.mrf.mxu0
  %v305 = vadd.f32 %v60, %v304
  %v306 = vpop.f32.mrf.mxu0
  %v307 = vadd.f32 %v64, %v306
  %308 = vmatprep.mubr.bf16.mxu0 0
  %309 = vmatmul.mubr.bf16.gmra.mxu0 %v208
  %v310 = vpop.f32.mrf.mxu0
  %v311 = vadd.f32 %v60, %v310
  %v312 = vpop.f32.mrf.mxu0
  %v313 = vadd.f32 %v64, %v312
  %v314 = vpop.f32.mrf.mxu0
  %v315 = vadd.f32 %v60, %v314
  %v316 = vpop.f32.mrf.mxu0
  %v317 = vadd.f32 %v64, %v316
  %318 = vmatprep.mubr.bf16.mxu0 0
  %319 = vmatmul.mubr.bf16.gmra.mxu0 %v211
  %v320 = vpop.f32.mrf.mxu0
  %v321 = vadd.f32 %v60, %v320
  %v322 = vpop.f32.mrf.mxu0
  %v323 = vadd.f32 %v64, %v322
  %v324 = vpop.f32.mrf.mxu0
  %v325 = vadd.f32 %v60, %v324
  %v326 = vpop.f32.mrf.mxu0
  %v327 = vadd.f32 %v64, %v326
  %328 = vmatprep.mubr.bf16.mxu0 0
  %329 = vmatmul.mubr.bf16.gmra.mxu0 %v214
  %v330 = vpop.f32.mrf.mxu0
  %v331 = vadd.f32 %v60, %v330
  %v332 = vpop.f32.mrf.mxu0
  %v333 = vadd.f32 %v64, %v332
  %v334 = vpop.f32.mrf.mxu0
  %v335 = vadd.f32 %v60, %v334
  %v336 = vpop.f32.mrf.mxu0
  %v337 = vadd.f32 %v64, %v336
  %338 = vmatprep.mubr.bf16.mxu0 0
  %339 = vmatmul.mubr.bf16.gmra.mxu0 %v217
  %v340 = vpop.f32.mrf.mxu0
  %v341 = vadd.f32 %v60, %v340
  %v342 = vpop.f32.mrf.mxu0
  %v343 = vadd.f32 %v64, %v342
  %v344 = vpop.f32.mrf.mxu0
  %v345 = vadd.f32 %v60, %v344
  %v346 = vpop.f32.mrf.mxu0
  %v347 = vadd.f32 %v64, %v346
  %348 = vmatprep.mubr.bf16.mxu0 0
  %349 = vmatmul.mubr.bf16.gmra.mxu0 %v220
  %v350 = vpop.f32.mrf.mxu0
  %v351 = vadd.f32 %v60, %v350
  %v352 = vpop.f32.mrf.mxu0
  %v353 = vadd.f32 %v64, %v352
  %v354 = vpop.f32.mrf.mxu0
  %v355 = vadd.f32 %v60, %v354
  %v356 = vpop.f32.mrf.mxu0
  %v357 = vadd.f32 %v64, %v356
  %358 = vmatprep.mubr.bf16.mxu0 0
  %359 = vmatmul.mubr.bf16.gmra.mxu0 %v223
  %v360 = vpop.f32.mrf.mxu0
  %v361 = vadd.f32 %v60, %v360
  %v362 = vpop.f32.mrf.mxu0
  %v363 = vadd.f32 %v64, %v362
  %v364 = vpop.f32.mrf.mxu0
  %v365 = vadd.f32 %v60, %v364
  %v366 = vpop.f32.mrf.mxu0
  %v367 = vadd.f32 %v64, %v366
  %368 = vmatprep.mubr.bf16.mxu0 0
  %369 = vmatmul.mubr.bf16.gmra.mxu0 %v226
  %v370 = vpop.f32.mrf.mxu0
  %v371 = vadd.f32 %v60, %v370
  %v372 = vpop.f32.mrf.mxu0
  %v373 = vadd.f32 %v64, %v372
  %v374 = vpop.f32.mrf.mxu0
  %v375 = vadd.f32 %v60, %v374
  %v376 = vpop.f32.mrf.mxu0
  %v377 = vadd.f32 %v64, %v376
  %378 = vmatprep.mubr.bf16.mxu0 0
  %379 = vmatmul.mubr.bf16.gmra.mxu0 %v229
  %v380 = vpop.f32.mrf.mxu0
  %v381 = vadd.f32 %v60, %v380
  %v382 = vpop.f32.mrf.mxu0
  %v383 = vadd.f32 %v64, %v382
  %v384 = vpop.f32.mrf.mxu0
  %v385 = vadd.f32 %v60, %v384
  %v386 = vpop.f32.mrf.mxu0
  %v387 = vadd.f32 %v64, %v386
  %388 = vmatprep.mubr.bf16.mxu0 0
  %389 = vmatmul.mubr.bf16.gmra.mxu0 %v232
  %v390 = vpop.f32.mrf.mxu0
  %v391 = vadd.f32 %v60, %v390
  %v392 = vpop.f32.mrf.mxu0
  %v393 = vadd.f32 %v64, %v392
  %v394 = vpop.f32.mrf.mxu0
  %v395 = vadd.f32 %v60, %v394
  %v396 = vpop.f32.mrf.mxu0
  %v397 = vadd.f32 %v64, %v396
  %398 = vmatprep.mubr.bf16.mxu0 0
  %399 = vmatmul.mubr.bf16.gmra.mxu0 %v235
  %v400 = vpop.f32.mrf.mxu0
  %v401 = vadd.f32 %v60, %v400
  %v402 = vpop.f32.mrf.mxu0
  %v403 = vadd.f32 %v64, %v402
  %v404 = vpop.f32.mrf.mxu0
  %v405 = vadd.f32 %v60, %v404
  %v406 = vpop.f32.mrf.mxu0
  %v407 = vadd.f32 %v64, %v406
  %408 = vmatprep.mubr.bf16.mxu0 0
  %409 = vmatmul.mubr.bf16.gmra.mxu0 %v238
  %v410 = vpop.f32.mrf.mxu0
  %v411 = vadd.f32 %v60, %v410
  %v412 = vpop.f32.mrf.mxu0
  %v413 = vadd.f32 %v64, %v412
  %v414 = vpop.f32.mrf.mxu0
  %v415 = vadd.f32 %v60, %v414
  %v416 = vpop.f32.mrf.mxu0
  %v417 = vadd.f32 %v64, %v416
  %418 = vmatprep.mubr.bf16.mxu0 0
  %419 = vmatmul.mubr.bf16.gmra.mxu0 %v241
  %v420 = vpop.f32.mrf.mxu0
  %v421 = vadd.f32 %v60, %v420
  %v422 = vpop.f32.mrf.mxu0
  %v423 = vadd.f32 %v64, %v422
  %v424 = vpop.f32.mrf.mxu0
  %v425 = vadd.f32 %v60, %v424
  %v426 = vpop.f32.mrf.mxu0
  %v427 = vadd.f32 %v64, %v426
  %428 = vmatprep.mubr.bf16.mxu0 0
  %429 = vmatmul.mubr.bf16.gmra.mxu0 %v244
  %v430 = vpop.f32.mrf.mxu0
  %v431 = vadd.f32 %v60, %v430
  %v432 = vpop.f32.mrf.mxu0
  %v433 = vadd.f32 %v64, %v432
  %v434 = vpop.f32.mrf.mxu0
  %v435 = vadd.f32 %v60, %v434
  %v436 = vpop.f32.mrf.mxu0
  %v437 = vadd.f32 %v64, %v436
  %438 = vdwg.mxu0
  %439 = vmatprep.subr.bf16.mxu0 0
  %440 = vmatpush1.bf16.msra.mxu0 0
  %441 = vmatprep.subr.bf16.mxu0 0
  %442 = vmatpush1.bf16.msra.mxu0 0
  %443 = vmatprep.subr.bf16.mxu0 0
  %444 = vmatpush1.bf16.msra.mxu0 0
  %445 = vmatprep.subr.bf16.mxu0 0
  %446 = vmatpush1.bf16.msra.mxu0 0
  %447 = vmatprep.subr.bf16.mxu0 0
  %448 = vmatpush1.bf16.msra.mxu0 0
  %449 = vmatprep.subr.bf16.mxu0 0
  %450 = vmatpush1.bf16.msra.mxu0 0
  %451 = vmatprep.subr.bf16.mxu0 %v188
  %452 = vmatpush1.bf16.msra.mxu0 %v187
  %453 = vmatprep.subr.bf16.mxu0 %v184
  %454 = vmatpush1.bf16.msra.mxu0 %v183
  %455 = vmatprep.subr.bf16.mxu0 0
  %456 = vmatpush2.bf16.msra.mxu0 0
  %457 = vmatprep.subr.bf16.mxu0 0
  %458 = vmatpush2.bf16.msra.mxu0 0
  %459 = vmatprep.subr.bf16.mxu0 0
  %460 = vmatpush2.bf16.msra.mxu0 0
  %461 = vmatprep.subr.bf16.mxu0 0
  %462 = vmatpush2.bf16.msra.mxu0 0
  %463 = vmatprep.subr.bf16.mxu0 0
  %464 = vmatpush2.bf16.msra.mxu0 0
  %465 = vmatprep.subr.bf16.mxu0 0
  %466 = vmatpush2.bf16.msra.mxu0 0
  %467 = vmatprep.subr.bf16.mxu0 0
  %468 = vmatpush2.bf16.msra.mxu0 0
  %469 = vmatprep.subr.bf16.mxu0 0
  %470 = vmatpush2.bf16.msra.mxu0 0
  %471 = vmatprep.mubr.bf16.mxu0 0
  %472 = vmatmul.mubr.bf16.gmra.mxu0 %v199
  %v473 = vpop.f32.mrf.mxu0
  %v474 = vadd.f32 %v68, %v473
  %v475 = vpop.f32.mrf.mxu0
  %v476 = vadd.f32 %v72, %v475
  %v477 = vpop.f32.mrf.mxu0
  %v478 = vadd.f32 %v68, %v477
  %v479 = vpop.f32.mrf.mxu0
  %v480 = vadd.f32 %v72, %v479
  %481 = vmatprep.mubr.bf16.mxu0 0
  %482 = vmatmul.mubr.bf16.gmra.mxu0 %v202
  %v483 = vpop.f32.mrf.mxu0
  %v484 = vadd.f32 %v68, %v483
  %v485 = vpop.f32.mrf.mxu0
  %v486 = vadd.f32 %v72, %v485
  %v487 = vpop.f32.mrf.mxu0
  %v488 = vadd.f32 %v68, %v487
  %v489 = vpop.f32.mrf.mxu0
  %v490 = vadd.f32 %v72, %v489
  %491 = vmatprep.mubr.bf16.mxu0 0
  %492 = vmatmul.mubr.bf16.gmra.mxu0 %v205
  %v493 = vpop.f32.mrf.mxu0
  %v494 = vadd.f32 %v68, %v493
  %v495 = vpop.f32.mrf.mxu0
  %v496 = vadd.f32 %v72, %v495
  %v497 = vpop.f32.mrf.mxu0
  %v498 = vadd.f32 %v68, %v497
  %v499 = vpop.f32.mrf.mxu0
  %v500 = vadd.f32 %v72, %v499
  %501 = vmatprep.mubr.bf16.mxu0 0
  %502 = vmatmul.mubr.bf16.gmra.mxu0 %v208
  %v503 = vpop.f32.mrf.mxu0
  %v504 = vadd.f32 %v68, %v503
  %v505 = vpop.f32.mrf.mxu0
  %v506 = vadd.f32 %v72, %v505
  %v507 = vpop.f32.mrf.mxu0
  %v508 = vadd.f32 %v68, %v507
  %v509 = vpop.f32.mrf.mxu0
  %v510 = vadd.f32 %v72, %v509
  %511 = vmatprep.mubr.bf16.mxu0 0
  %512 = vmatmul.mubr.bf16.gmra.mxu0 %v211
  %v513 = vpop.f32.mrf.mxu0
  %v514 = vadd.f32 %v68, %v513
  %v515 = vpop.f32.mrf.mxu0
  %v516 = vadd.f32 %v72, %v515
  %v517 = vpop.f32.mrf.mxu0
  %v518 = vadd.f32 %v68, %v517
  %v519 = vpop.f32.mrf.mxu0
  %v520 = vadd.f32 %v72, %v519
  %521 = vmatprep.mubr.bf16.mxu0 0
  %522 = vmatmul.mubr.bf16.gmra.mxu0 %v214
  %v523 = vpop.f32.mrf.mxu0
  %v524 = vadd.f32 %v68, %v523
  %v525 = vpop.f32.mrf.mxu0
  %v526 = vadd.f32 %v72, %v525
  %v527 = vpop.f32.mrf.mxu0
  %v528 = vadd.f32 %v68, %v527
  %v529 = vpop.f32.mrf.mxu0
  %v530 = vadd.f32 %v72, %v529
  %531 = vmatprep.mubr.bf16.mxu0 0
  %532 = vmatmul.mubr.bf16.gmra.mxu0 %v217
  %v533 = vpop.f32.mrf.mxu0
  %v534 = vadd.f32 %v68, %v533
  %v535 = vpop.f32.mrf.mxu0
  %v536 = vadd.f32 %v72, %v535
  %v537 = vpop.f32.mrf.mxu0
  %v538 = vadd.f32 %v68, %v537
  %v539 = vpop.f32.mrf.mxu0
  %v540 = vadd.f32 %v72, %v539
  %541 = vmatprep.mubr.bf16.mxu0 0
  %542 = vmatmul.mubr.bf16.gmra.mxu0 %v220
  %v543 = vpop.f32.mrf.mxu0
  %v544 = vadd.f32 %v68, %v543
  %v545 = vpop.f32.mrf.mxu0
  %v546 = vadd.f32 %v72, %v545
  %v547 = vpop.f32.mrf.mxu0
  %v548 = vadd.f32 %v68, %v547
  %v549 = vpop.f32.mrf.mxu0
  %v550 = vadd.f32 %v72, %v549
  %551 = vmatprep.mubr.bf16.mxu0 0
  %552 = vmatmul.mubr.bf16.gmra.mxu0 %v223
  %v553 = vpop.f32.mrf.mxu0
  %v554 = vadd.f32 %v68, %v553
  %v555 = vpop.f32.mrf.mxu0
  %v556 = vadd.f32 %v72, %v555
  %v557 = vpop.f32.mrf.mxu0
  %v558 = vadd.f32 %v68, %v557
  %v559 = vpop.f32.mrf.mxu0
  %v560 = vadd.f32 %v72, %v559
  %561 = vmatprep.mubr.bf16.mxu0 0
  %562 = vmatmul.mubr.bf16.gmra.mxu0 %v226
  %v563 = vpop.f32.mrf.mxu0
  %v564 = vadd.f32 %v68, %v563
  %v565 = vpop.f32.mrf.mxu0
  %v566 = vadd.f32 %v72, %v565
  %v567 = vpop.f32.mrf.mxu0
  %v568 = vadd.f32 %v68, %v567
  %v569 = vpop.f32.mrf.mxu0
  %v570 = vadd.f32 %v72, %v569
  %571 = vmatprep.mubr.bf16.mxu0 0
  %572 = vmatmul.mubr.bf16.gmra.mxu0 %v229
  %v573 = vpop.f32.mrf.mxu0
  %v574 = vadd.f32 %v68, %v573
  %v575 = vpop.f32.mrf.mxu0
  %v576 = vadd.f32 %v72, %v575
  %v577 = vpop.f32.mrf.mxu0
  %v578 = vadd.f32 %v68, %v577
  %v579 = vpop.f32.mrf.mxu0
  %v580 = vadd.f32 %v72, %v579
  %581 = vmatprep.mubr.bf16.mxu0 0
  %582 = vmatmul.mubr.bf16.gmra.mxu0 %v232
  %v583 = vpop.f32.mrf.mxu0
  %v584 = vadd.f32 %v68, %v583
  %v585 = vpop.f32.mrf.mxu0
  %v586 = vadd.f32 %v72, %v585
  %v587 = vpop.f32.mrf.mxu0
  %v588 = vadd.f32 %v68, %v587
  %v589 = vpop.f32.mrf.mxu0
  %v590 = vadd.f32 %v72, %v589
  %591 = vmatprep.mubr.bf16.mxu0 0
  %592 = vmatmul.mubr.bf16.gmra.mxu0 %v235
  %v593 = vpop.f32.mrf.mxu0
  %v594 = vadd.f32 %v68, %v593
  %v595 = vpop.f32.mrf.mxu0
  %v596 = vadd.f32 %v72, %v595
  %v597 = vpop.f32.mrf.mxu0
  %v598 = vadd.f32 %v68, %v597
  %v599 = vpop.f32.mrf.mxu0
  %v600 = vadd.f32 %v72, %v599
  %601 = vmatprep.mubr.bf16.mxu0 0
  %602 = vmatmul.mubr.bf16.gmra.mxu0 %v238
  %v603 = vpop.f32.mrf.mxu0
  %v604 = vadd.f32 %v68, %v603
  %v605 = vpop.f32.mrf.mxu0
  %v606 = vadd.f32 %v72, %v605
  %v607 = vpop.f32.mrf.mxu0
  %v608 = vadd.f32 %v68, %v607
  %v609 = vpop.f32.mrf.mxu0
  %v610 = vadd.f32 %v72, %v609
  %611 = vmatprep.mubr.bf16.mxu0 0
  %612 = vmatmul.mubr.bf16.gmra.mxu0 %v241
  %v613 = vpop.f32.mrf.mxu0
  %v614 = vadd.f32 %v68, %v613
  %v615 = vpop.f32.mrf.mxu0
  %v616 = vadd.f32 %v72, %v615
  %v617 = vpop.f32.mrf.mxu0
  %v618 = vadd.f32 %v68, %v617
  %v619 = vpop.f32.mrf.mxu0
  %v620 = vadd.f32 %v72, %v619
  %621 = vmatprep.mubr.bf16.mxu0 0
  %622 = vmatmul.mubr.bf16.gmra.mxu0 %v244
  %v623 = vpop.f32.mrf.mxu0
  %v624 = vadd.f32 %v68, %v623
  %v625 = vpop.f32.mrf.mxu0
  %v626 = vadd.f32 %v72, %v625
  %v627 = vpop.f32.mrf.mxu0
  %v628 = vadd.f32 %v68, %v627
  %v629 = vpop.f32.mrf.mxu0
  %v630 = vadd.f32 %v72, %v629
  %631 = vdwg.mxu0
  %v632 = vpack.c.bf16 %v285, %v281
  %v633 = vpack.c.bf16 %v287, %v283
  %v634 = vpack.c.bf16 %v478, %v474
  %v635 = vpack.c.bf16 %v480, %v476
  %v636 = vpack.c.bf16 %v295, %v291
  %v637 = vpack.c.bf16 %v297, %v293
  %v638 = vpack.c.bf16 %v488, %v484
  %v639 = vpack.c.bf16 %v490, %v486
  %v640 = vpack.c.bf16 %v305, %v301
  %v641 = vpack.c.bf16 %v307, %v303
  %v642 = vpack.c.bf16 %v498, %v494
  %v643 = vpack.c.bf16 %v500, %v496
  %v644 = vpack.c.bf16 %v315, %v311
  %v645 = vpack.c.bf16 %v317, %v313
  %v646 = vpack.c.bf16 %v508, %v504
  %v647 = vpack.c.bf16 %v510, %v506
  %v648 = vpack.c.bf16 %v325, %v321
  %v649 = vpack.c.bf16 %v327, %v323
  %v650 = vpack.c.bf16 %v518, %v514
  %v651 = vpack.c.bf16 %v520, %v516
  %v652 = vpack.c.bf16 %v335, %v331
  %v653 = vpack.c.bf16 %v337, %v333
  %v654 = vpack.c.bf16 %v528, %v524
  %v655 = vpack.c.bf16 %v530, %v526
  %v656 = vpack.c.bf16 %v345, %v341
  %v657 = vpack.c.bf16 %v347, %v343
  %v658 = vpack.c.bf16 %v538, %v534
  %v659 = vpack.c.bf16 %v540, %v536
  %v660 = vpack.c.bf16 %v355, %v351
  %v661 = vpack.c.bf16 %v357, %v353
  %v662 = vpack.c.bf16 %v548, %v544
  %v663 = vpack.c.bf16 %v550, %v546
  %v664 = vpack.c.bf16 %v365, %v361
  %v665 = vpack.c.bf16 %v367, %v363
  %v666 = vpack.c.bf16 %v558, %v554
  %v667 = vpack.c.bf16 %v560, %v556
  %v668 = vpack.c.bf16 %v375, %v371
  %v669 = vpack.c.bf16 %v377, %v373
  %v670 = vpack.c.bf16 %v568, %v564
  %v671 = vpack.c.bf16 %v570, %v566
  %v672 = vpack.c.bf16 %v385, %v381
  %v673 = vpack.c.bf16 %v387, %v383
  %v674 = vpack.c.bf16 %v578, %v574
  %v675 = vpack.c.bf16 %v580, %v576
  %v676 = vpack.c.bf16 %v395, %v391
  %v677 = vpack.c.bf16 %v397, %v393
  %v678 = vpack.c.bf16 %v588, %v584
  %v679 = vpack.c.bf16 %v590, %v586
  %v680 = vpack.c.bf16 %v405, %v401
  %v681 = vpack.c.bf16 %v407, %v403
  %v682 = vpack.c.bf16 %v598, %v594
  %v683 = vpack.c.bf16 %v600, %v596
  %v684 = vpack.c.bf16 %v415, %v411
  %v685 = vpack.c.bf16 %v417, %v413
  %v686 = vpack.c.bf16 %v608, %v604
  %v687 = vpack.c.bf16 %v610, %v606
  %v688 = vpack.c.bf16 %v425, %v421
  %v689 = vpack.c.bf16 %v427, %v423
  %v690 = vpack.c.bf16 %v618, %v614
  %v691 = vpack.c.bf16 %v620, %v616
  %v692 = vpack.c.bf16 %v435, %v431
  %v693 = vpack.c.bf16 %v437, %v433
  %v694 = vpack.c.bf16 %v628, %v624
  %v695 = vpack.c.bf16 %v630, %v626
  %v760 = vunpack.c.l.b16 %v632
  %v761 = vunpack.c.l.b16 %v633
  %v762 = vunpack.c.l.b16 %v634
  %v763 = vunpack.c.l.b16 %v635
  %v764 = vunpack.c.h.b16 %v632
  %v765 = vunpack.c.h.b16 %v633
  %v766 = vunpack.c.h.b16 %v634
  %v767 = vunpack.c.h.b16 %v635
  %v768 = vunpack.c.l.b16 %v636
  %v769 = vunpack.c.l.b16 %v637
  %v770 = vunpack.c.l.b16 %v638
  %v771 = vunpack.c.l.b16 %v639
  %v772 = vunpack.c.h.b16 %v636
  %v773 = vunpack.c.h.b16 %v637
  %v774 = vunpack.c.h.b16 %v638
  %v775 = vunpack.c.h.b16 %v639
  %v776 = vunpack.c.l.b16 %v640
  %v777 = vunpack.c.l.b16 %v641
  %v778 = vunpack.c.l.b16 %v642
  %v779 = vunpack.c.l.b16 %v643
  %v780 = vunpack.c.h.b16 %v640
  %v781 = vunpack.c.h.b16 %v641
  %v782 = vunpack.c.h.b16 %v642
  %v783 = vunpack.c.h.b16 %v643
  %v784 = vunpack.c.l.b16 %v644
  %v785 = vunpack.c.l.b16 %v645
  %v786 = vunpack.c.l.b16 %v646
  %v787 = vunpack.c.l.b16 %v647
  %v788 = vunpack.c.h.b16 %v644
  %v789 = vunpack.c.h.b16 %v645
  %v790 = vunpack.c.h.b16 %v646
  %v791 = vunpack.c.h.b16 %v647
  %v792 = vunpack.c.l.b16 %v648
  %v793 = vunpack.c.l.b16 %v649
  %v794 = vunpack.c.l.b16 %v650
  %v795 = vunpack.c.l.b16 %v651
  %v796 = vunpack.c.h.b16 %v648
  %v797 = vunpack.c.h.b16 %v649
  %v798 = vunpack.c.h.b16 %v650
  %v799 = vunpack.c.h.b16 %v651
  %v800 = vunpack.c.l.b16 %v652
  %v801 = vunpack.c.l.b16 %v653
  %v802 = vunpack.c.l.b16 %v654
  %v803 = vunpack.c.l.b16 %v655
  %v804 = vunpack.c.h.b16 %v652
  %v805 = vunpack.c.h.b16 %v653
  %v806 = vunpack.c.h.b16 %v654
  %v807 = vunpack.c.h.b16 %v655
  %v808 = vunpack.c.l.b16 %v656
  %v809 = vunpack.c.l.b16 %v657
  %v810 = vunpack.c.l.b16 %v658
  %v811 = vunpack.c.l.b16 %v659
  %v812 = vunpack.c.h.b16 %v656
  %v813 = vunpack.c.h.b16 %v657
  %v814 = vunpack.c.h.b16 %v658
  %v815 = vunpack.c.h.b16 %v659
  %v816 = vunpack.c.l.b16 %v660
  %v817 = vunpack.c.l.b16 %v661
  %v818 = vunpack.c.l.b16 %v662
  %v819 = vunpack.c.l.b16 %v663
  %v820 = vunpack.c.h.b16 %v660
  %v821 = vunpack.c.h.b16 %v661
  %v822 = vunpack.c.h.b16 %v662
  %v823 = vunpack.c.h.b16 %v663
  %v824 = vunpack.c.l.b16 %v664
  %v825 = vunpack.c.l.b16 %v665
  %v826 = vunpack.c.l.b16 %v666
  %v827 = vunpack.c.l.b16 %v667
  %v828 = vunpack.c.h.b16 %v664
  %v829 = vunpack.c.h.b16 %v665
  %v830 = vunpack.c.h.b16 %v666
  %v831 = vunpack.c.h.b16 %v667
  %v832 = vunpack.c.l.b16 %v668
  %v833 = vunpack.c.l.b16 %v669
  %v834 = vunpack.c.l.b16 %v670
  %v835 = vunpack.c.l.b16 %v671
  %v836 = vunpack.c.h.b16 %v668
  %v837 = vunpack.c.h.b16 %v669
  %v838 = vunpack.c.h.b16 %v670
  %v839 = vunpack.c.h.b16 %v671
  %v840 = vunpack.c.l.b16 %v672
  %v841 = vunpack.c.l.b16 %v673
  %v842 = vunpack.c.l.b16 %v674
  %v843 = vunpack.c.l.b16 %v675
  %v844 = vunpack.c.h.b16 %v672
  %v845 = vunpack.c.h.b16 %v673
  %v846 = vunpack.c.h.b16 %v674
  %v847 = vunpack.c.h.b16 %v675
  %v848 = vunpack.c.l.b16 %v676
  %v849 = vunpack.c.l.b16 %v677
  %v850 = vunpack.c.l.b16 %v678
  %v851 = vunpack.c.l.b16 %v679
  %v852 = vunpack.c.h.b16 %v676
  %v853 = vunpack.c.h.b16 %v677
  %v854 = vunpack.c.h.b16 %v678
  %v855 = vunpack.c.h.b16 %v679
  %v856 = vunpack.c.l.b16 %v680
  %v857 = vunpack.c.l.b16 %v681
  %v858 = vunpack.c.l.b16 %v682
  %v859 = vunpack.c.l.b16 %v683
  %v860 = vunpack.c.h.b16 %v680
  %v861 = vunpack.c.h.b16 %v681
  %v862 = vunpack.c.h.b16 %v682
  %v863 = vunpack.c.h.b16 %v683
  %v864 = vunpack.c.l.b16 %v684
  %v865 = vunpack.c.l.b16 %v685
  %v866 = vunpack.c.l.b16 %v686
  %v867 = vunpack.c.l.b16 %v687
  %v868 = vunpack.c.h.b16 %v684
  %v869 = vunpack.c.h.b16 %v685
  %v870 = vunpack.c.h.b16 %v686
  %v871 = vunpack.c.h.b16 %v687
  %v872 = vunpack.c.l.b16 %v688
  %v873 = vunpack.c.l.b16 %v689
  %v874 = vunpack.c.l.b16 %v690
  %v875 = vunpack.c.l.b16 %v691
  %v876 = vunpack.c.h.b16 %v688
  %v877 = vunpack.c.h.b16 %v689
  %v878 = vunpack.c.h.b16 %v690
  %v879 = vunpack.c.h.b16 %v691
  %v880 = vunpack.c.l.b16 %v692
  %v881 = vunpack.c.l.b16 %v693
  %v882 = vunpack.c.l.b16 %v694
  %v883 = vunpack.c.l.b16 %v695
  %v884 = vunpack.c.h.b16 %v692
  %v885 = vunpack.c.h.b16 %v693
  %v886 = vunpack.c.h.b16 %v694
  %v887 = vunpack.c.h.b16 %v695
  %v888 = vpack.c.b16 %v761, %v760
  %v889 = vpack.c.b16 %v763, %v762
  %v890 = vpack.c.b16 %v765, %v764
  %v891 = vpack.c.b16 %v767, %v766
  %v892 = vpack.c.b16 %v769, %v768
  %v893 = vpack.c.b16 %v771, %v770
  %v894 = vpack.c.b16 %v773, %v772
  %v895 = vpack.c.b16 %v775, %v774
  %v896 = vpack.c.b16 %v777, %v776
  %v897 = vpack.c.b16 %v779, %v778
  %v898 = vpack.c.b16 %v781, %v780
  %v899 = vpack.c.b16 %v783, %v782
  %v900 = vpack.c.b16 %v785, %v784
  %v901 = vpack.c.b16 %v787, %v786
  %v902 = vpack.c.b16 %v789, %v788
  %v903 = vpack.c.b16 %v791, %v790
  %v904 = vpack.c.b16 %v793, %v792
  %v905 = vpack.c.b16 %v795, %v794
  %v906 = vpack.c.b16 %v797, %v796
  %v907 = vpack.c.b16 %v799, %v798
  %v908 = vpack.c.b16 %v801, %v800
  %v909 = vpack.c.b16 %v803, %v802
  %v910 = vpack.c.b16 %v805, %v804
  %v911 = vpack.c.b16 %v807, %v806
  %v912 = vpack.c.b16 %v809, %v808
  %v913 = vpack.c.b16 %v811, %v810
  %v914 = vpack.c.b16 %v813, %v812
  %v915 = vpack.c.b16 %v815, %v814
  %v916 = vpack.c.b16 %v817, %v816
  %v917 = vpack.c.b16 %v819, %v818
  %v918 = vpack.c.b16 %v821, %v820
  %v919 = vpack.c.b16 %v823, %v822
  %v920 = vpack.c.b16 %v825, %v824
  %v921 = vpack.c.b16 %v827, %v826
  %v922 = vpack.c.b16 %v829, %v828
  %v923 = vpack.c.b16 %v831, %v830
  %v924 = vpack.c.b16 %v833, %v832
  %v925 = vpack.c.b16 %v835, %v834
  %v926 = vpack.c.b16 %v837, %v836
  %v927 = vpack.c.b16 %v839, %v838
  %v928 = vpack.c.b16 %v841, %v840
  %v929 = vpack.c.b16 %v843, %v842
  %v930 = vpack.c.b16 %v845, %v844
  %v931 = vpack.c.b16 %v847, %v846
  %v932 = vpack.c.b16 %v849, %v848
  %v933 = vpack.c.b16 %v851, %v850
  %v934 = vpack.c.b16 %v853, %v852
  %v935 = vpack.c.b16 %v855, %v854
  %v936 = vpack.c.b16 %v857, %v856
  %v937 = vpack.c.b16 %v859, %v858
  %v938 = vpack.c.b16 %v861, %v860
  %v939 = vpack.c.b16 %v863, %v862
  %v940 = vpack.c.b16 %v865, %v864
  %v941 = vpack.c.b16 %v867, %v866
  %v942 = vpack.c.b16 %v869, %v868
  %v943 = vpack.c.b16 %v871, %v870
  %v944 = vpack.c.b16 %v873, %v872
  %v945 = vpack.c.b16 %v875, %v874
  %v946 = vpack.c.b16 %v877, %v876
  %v947 = vpack.c.b16 %v879, %v878
  %v948 = vpack.c.b16 %v881, %v880
  %v949 = vpack.c.b16 %v883, %v882
  %v950 = vpack.c.b16 %v885, %v884
  %v951 = vpack.c.b16 %v887, %v886
  %1016 = vst [vmem:[%s3] sm:$0xff] %v888
  %1017 = vst [vmem:[%s3 + $0x8] sm:$0xff] %v889
  %1018 = vst [vmem:[%s3 + $0x10] sm:$0xff] %v890
  %1019 = vst [vmem:[%s3 + $0x18] sm:$0xff] %v891
  %1020 = vst [vmem:[%s3 + $0x20] sm:$0xff] %v892
  %1021 = vst [vmem:[%s3 + $0x28] sm:$0xff] %v893
  %1022 = vst [vmem:[%s3 + $0x30] sm:$0xff] %v894
  %1023 = vst [vmem:[%s3 + $0x38] sm:$0xff] %v895
  %1024 = vst [vmem:[%s3 + $0x40] sm:$0xff] %v896
  %1025 = vst [vmem:[%s3 + $0x48] sm:$0xff] %v897
  %1026 = vst [vmem:[%s3 + $0x50] sm:$0xff] %v898
  %1027 = vst [vmem:[%s3 + $0x58] sm:$0xff] %v899
  %1028 = vst [vmem:[%s3 + $0x60] sm:$0xff] %v900
  %1029 = vst [vmem:[%s3 + $0x68] sm:$0xff] %v901
  %1030 = vst [vmem:[%s3 + $0x70] sm:$0xff] %v902
  %1031 = vst [vmem:[%s3 + $0x78] sm:$0xff] %v903
  %1032 = vst [vmem:[%s3 + $0x80] sm:$0xff] %v904
  %1033 = vst [vmem:[%s3 + $0x88] sm:$0xff] %v905
  %1034 = vst [vmem:[%s3 + $0x90] sm:$0xff] %v906
  %1035 = vst [vmem:[%s3 + $0x98] sm:$0xff] %v907
  %1036 = vst [vmem:[%s3 + $0xa0] sm:$0xff] %v908
  %1037 = vst [vmem:[%s3 + $0xa8] sm:$0xff] %v909
  %1038 = vst [vmem:[%s3 + $0xb0] sm:$0xff] %v910
  %1039 = vst [vmem:[%s3 + $0xb8] sm:$0xff] %v911
  %1040 = vst [vmem:[%s3 + $0xc0] sm:$0xff] %v912
  %1041 = vst [vmem:[%s3 + $0xc8] sm:$0xff] %v913
  %1042 = vst [vmem:[%s3 + $0xd0] sm:$0xff] %v914
  %1043 = vst [vmem:[%s3 + $0xd8] sm:$0xff] %v915
  %1044 = vst [vmem:[%s3 + $0xe0] sm:$0xff] %v916
  %1045 = vst [vmem:[%s3 + $0xe8] sm:$0xff] %v917
  %1046 = vst [vmem:[%s3 + $0xf0] sm:$0xff] %v918
  %1047 = vst [vmem:[%s3 + $0xf8] sm:$0xff] %v919
  %1048 = vst [vmem:[%s3 + $0x100] sm:$0xff] %v920
  %1049 = vst [vmem:[%s3 + $0x108] sm:$0xff] %v921
  %1050 = vst [vmem:[%s3 + $0x110] sm:$0xff] %v922
  %1051 = vst [vmem:[%s3 + $0x118] sm:$0xff] %v923
  %1052 = vst [vmem:[%s3 + $0x120] sm:$0xff] %v924
  %1053 = vst [vmem:[%s3 + $0x128] sm:$0xff] %v925
  %1054 = vst [vmem:[%s3 + $0x130] sm:$0xff] %v926
  %1055 = vst [vmem:[%s3 + $0x138] sm:$0xff] %v927
  %1056 = vst [vmem:[%s3 + $0x140] sm:$0xff] %v928
  %1057 = vst [vmem:[%s3 + $0x148] sm:$0xff] %v929
  %1058 = vst [vmem:[%s3 + $0x150] sm:$0xff] %v930
  %1059 = vst [vmem:[%s3 + $0x158] sm:$0xff] %v931
  %1060 = vst [vmem:[%s3 + $0x160] sm:$0xff] %v932
  %1061 = vst [vmem:[%s3 + $0x168] sm:$0xff] %v933
  %1062 = vst [vmem:[%s3 + $0x170] sm:$0xff] %v934
  %1063 = vst [vmem:[%s3 + $0x178] sm:$0xff] %v935
  %1064 = vst [vmem:[%s3 + $0x180] sm:$0xff] %v936
  %1065 = vst [vmem:[%s3 + $0x188] sm:$0xff] %v937
  %1066 = vst [vmem:[%s3 + $0x190] sm:$0xff] %v938
  %1067 = vst [vmem:[%s3 + $0x198] sm:$0xff] %v939
  %1068 = vst [vmem:[%s3 + $0x1a0] sm:$0xff] %v940
  %1069 = vst [vmem:[%s3 + $0x1a8] sm:$0xff] %v941
  %1070 = vst [vmem:[%s3 + $0x1b0] sm:$0xff] %v942
  %1071 = vst [vmem:[%s3 + $0x1b8] sm:$0xff] %v943
  %1072 = vst [vmem:[%s3 + $0x1c0] sm:$0xff] %v944
  %1073 = vst [vmem:[%s3 + $0x1c8] sm:$0xff] %v945
  %1074 = vst [vmem:[%s3 + $0x1d0] sm:$0xff] %v946
  %1075 = vst [vmem:[%s3 + $0x1d8] sm:$0xff] %v947
  %1076 = vst [vmem:[%s3 + $0x1e0] sm:$0xff] %v948
  %1077 = vst [vmem:[%s3 + $0x1e8] sm:$0xff] %v949
  %1078 = vst [vmem:[%s3 + $0x1f0] sm:$0xff] %v950
  %1079 = vst [vmem:[%s3 + $0x1f8] sm:$0xff] %v951
  // Predicated region
  $region14: #{image_captioning_forward.3} parent=0 // pred_check
    _
  $region15: #{image_captioning_forward.3} parent=0 // pred_check_branch
    %1081 = sbr.rel (0) target = $region17
  $region16: #{image_captioning_forward.3} parent=0 // pred_region
    _
  $region17: #{image_captioning_forward.3} parent=0 // pred_fallthru
    _
  // Predicated region
  $region18: #{image_captioning_forward.3} parent=0 // pred_check
    _
  $region19: #{image_captioning_forward.3} parent=0 // pred_check_branch
    %1083 = sbr.rel (0) target = $region21
  $region20: #{image_captioning_forward.3} parent=0 // pred_region
    _
  $region21: #{image_captioning_forward.3} parent=0 // pred_fallthru
    _

// kernel: image_captioning_forward.4
$region0: #{image_captioning_forward.4}
  #allocation0 [shape = 'u32[]', space=smem, size = 0x4, offset = 0x4, fixed_abs, tag = 'smem constant byte address 0x4 - core index']
  #allocation1 [shape = 'u32[144,128]{1,0:T(1,128)}', space=vmem, size = 0x12000, scoped, tag = 'internal scratch']
  #allocation2 [shape = 'bf16[16,128]{1,0:T(8,128)(2,1)}', space=vmem, size = 0x1000, scoped, tag = 'scratch operand']
  #allocation3 [shape = 'f32[16,128]{1,0:T(8,128)}', space=vmem, size = 0x2000, scoped, tag = 'scratch operand']
  %s0 = inlined_call_operand.vmem [shape: bf16[16,16,512], index: 0, kind: input, shape index: {}]
  %s1 = inlined_call_operand.vmem [shape: bf16[128,512], index: 1, kind: input, shape index: {}]
  %s2 = inlined_call_operand.vmem [shape: bf16[16,16,128], index: 2, kind: output, shape index: {}]
  %s3 = sld [smem:[#allocation0]]
  $region45: #{image_captioning_forward.4} parent=0
    _
  %s5 = ssub.s32 1, %s3
  %s6 = scalar_select 0, %s5, %s3
  loop: start=0, step=1, limit=4
  $region2: #{image_captioning_forward.4} parent=0 // loop_pre_header
    _
  $region3: #{image_captioning_forward.4} parent=0 // loop_header
    %s8 = sphi 0, %s12
    %p9 = scmp.ge.s32.totalorder %s8, 4
    %s15 = sphi 0, %s27
    %s16 = sphi 0, %s23
    %s17 = sphi 0, %s15
    %s18 = sphi 0, %s16
    %s19 = sphi 0, %s17
    %s20 = sphi 0, %s18
    %s32 = sphi 0, %s34
    %s35 = sphi 0, %s32
    %s36 = sphi 0, %s35
    %s52 = sphi 0, %s36
    %s56 = sphi 0, %s56
    %s58 = sphi 0, %s56
    %s59 = sphi 0, %s58
    %s73 = sphi 0, %s59
    %s81 = sphi 0, %s83
    %s84 = sphi 0, %s81
    %s85 = sphi 0, %s84
    %s101 = sphi 0, %s85
  $region4: #{image_captioning_forward.4} parent=0 // loop_header_branch
    %11 = sbr.rel (%p9) target = $region8
  $region5: #{image_captioning_forward.4} parent=0 // loop_body
    %s13 = ssub.s32 %s8, 1
    %s14 = ssub.s32 %s8, 2
    %s21 = sadd.s32 1, %s16
    %p22 = scmp.ge.s32.totalorder %s21, 2
    %s23 = scalar_select %p22, 0, %s21
    %s24 = sadd.s32 1, %s15
    %s25 = scalar_select %p22, %s24, %s15
    %p26 = scmp.ge.s32.totalorder %s25, 1
    %s27 = scalar_select %p26, 0, %s25
    %s28 = ssub.s32 %s16, %s23
    %s29 = ssub.s32 %s15, %s27
    %s30 = sor.u32 %s28, %s29
    %p31 = scmp.eq.s32.totalorder %s30, 0
    %s33 = sadd.s32 %s32, 1
    %s34 = scalar_select %p31, %s32, %s33
    %p37 = pneg %p31
    %p38 = scmp.eq.s32.totalorder %s8, 1
    %p39 = por %p37, %p38
    %p40 = scmp.ne.s32.totalorder %s32, %s35
    %p41 = scmp.eq.s32.totalorder %s8, 0
    %p42 = por %p40, %p41
    %p43 = scmp.ne.s32.totalorder %s32, %s35
    %p44 = scmp.eq.s32.totalorder %s13, 1
    %p45 = por %p43, %p44
    %p46 = scmp.ne.s32.totalorder %s35, %s36
    %p47 = scmp.eq.s32.totalorder %s13, 0
    %p48 = por %p46, %p47
    %p49 = scmp.ne.s32.totalorder %s35, %s36
    %p50 = scmp.eq.s32.totalorder %s14, 1
    %p51 = por %p49, %p50
    %p53 = scmp.ne.s32.totalorder %s36, %s52
    %p54 = scmp.eq.s32.totalorder %s14, 0
    %p55 = por %p53, %p54
    %s57 = sadd.s32 %s56, 1
    %p60 = scmp.eq.s32.totalorder %s8, 1
    %p61 = scmp.ne.s32.totalorder %s56, %s58
    %p62 = scmp.eq.s32.totalorder %s8, 0
    %p63 = por %p61, %p62
    %p64 = scmp.ne.s32.totalorder %s56, %s58
    %p65 = scmp.eq.s32.totalorder %s13, 1
    %p66 = por %p64, %p65
    %p67 = scmp.ne.s32.totalorder %s58, %s59
    %p68 = scmp.eq.s32.totalorder %s13, 0
    %p69 = por %p67, %p68
    %p70 = scmp.ne.s32.totalorder %s58, %s59
    %p71 = scmp.eq.s32.totalorder %s14, 1
    %p72 = por %p70, %p71
    %p74 = scmp.ne.s32.totalorder %s59, %s73
    %p75 = scmp.eq.s32.totalorder %s14, 0
    %p76 = por %p74, %p75
    %s77 = ssub.s32 %s16, %s23
    %s78 = ssub.s32 %s15, %s27
    %s79 = sor.u32 %s77, %s78
    %p80 = scmp.eq.s32.totalorder %s79, 0
    %s82 = sadd.s32 %s81, 1
    %s83 = scalar_select %p80, %s81, %s82
    %p86 = pneg %p80
    %p87 = scmp.eq.s32.totalorder %s8, 1
    %p88 = por %p86, %p87
    %p89 = scmp.ne.s32.totalorder %s81, %s84
    %p90 = scmp.eq.s32.totalorder %s8, 0
    %p91 = por %p89, %p90
    %p92 = scmp.ne.s32.totalorder %s81, %s84
    %p93 = scmp.eq.s32.totalorder %s13, 1
    %p94 = por %p92, %p93
    %p95 = scmp.ne.s32.totalorder %s84, %s85
    %p96 = scmp.eq.s32.totalorder %s13, 0
    %p97 = por %p95, %p96
    %p98 = scmp.ne.s32.totalorder %s84, %s85
    %p99 = scmp.eq.s32.totalorder %s14, 1
    %p100 = por %p98, %p99
    %p102 = scmp.ne.s32.totalorder %s85, %s101
    %p103 = scmp.eq.s32.totalorder %s14, 0
    %p104 = por %p102, %p103
    %p105 = scmp.le.s32.totalorder 1, %s8
    %p106 = scmp.lt.s32.totalorder %s8, 3
    %p107 = pnand %p105, %p106
    %p108 = pneg %p107
    // Predicated region
    $region9: #{image_captioning_forward.4} parent=5 // pred_check
      _
    $region10: #{image_captioning_forward.4} parent=5 // pred_check_branch
      %110 = sbr.rel (%p107) target = $region12
    $region11: #{image_captioning_forward.4} parent=5 // pred_region
      %s111 = ssub.s32 %s8, 1
      // Predicated region
      $region13: #{image_captioning_forward.4} parent=11 // pred_check
        %p112 = pneg %p69
      $region14: #{image_captioning_forward.4} parent=11 // pred_check_branch
        %114 = sbr.rel (%p112) target = $region16
      $region15: #{image_captioning_forward.4} parent=11 // pred_region
        _
      $region16: #{image_captioning_forward.4} parent=11 // pred_fallthru
        _
    $region12: #{image_captioning_forward.4} parent=5 // pred_fallthru
      _
    %p115 = scmp.lt.s32.totalorder %s8, 2
    // Predicated region
    $region17: #{image_captioning_forward.4} parent=5 // pred_check
      %p116 = pneg %p115
    $region18: #{image_captioning_forward.4} parent=5 // pred_check_branch
      %118 = sbr.rel (%p116) target = $region20
    $region19: #{image_captioning_forward.4} parent=5 // pred_region
      // Predicated region
      $region21: #{image_captioning_forward.4} parent=19 // pred_check
        %p119 = pneg %p42
      $region22: #{image_captioning_forward.4} parent=19 // pred_check_branch
        %121 = sbr.rel (%p119) target = $region24
      $region23: #{image_captioning_forward.4} parent=19 // pred_region
        %s122 = smul.u32 8, %s16
        %s123 = smul.u32 2, %s15
        %p124 = scmp.lt.s32.totalorder %s122, 15
        %s125 = scalar_select %p124, %s122, 15
        %p126 = scmp.lt.s32.totalorder %s123, 1
        %s127 = scalar_select %p126, %s123, 1
        %s128 = smul.addr %s127, 4
        %s129 = smul.addr %s125, 8
        %s130 = sadd.s32 %s128, %s129
        %s131 = smul.addr %s130, 4
        %s132 = scalar_lea.vmem %s0, %s131
        %s133 = smul.u32 8, %s16
        %s134 = smul.u32 2, %s15
      $region24: #{image_captioning_forward.4} parent=19 // pred_fallthru
        _
    $region20: #{image_captioning_forward.4} parent=5 // pred_fallthru
      _
    %p135 = scmp.le.s32.totalorder 1, %s8
    %p136 = scmp.lt.s32.totalorder %s8, 3
    %p137 = pnand %p135, %p136
    %p138 = pneg %p137
    // Predicated region
    $region25: #{image_captioning_forward.4} parent=5 // pred_check
      _
    $region26: #{image_captioning_forward.4} parent=5 // pred_check_branch
      %140 = sbr.rel (%p137) target = $region28
    $region27: #{image_captioning_forward.4} parent=5 // pred_region
      %s141 = ssub.s32 %s8, 1
      %s142 = smul.u32 8, %s18
      %s143 = smul.u32 2, %s17
      %p144 = scmp.lt.s32.totalorder %s142, 15
      %s145 = scalar_select %p144, %s142, 15
      %p146 = scmp.lt.s32.totalorder %s143, 1
      %s147 = scalar_select %p146, %s143, 1
      %s148 = smul.addr %s147, 4
      %s149 = smul.addr %s145, 8
      %s150 = sadd.s32 %s148, %s149
      %s151 = smul.addr %s150, 4
      %s152 = scalar_lea.vmem %s0, %s151
      %p153 = pneg %p48
      %p154 = pneg %p45
      %p155 = pneg %p69
      %p156 = pneg %p66
      %p157 = pneg %p97
      %p158 = pneg %p94
      %s159 = smul.u32 8, %s18
      %s160 = smul.u32 2, %s17
      %p161 = scmp.lt.s32.totalorder %s159, 15
      %s162 = scalar_select %p161, %s159, 15
      %p163 = scmp.lt.s32.totalorder %s160, 1
      %s164 = scalar_select %p163, %s160, 1
      %s165 = smul.addr %s162, 2
      %s166 = sadd.s32 %s164, %s165
      %s167 = smul.addr %s166, 4
      %s168 = scalar_lea.vmem %s2, %s167
      %s169 = smul.u32 8, %s18
      %s170 = smul.u32 2, %s17
      %p171 = scmp.lt.s32.totalorder %s169, 15
      %s172 = scalar_select %p171, %s169, 15
      %p173 = scmp.lt.s32.totalorder %s170, 1
      %s174 = scalar_select %p173, %s170, 1
      %s175 = smul.addr %s174, 4
      %s176 = smul.addr %s172, 8
      %s177 = sadd.s32 %s175, %s176
      %s178 = smul.addr %s177, 4
      %s179 = scalar_lea.vmem %s0, %s178
      %s180 = smul.u32 8, %s18
      %s181 = smul.u32 2, %s17
      %s182 = smul.u32 8, %s18
      %s183 = smul.u32 2, %s17
      %p184 = scmp.lt.s32.totalorder %s182, 15
      %s185 = scalar_select %p184, %s182, 15
      %p186 = scmp.lt.s32.totalorder %s183, 1
      %s187 = scalar_select %p186, %s183, 1
      %s188 = smul.addr %s185, 2
      %s189 = sadd.s32 %s187, %s188
      %s190 = smul.addr %s189, 4
      %s191 = scalar_lea.vmem %s2, %s190
      %s192 = smul.u32 8, %s18
      %s193 = smul.u32 2, %s17
      %p195 = scmp.eq.s32.totalorder %s18, 0
      // Predicated region
      $region29: #{image_captioning_forward.4} parent=27 // pred_check
        %p196 = pneg %p195
      $region30: #{image_captioning_forward.4} parent=27 // pred_check_branch
        %198 = sbr.rel (%p196) target = $region32
      $region31: #{image_captioning_forward.4} parent=27 // pred_region
        %199 = vst [vmem:[#allocation2] sm:$0xf] 0
        %200 = vst [vmem:[#allocation2 + $0x4] sm:$0xf] 0
        %201 = vst [vmem:[#allocation3] sm:$0xff] 0.0
        %202 = vst [vmem:[#allocation3 + $0x8] sm:$0xff] 0.0
      $region32: #{image_captioning_forward.4} parent=27 // pred_fallthru
        _
      %v203 = vld [vmem:[%s1] sm:$0xff]
      %v204 = vld [vmem:[%s1 + $0x8] sm:$0xff]
      %v205 = vld [vmem:[%s1 + $0x10] sm:$0xff]
      %v206 = vld [vmem:[%s1 + $0x18] sm:$0xff]
      %v207 = vld [vmem:[%s1 + $0x20] sm:$0xff]
      %v208 = vld [vmem:[%s1 + $0x28] sm:$0xff]
      %v209 = vld [vmem:[%s1 + $0x30] sm:$0xff]
      %v210 = vld [vmem:[%s1 + $0x38] sm:$0xff]
      %v211 = vld [vmem:[%s1 + $0x40] sm:$0xff]
      %v212 = vld [vmem:[%s1 + $0x48] sm:$0xff]
      %v213 = vld [vmem:[%s1 + $0x50] sm:$0xff]
      %v214 = vld [vmem:[%s1 + $0x58] sm:$0xff]
      %v215 = vld [vmem:[%s1 + $0x60] sm:$0xff]
      %v216 = vld [vmem:[%s1 + $0x68] sm:$0xff]
      %v217 = vld [vmem:[%s1 + $0x70] sm:$0xff]
      %v218 = vld [vmem:[%s1 + $0x78] sm:$0xff]
      %v219 = vld [vmem:[%s1 + $0x80] sm:$0xff]
      %v220 = vld [vmem:[%s1 + $0x88] sm:$0xff]
      %v221 = vld [vmem:[%s1 + $0x90] sm:$0xff]
      %v222 = vld [vmem:[%s1 + $0x98] sm:$0xff]
      %v223 = vld [vmem:[%s1 + $0xa0] sm:$0xff]
      %v224 = vld [vmem:[%s1 + $0xa8] sm:$0xff]
      %v225 = vld [vmem:[%s1 + $0xb0] sm:$0xff]
      %v226 = vld [vmem:[%s1 + $0xb8] sm:$0xff]
      %v227 = vld [vmem:[%s1 + $0xc0] sm:$0xff]
      %v228 = vld [vmem:[%s1 + $0xc8] sm:$0xff]
      %v229 = vld [vmem:[%s1 + $0xd0] sm:$0xff]
      %v230 = vld [vmem:[%s1 + $0xd8] sm:$0xff]
      %v231 = vld [vmem:[%s1 + $0xe0] sm:$0xff]
      %v232 = vld [vmem:[%s1 + $0xe8] sm:$0xff]
      %v233 = vld [vmem:[%s1 + $0xf0] sm:$0xff]
      %v234 = vld [vmem:[%s1 + $0xf8] sm:$0xff]
      %v235 = vld [vmem:[#allocation2] sm:$0xf]
      %v236 = vld [vmem:[#allocation2 + $0x4] sm:$0xf]
      %v237 = vld [vmem:[#allocation3] sm:$0xff]
      %v238 = vld [vmem:[#allocation3 + $0x8] sm:$0xff]
      %v239 = vld [vmem:[%s179] sm:$0xff]
      %v240 = vld [vmem:[%s179 + $0x8] sm:$0xff]
      %v241 = vld [vmem:[%s179 + $0x10] sm:$0xff]
      %v242 = vld [vmem:[%s179 + $0x18] sm:$0xff]
      %v243 = vunpack.c.l.bf16 %v239
      %v244 = vunpack.c.h.bf16 %v239
      %v245 = vunpack.c.l.bf16 %v240
      %v246 = vunpack.c.h.bf16 %v240
      %v247 = vunpack.c.l.bf16 %v241
      %v248 = vunpack.c.h.bf16 %v241
      %v249 = vunpack.c.l.bf16 %v242
      %v250 = vunpack.c.h.bf16 %v242
      %v253 = vunpack.c.l.b16 %v235
      %v254 = vunpack.c.l.b16 %v236
      %v255 = vpack.c.b16 %v254, %v253
      %v289 = vunpack.c.l.b16 %v203
      %v290 = vunpack.c.h.b16 %v203
      %v291 = vunpack.c.l.b16 %v204
      %v292 = vunpack.c.h.b16 %v204
      %v293 = vunpack.c.l.b16 %v205
      %v294 = vunpack.c.h.b16 %v205
      %v295 = vunpack.c.l.b16 %v206
      %v296 = vunpack.c.h.b16 %v206
      %v297 = vunpack.c.l.b16 %v207
      %v298 = vunpack.c.h.b16 %v207
      %v299 = vunpack.c.l.b16 %v208
      %v300 = vunpack.c.h.b16 %v208
      %v301 = vunpack.c.l.b16 %v209
      %v302 = vunpack.c.h.b16 %v209
      %v303 = vunpack.c.l.b16 %v210
      %v304 = vunpack.c.h.b16 %v210
      %v305 = vunpack.c.l.b16 %v211
      %v306 = vunpack.c.h.b16 %v211
      %v307 = vunpack.c.l.b16 %v212
      %v308 = vunpack.c.h.b16 %v212
      %v309 = vunpack.c.l.b16 %v213
      %v310 = vunpack.c.h.b16 %v213
      %v311 = vunpack.c.l.b16 %v214
      %v312 = vunpack.c.h.b16 %v214
      %v313 = vunpack.c.l.b16 %v215
      %v314 = vunpack.c.h.b16 %v215
      %v315 = vunpack.c.l.b16 %v216
      %v316 = vunpack.c.h.b16 %v216
      %v317 = vunpack.c.l.b16 %v217
      %v318 = vunpack.c.h.b16 %v217
      %v319 = vunpack.c.l.b16 %v218
      %v320 = vunpack.c.h.b16 %v218
      %v321 = vunpack.c.l.b16 %v219
      %v322 = vunpack.c.h.b16 %v219
      %v323 = vunpack.c.l.b16 %v220
      %v324 = vunpack.c.h.b16 %v220
      %v325 = vunpack.c.l.b16 %v221
      %v326 = vunpack.c.h.b16 %v221
      %v327 = vunpack.c.l.b16 %v222
      %v328 = vunpack.c.h.b16 %v222
      %v329 = vunpack.c.l.b16 %v223
      %v330 = vunpack.c.h.b16 %v223
      %v331 = vunpack.c.l.b16 %v224
      %v332 = vunpack.c.h.b16 %v224
      %v333 = vunpack.c.l.b16 %v225
      %v334 = vunpack.c.h.b16 %v225
      %v335 = vunpack.c.l.b16 %v226
      %v336 = vunpack.c.h.b16 %v226
      %v337 = vunpack.c.l.b16 %v227
      %v338 = vunpack.c.h.b16 %v227
      %v339 = vunpack.c.l.b16 %v228
      %v340 = vunpack.c.h.b16 %v228
      %v341 = vunpack.c.l.b16 %v229
      %v342 = vunpack.c.h.b16 %v229
      %v343 = vunpack.c.l.b16 %v230
      %v344 = vunpack.c.h.b16 %v230
      %v345 = vunpack.c.l.b16 %v231
      %v346 = vunpack.c.h.b16 %v231
      %v347 = vunpack.c.l.b16 %v232
      %v348 = vunpack.c.h.b16 %v232
      %v349 = vunpack.c.l.b16 %v233
      %v350 = vunpack.c.h.b16 %v233
      %v351 = vunpack.c.l.b16 %v234
      %v352 = vunpack.c.h.b16 %v234
      %v353 = vpack.c.b16 %v293, %v289
      %v354 = vpack.c.b16 %v294, %v290
      %v355 = vpack.c.b16 %v295, %v291
      %v356 = vpack.c.b16 %v296, %v292
      %v357 = vpack.c.b16 %v301, %v297
      %v358 = vpack.c.b16 %v302, %v298
      %v359 = vpack.c.b16 %v303, %v299
      %v360 = vpack.c.b16 %v304, %v300
      %v361 = vpack.c.b16 %v309, %v305
      %v362 = vpack.c.b16 %v310, %v306
      %v363 = vpack.c.b16 %v311, %v307
      %v364 = vpack.c.b16 %v312, %v308
      %v365 = vpack.c.b16 %v317, %v313
      %v366 = vpack.c.b16 %v318, %v314
      %v367 = vpack.c.b16 %v319, %v315
      %v368 = vpack.c.b16 %v320, %v316
      %v369 = vpack.c.b16 %v325, %v321
      %v370 = vpack.c.b16 %v326, %v322
      %v371 = vpack.c.b16 %v327, %v323
      %v372 = vpack.c.b16 %v328, %v324
      %v373 = vpack.c.b16 %v333, %v329
      %v374 = vpack.c.b16 %v334, %v330
      %v375 = vpack.c.b16 %v335, %v331
      %v376 = vpack.c.b16 %v336, %v332
      %v377 = vpack.c.b16 %v341, %v337
      %v378 = vpack.c.b16 %v342, %v338
      %v379 = vpack.c.b16 %v343, %v339
      %v380 = vpack.c.b16 %v344, %v340
      %v381 = vpack.c.b16 %v349, %v345
      %v382 = vpack.c.b16 %v350, %v346
      %v383 = vpack.c.b16 %v351, %v347
      %v384 = vpack.c.b16 %v352, %v348
      %417 = vmatprep.subr.bf16.mxu0 %v382
      %418 = vmatpush1.bf16.msra.mxu0 %v381
      %419 = vmatprep.subr.bf16.mxu0 %v378
      %420 = vmatpush1.bf16.msra.mxu0 %v377
      %421 = vmatprep.subr.bf16.mxu0 %v374
      %422 = vmatpush1.bf16.msra.mxu0 %v373
      %423 = vmatprep.subr.bf16.mxu0 %v370
      %424 = vmatpush1.bf16.msra.mxu0 %v369
      %425 = vmatprep.subr.bf16.mxu0 %v366
      %426 = vmatpush1.bf16.msra.mxu0 %v365
      %427 = vmatprep.subr.bf16.mxu0 %v362
      %428 = vmatpush1.bf16.msra.mxu0 %v361
      %429 = vmatprep.subr.bf16.mxu0 %v358
      %430 = vmatpush1.bf16.msra.mxu0 %v357
      %431 = vmatprep.subr.bf16.mxu0 %v354
      %432 = vmatpush1.bf16.msra.mxu0 %v353
      %433 = vmatprep.subr.bf16.mxu0 0
      %434 = vmatpush2.bf16.msra.mxu0 0
      %435 = vmatprep.subr.bf16.mxu0 0
      %436 = vmatpush2.bf16.msra.mxu0 0
      %437 = vmatprep.subr.bf16.mxu0 0
      %438 = vmatpush2.bf16.msra.mxu0 0
      %439 = vmatprep.subr.bf16.mxu0 0
      %440 = vmatpush2.bf16.msra.mxu0 0
      %441 = vmatprep.subr.bf16.mxu0 0
      %442 = vmatpush2.bf16.msra.mxu0 0
      %443 = vmatprep.subr.bf16.mxu0 0
      %444 = vmatpush2.bf16.msra.mxu0 0
      %445 = vmatprep.subr.bf16.mxu0 0
      %446 = vmatpush2.bf16.msra.mxu0 0
      %447 = vmatprep.subr.bf16.mxu0 0
      %448 = vmatpush2.bf16.msra.mxu0 0
      %449 = vmatprep.mubr.bf16.mxu0 0
      %450 = vmatmul.mubr.bf16.gmra.mxu0 %v255
      %v451 = vpop.f32.mrf.mxu0
      %v452 = vadd.f32 0.0, %v451
      %v453 = vpop.f32.mrf.mxu0
      %v454 = vadd.f32 0.0, %v453
      %v455 = vpop.f32.mrf.mxu0
      %v456 = vadd.f32 0.0, %v455
      %v457 = vpop.f32.mrf.mxu0
      %v458 = vadd.f32 0.0, %v457
      %459 = vdwg.mxu0
      %460 = vmatprep.subr.bf16.mxu0 %v384
      %461 = vmatpush1.bf16.msra.mxu0 %v383
      %462 = vmatprep.subr.bf16.mxu0 %v380
      %463 = vmatpush1.bf16.msra.mxu0 %v379
      %464 = vmatprep.subr.bf16.mxu0 %v376
      %465 = vmatpush1.bf16.msra.mxu0 %v375
      %466 = vmatprep.subr.bf16.mxu0 %v372
      %467 = vmatpush1.bf16.msra.mxu0 %v371
      %468 = vmatprep.subr.bf16.mxu0 %v368
      %469 = vmatpush1.bf16.msra.mxu0 %v367
      %470 = vmatprep.subr.bf16.mxu0 %v364
      %471 = vmatpush1.bf16.msra.mxu0 %v363
      %472 = vmatprep.subr.bf16.mxu0 %v360
      %473 = vmatpush1.bf16.msra.mxu0 %v359
      %474 = vmatprep.subr.bf16.mxu0 %v356
      %475 = vmatpush1.bf16.msra.mxu0 %v355
      %476 = vmatprep.subr.bf16.mxu0 0
      %477 = vmatpush2.bf16.msra.mxu0 0
      %478 = vmatprep.subr.bf16.mxu0 0
      %479 = vmatpush2.bf16.msra.mxu0 0
      %480 = vmatprep.subr.bf16.mxu0 0
      %481 = vmatpush2.bf16.msra.mxu0 0
      %482 = vmatprep.subr.bf16.mxu0 0
      %483 = vmatpush2.bf16.msra.mxu0 0
      %484 = vmatprep.subr.bf16.mxu0 0
      %485 = vmatpush2.bf16.msra.mxu0 0
      %486 = vmatprep.subr.bf16.mxu0 0
      %487 = vmatpush2.bf16.msra.mxu0 0
      %488 = vmatprep.subr.bf16.mxu0 0
      %489 = vmatpush2.bf16.msra.mxu0 0
      %490 = vmatprep.subr.bf16.mxu0 0
      %491 = vmatpush2.bf16.msra.mxu0 0
      %492 = vmatprep.mubr.bf16.mxu0 0
      %493 = vmatmul.mubr.bf16.gmra.mxu0 %v255
      %v494 = vpop.f32.mrf.mxu0
      %v495 = vadd.f32 0.0, %v494
      %v496 = vpop.f32.mrf.mxu0
      %v497 = vadd.f32 0.0, %v496
      %v498 = vpop.f32.mrf.mxu0
      %v499 = vadd.f32 0.0, %v498
      %v500 = vpop.f32.mrf.mxu0
      %v501 = vadd.f32 0.0, %v500
      %502 = vdwg.mxu0
      %v503 = vadd.f32 %v243, %v452
      %v504 = vadd.f32 %v244, %v454
      %v505 = vadd.f32 %v245, %v495
      %v506 = vadd.f32 %v246, %v497
      %v507 = vadd.f32 %v247, %v456
      %v508 = vadd.f32 %v248, %v458
      %v509 = vadd.f32 %v249, %v499
      %v510 = vadd.f32 %v250, %v501
      %v511 = vxor.u32 %v503, 2147483648
      %v512 = vxor.u32 %v507, 2147483648
      %v513 = vmul.f32 %v511, 1.442695
      %v514 = vpow.pop %v513
      %v515 = vmul.f32 %v512, 1.442695
      %v516 = vpow.pop %v515
      %v517 = vadd.f32 %v514, 1.0
      %v518 = vadd.f32 %v516, 1.0
      %v519 = vrcp.pop %v517
      %v520 = vmul.f32 1.0, %v519
      %v521 = vrcp.pop %v518
      %v522 = vmul.f32 1.0, %v521
      %v523 = vxor.u32 %v504, 2147483648
      %v524 = vxor.u32 %v508, 2147483648
      %v525 = vmul.f32 %v523, 1.442695
      %v526 = vpow.pop %v525
      %v527 = vmul.f32 %v524, 1.442695
      %v528 = vpow.pop %v527
      %v529 = vadd.f32 %v526, 1.0
      %v530 = vadd.f32 %v528, 1.0
      %v531 = vrcp.pop %v529
      %v532 = vmul.f32 1.0, %v531
      %v533 = vrcp.pop %v530
      %v534 = vmul.f32 1.0, %v533
      %v535 = vtanh.pop %v505
      %v536 = vtanh.pop %v509
      %v537 = vxor.u32 %v506, 2147483648
      %v538 = vxor.u32 %v510, 2147483648
      %v539 = vmul.f32 %v537, 1.442695
      %v540 = vpow.pop %v539
      %v541 = vmul.f32 %v538, 1.442695
      %v542 = vpow.pop %v541
      %v543 = vadd.f32 %v540, 1.0
      %v544 = vadd.f32 %v542, 1.0
      %v545 = vrcp.pop %v543
      %v546 = vmul.f32 1.0, %v545
      %v547 = vrcp.pop %v544
      %v548 = vmul.f32 1.0, %v547
      %v549 = vmul.f32 %v532, %v237
      %v550 = vmul.f32 %v534, %v238
      %v551 = vmul.f32 %v520, %v535
      %v552 = vmul.f32 %v522, %v536
      %v553 = vadd.f32 %v549, %v551
      %v554 = vadd.f32 %v550, %v552
      %v555 = vtanh.pop %v553
      %v556 = vtanh.pop %v554
      %v557 = vmul.f32 %v546, %v555
      %v558 = vmul.f32 %v548, %v556
      %v559 = vpack.c.bf16 %v558, %v557
      %v561 = vunpack.c.l.b16 %v559
      %v562 = vunpack.c.h.b16 %v559
      %v563 = vpack.c.b16 %v561, %v561
      %v564 = vpack.c.b16 %v562, %v562
      %567 = vst [vmem:[%s191] sm:$0xf] %v563
      %568 = vst [vmem:[%s191 + $0x4] sm:$0xf] %v564
      %s569 = scalar_lea.vmem %s179, 32
      %v570 = vld [vmem:[%s569] sm:$0xff]
      %v571 = vld [vmem:[%s569 + $0x8] sm:$0xff]
      %v572 = vld [vmem:[%s569 + $0x10] sm:$0xff]
      %v573 = vld [vmem:[%s569 + $0x18] sm:$0xff]
      %v574 = vunpack.c.l.bf16 %v570
      %v575 = vunpack.c.h.bf16 %v570
      %v576 = vunpack.c.l.bf16 %v571
      %v577 = vunpack.c.h.bf16 %v571
      %v578 = vunpack.c.l.bf16 %v572
      %v579 = vunpack.c.h.bf16 %v572
      %v580 = vunpack.c.l.bf16 %v573
      %v581 = vunpack.c.h.bf16 %v573
      %582 = vmatprep.subr.bf16.mxu0 %v382
      %583 = vmatpush1.bf16.msra.mxu0 %v381
      %584 = vmatprep.subr.bf16.mxu0 %v378
      %585 = vmatpush1.bf16.msra.mxu0 %v377
      %586 = vmatprep.subr.bf16.mxu0 %v374
      %587 = vmatpush1.bf16.msra.mxu0 %v373
      %588 = vmatprep.subr.bf16.mxu0 %v370
      %589 = vmatpush1.bf16.msra.mxu0 %v369
      %590 = vmatprep.subr.bf16.mxu0 %v366
      %591 = vmatpush1.bf16.msra.mxu0 %v365
      %592 = vmatprep.subr.bf16.mxu0 %v362
      %593 = vmatpush1.bf16.msra.mxu0 %v361
      %594 = vmatprep.subr.bf16.mxu0 %v358
      %595 = vmatpush1.bf16.msra.mxu0 %v357
      %596 = vmatprep.subr.bf16.mxu0 %v354
      %597 = vmatpush1.bf16.msra.mxu0 %v353
      %598 = vmatprep.subr.bf16.mxu0 0
      %599 = vmatpush2.bf16.msra.mxu0 0
      %600 = vmatprep.subr.bf16.mxu0 0
      %601 = vmatpush2.bf16.msra.mxu0 0
      %602 = vmatprep.subr.bf16.mxu0 0
      %603 = vmatpush2.bf16.msra.mxu0 0
      %604 = vmatprep.subr.bf16.mxu0 0
      %605 = vmatpush2.bf16.msra.mxu0 0
      %606 = vmatprep.subr.bf16.mxu0 0
      %607 = vmatpush2.bf16.msra.mxu0 0
      %608 = vmatprep.subr.bf16.mxu0 0
      %609 = vmatpush2.bf16.msra.mxu0 0
      %610 = vmatprep.subr.bf16.mxu0 0
      %611 = vmatpush2.bf16.msra.mxu0 0
      %612 = vmatprep.subr.bf16.mxu0 0
      %613 = vmatpush2.bf16.msra.mxu0 0
      %614 = vmatprep.mubr.bf16.mxu0 0
      %615 = vmatmul.mubr.bf16.gmra.mxu0 %v559
      %v616 = vpop.f32.mrf.mxu0
      %v617 = vadd.f32 0.0, %v616
      %v618 = vpop.f32.mrf.mxu0
      %v619 = vadd.f32 0.0, %v618
      %v620 = vpop.f32.mrf.mxu0
      %v621 = vadd.f32 0.0, %v620
      %v622 = vpop.f32.mrf.mxu0
      %v623 = vadd.f32 0.0, %v622
      %624 = vdwg.mxu0
      %625 = vmatprep.subr.bf16.mxu0 %v384
      %626 = vmatpush1.bf16.msra.mxu0 %v383
      %627 = vmatprep.subr.bf16.mxu0 %v380
      %628 = vmatpush1.bf16.msra.mxu0 %v379
      %629 = vmatprep.subr.bf16.mxu0 %v376
      %630 = vmatpush1.bf16.msra.mxu0 %v375
      %631 = vmatprep.subr.bf16.mxu0 %v372
      %632 = vmatpush1.bf16.msra.mxu0 %v371
      %633 = vmatprep.subr.bf16.mxu0 %v368
      %634 = vmatpush1.bf16.msra.mxu0 %v367
      %635 = vmatprep.subr.bf16.mxu0 %v364
      %636 = vmatpush1.bf16.msra.mxu0 %v363
      %637 = vmatprep.subr.bf16.mxu0 %v360
      %638 = vmatpush1.bf16.msra.mxu0 %v359
      %639 = vmatprep.subr.bf16.mxu0 %v356
      %640 = vmatpush1.bf16.msra.mxu0 %v355
      %641 = vmatprep.subr.bf16.mxu0 0
      %642 = vmatpush2.bf16.msra.mxu0 0
      %643 = vmatprep.subr.bf16.mxu0 0
      %644 = vmatpush2.bf16.msra.mxu0 0
      %645 = vmatprep.subr.bf16.mxu0 0
      %646 = vmatpush2.bf16.msra.mxu0 0
      %647 = vmatprep.subr.bf16.mxu0 0
      %648 = vmatpush2.bf16.msra.mxu0 0
      %649 = vmatprep.subr.bf16.mxu0 0
      %650 = vmatpush2.bf16.msra.mxu0 0
      %651 = vmatprep.subr.bf16.mxu0 0
      %652 = vmatpush2.bf16.msra.mxu0 0
      %653 = vmatprep.subr.bf16.mxu0 0
      %654 = vmatpush2.bf16.msra.mxu0 0
      %655 = vmatprep.subr.bf16.mxu0 0
      %656 = vmatpush2.bf16.msra.mxu0 0
      %657 = vmatprep.mubr.bf16.mxu0 0
      %658 = vmatmul.mubr.bf16.gmra.mxu0 %v559
      %v659 = vpop.f32.mrf.mxu0
      %v660 = vadd.f32 0.0, %v659
      %v661 = vpop.f32.mrf.mxu0
      %v662 = vadd.f32 0.0, %v661
      %v663 = vpop.f32.mrf.mxu0
      %v664 = vadd.f32 0.0, %v663
      %v665 = vpop.f32.mrf.mxu0
      %v666 = vadd.f32 0.0, %v665
      %667 = vdwg.mxu0
      %v668 = vadd.f32 %v574, %v617
      %v669 = vadd.f32 %v575, %v619
      %v670 = vadd.f32 %v576, %v660
      %v671 = vadd.f32 %v577, %v662
      %v672 = vadd.f32 %v578, %v621
      %v673 = vadd.f32 %v579, %v623
      %v674 = vadd.f32 %v580, %v664
      %v675 = vadd.f32 %v581, %v666
      %v676 = vxor.u32 %v668, 2147483648
      %v677 = vxor.u32 %v672, 2147483648
      %v678 = vmul.f32 %v676, 1.442695
      %v679 = vpow.pop %v678
      %v680 = vmul.f32 %v677, 1.442695
      %v681 = vpow.pop %v680
      %v682 = vadd.f32 %v679, 1.0
      %v683 = vadd.f32 %v681, 1.0
      %v684 = vrcp.pop %v682
      %v685 = vmul.f32 1.0, %v684
      %v686 = vrcp.pop %v683
      %v687 = vmul.f32 1.0, %v686
      %v688 = vxor.u32 %v669, 2147483648
      %v689 = vxor.u32 %v673, 2147483648
      %v690 = vmul.f32 %v688, 1.442695
      %v691 = vpow.pop %v690
      %v692 = vmul.f32 %v689, 1.442695
      %v693 = vpow.pop %v692
      %v694 = vadd.f32 %v691, 1.0
      %v695 = vadd.f32 %v693, 1.0
      %v696 = vrcp.pop %v694
      %v697 = vmul.f32 1.0, %v696
      %v698 = vrcp.pop %v695
      %v699 = vmul.f32 1.0, %v698
      %v700 = vtanh.pop %v670
      %v701 = vtanh.pop %v674
      %v702 = vxor.u32 %v671, 2147483648
      %v703 = vxor.u32 %v675, 2147483648
      %v704 = vmul.f32 %v702, 1.442695
      %v705 = vpow.pop %v704
      %v706 = vmul.f32 %v703, 1.442695
      %v707 = vpow.pop %v706
      %v708 = vadd.f32 %v705, 1.0
      %v709 = vadd.f32 %v707, 1.0
      %v710 = vrcp.pop %v708
      %v711 = vmul.f32 1.0, %v710
      %v712 = vrcp.pop %v709
      %v713 = vmul.f32 1.0, %v712
      %v714 = vmul.f32 %v697, %v553
      %v715 = vmul.f32 %v699, %v554
      %v716 = vmul.f32 %v685, %v700
      %v717 = vmul.f32 %v687, %v701
      %v718 = vadd.f32 %v714, %v716
      %v719 = vadd.f32 %v715, %v717
      %v720 = vtanh.pop %v718
      %v721 = vtanh.pop %v719
      %v722 = vmul.f32 %v711, %v720
      %v723 = vmul.f32 %v713, %v721
      %v724 = vpack.c.bf16 %v723, %v722
      %v726 = vunpack.c.l.b16 %v724
      %v727 = vunpack.c.h.b16 %v724
      %v728 = vpack.c.b16 %v726, %v726
      %v729 = vpack.c.b16 %v727, %v727
      %s732 = scalar_lea.vmem %s191, 8
      %733 = vst [vmem:[%s732] sm:$0xf] %v728
      %734 = vst [vmem:[%s732 + $0x4] sm:$0xf] %v729
      %s735 = scalar_lea.vmem %s179, 64
      %v736 = vld [vmem:[%s735] sm:$0xff]
      %v737 = vld [vmem:[%s735 + $0x8] sm:$0xff]
      %v738 = vld [vmem:[%s735 + $0x10] sm:$0xff]
      %v739 = vld [vmem:[%s735 + $0x18] sm:$0xff]
      %v740 = vunpack.c.l.bf16 %v736
      %v741 = vunpack.c.h.bf16 %v736
      %v742 = vunpack.c.l.bf16 %v737
      %v743 = vunpack.c.h.bf16 %v737
      %v744 = vunpack.c.l.bf16 %v738
      %v745 = vunpack.c.h.bf16 %v738
      %v746 = vunpack.c.l.bf16 %v739
      %v747 = vunpack.c.h.bf16 %v739
      %748 = vmatprep.subr.bf16.mxu0 %v382
      %749 = vmatpush1.bf16.msra.mxu0 %v381
      %750 = vmatprep.subr.bf16.mxu0 %v378
      %751 = vmatpush1.bf16.msra.mxu0 %v377
      %752 = vmatprep.subr.bf16.mxu0 %v374
      %753 = vmatpush1.bf16.msra.mxu0 %v373
      %754 = vmatprep.subr.bf16.mxu0 %v370
      %755 = vmatpush1.bf16.msra.mxu0 %v369
      %756 = vmatprep.subr.bf16.mxu0 %v366
      %757 = vmatpush1.bf16.msra.mxu0 %v365
      %758 = vmatprep.subr.bf16.mxu0 %v362
      %759 = vmatpush1.bf16.msra.mxu0 %v361
      %760 = vmatprep.subr.bf16.mxu0 %v358
      %761 = vmatpush1.bf16.msra.mxu0 %v357
      %762 = vmatprep.subr.bf16.mxu0 %v354
      %763 = vmatpush1.bf16.msra.mxu0 %v353
      %764 = vmatprep.subr.bf16.mxu0 0
      %765 = vmatpush2.bf16.msra.mxu0 0
      %766 = vmatprep.subr.bf16.mxu0 0
      %767 = vmatpush2.bf16.msra.mxu0 0
      %768 = vmatprep.subr.bf16.mxu0 0
      %769 = vmatpush2.bf16.msra.mxu0 0
      %770 = vmatprep.subr.bf16.mxu0 0
      %771 = vmatpush2.bf16.msra.mxu0 0
      %772 = vmatprep.subr.bf16.mxu0 0
      %773 = vmatpush2.bf16.msra.mxu0 0
      %774 = vmatprep.subr.bf16.mxu0 0
      %775 = vmatpush2.bf16.msra.mxu0 0
      %776 = vmatprep.subr.bf16.mxu0 0
      %777 = vmatpush2.bf16.msra.mxu0 0
      %778 = vmatprep.subr.bf16.mxu0 0
      %779 = vmatpush2.bf16.msra.mxu0 0
      %780 = vmatprep.mubr.bf16.mxu0 0
      %781 = vmatmul.mubr.bf16.gmra.mxu0 %v724
      %v782 = vpop.f32.mrf.mxu0
      %v783 = vadd.f32 0.0, %v782
      %v784 = vpop.f32.mrf.mxu0
      %v785 = vadd.f32 0.0, %v784
      %v786 = vpop.f32.mrf.mxu0
      %v787 = vadd.f32 0.0, %v786
      %v788 = vpop.f32.mrf.mxu0
      %v789 = vadd.f32 0.0, %v788
      %790 = vdwg.mxu0
      %791 = vmatprep.subr.bf16.mxu0 %v384
      %792 = vmatpush1.bf16.msra.mxu0 %v383
      %793 = vmatprep.subr.bf16.mxu0 %v380
      %794 = vmatpush1.bf16.msra.mxu0 %v379
      %795 = vmatprep.subr.bf16.mxu0 %v376
      %796 = vmatpush1.bf16.msra.mxu0 %v375
      %797 = vmatprep.subr.bf16.mxu0 %v372
      %798 = vmatpush1.bf16.msra.mxu0 %v371
      %799 = vmatprep.subr.bf16.mxu0 %v368
      %800 = vmatpush1.bf16.msra.mxu0 %v367
      %801 = vmatprep.subr.bf16.mxu0 %v364
      %802 = vmatpush1.bf16.msra.mxu0 %v363
      %803 = vmatprep.subr.bf16.mxu0 %v360
      %804 = vmatpush1.bf16.msra.mxu0 %v359
      %805 = vmatprep.subr.bf16.mxu0 %v356
      %806 = vmatpush1.bf16.msra.mxu0 %v355
      %807 = vmatprep.subr.bf16.mxu0 0
      %808 = vmatpush2.bf16.msra.mxu0 0
      %809 = vmatprep.subr.bf16.mxu0 0
      %810 = vmatpush2.bf16.msra.mxu0 0
      %811 = vmatprep.subr.bf16.mxu0 0
      %812 = vmatpush2.bf16.msra.mxu0 0
      %813 = vmatprep.subr.bf16.mxu0 0
      %814 = vmatpush2.bf16.msra.mxu0 0
      %815 = vmatprep.subr.bf16.mxu0 0
      %816 = vmatpush2.bf16.msra.mxu0 0
      %817 = vmatprep.subr.bf16.mxu0 0
      %818 = vmatpush2.bf16.msra.mxu0 0
      %819 = vmatprep.subr.bf16.mxu0 0
      %820 = vmatpush2.bf16.msra.mxu0 0
      %821 = vmatprep.subr.bf16.mxu0 0
      %822 = vmatpush2.bf16.msra.mxu0 0
      %823 = vmatprep.mubr.bf16.mxu0 0
      %824 = vmatmul.mubr.bf16.gmra.mxu0 %v724
      %v825 = vpop.f32.mrf.mxu0
      %v826 = vadd.f32 0.0, %v825
      %v827 = vpop.f32.mrf.mxu0
      %v828 = vadd.f32 0.0, %v827
      %v829 = vpop.f32.mrf.mxu0
      %v830 = vadd.f32 0.0, %v829
      %v831 = vpop.f32.mrf.mxu0
      %v832 = vadd.f32 0.0, %v831
      %833 = vdwg.mxu0
      %v834 = vadd.f32 %v740, %v783
      %v835 = vadd.f32 %v741, %v785
      %v836 = vadd.f32 %v742, %v826
      %v837 = vadd.f32 %v743, %v828
      %v838 = vadd.f32 %v744, %v787
      %v839 = vadd.f32 %v745, %v789
      %v840 = vadd.f32 %v746, %v830
      %v841 = vadd.f32 %v747, %v832
      %v842 = vxor.u32 %v834, 2147483648
      %v843 = vxor.u32 %v838, 2147483648
      %v844 = vmul.f32 %v842, 1.442695
      %v845 = vpow.pop %v844
      %v846 = vmul.f32 %v843, 1.442695
      %v847 = vpow.pop %v846
      %v848 = vadd.f32 %v845, 1.0
      %v849 = vadd.f32 %v847, 1.0
      %v850 = vrcp.pop %v848
      %v851 = vmul.f32 1.0, %v850
      %v852 = vrcp.pop %v849
      %v853 = vmul.f32 1.0, %v852
      %v854 = vxor.u32 %v835, 2147483648
      %v855 = vxor.u32 %v839, 2147483648
      %v856 = vmul.f32 %v854, 1.442695
      %v857 = vpow.pop %v856
      %v858 = vmul.f32 %v855, 1.442695
      %v859 = vpow.pop %v858
      %v860 = vadd.f32 %v857, 1.0
      %v861 = vadd.f32 %v859, 1.0
      %v862 = vrcp.pop %v860
      %v863 = vmul.f32 1.0, %v862
      %v864 = vrcp.pop %v861
      %v865 = vmul.f32 1.0, %v864
      %v866 = vtanh.pop %v836
      %v867 = vtanh.pop %v840
      %v868 = vxor.u32 %v837, 2147483648
      %v869 = vxor.u32 %v841, 2147483648
      %v870 = vmul.f32 %v868, 1.442695
      %v871 = vpow.pop %v870
      %v872 = vmul.f32 %v869, 1.442695
      %v873 = vpow.pop %v872
      %v874 = vadd.f32 %v871, 1.0
      %v875 = vadd.f32 %v873, 1.0
      %v876 = vrcp.pop %v874
      %v877 = vmul.f32 1.0, %v876
      %v878 = vrcp.pop %v875
      %v879 = vmul.f32 1.0, %v878
      %v880 = vmul.f32 %v863, %v718
      %v881 = vmul.f32 %v865, %v719
      %v882 = vmul.f32 %v851, %v866
      %v883 = vmul.f32 %v853, %v867
      %v884 = vadd.f32 %v880, %v882
      %v885 = vadd.f32 %v881, %v883
      %v886 = vtanh.pop %v884
      %v887 = vtanh.pop %v885
      %v888 = vmul.f32 %v877, %v886
      %v889 = vmul.f32 %v879, %v887
      %v890 = vpack.c.bf16 %v889, %v888
      %v892 = vunpack.c.l.b16 %v890
      %v893 = vunpack.c.h.b16 %v890
      %v894 = vpack.c.b16 %v892, %v892
      %v895 = vpack.c.b16 %v893, %v893
      %s898 = scalar_lea.vmem %s191, 16
      %899 = vst [vmem:[%s898] sm:$0xf] %v894
      %900 = vst [vmem:[%s898 + $0x4] sm:$0xf] %v895
      %s901 = scalar_lea.vmem %s179, 96
      %v902 = vld [vmem:[%s901] sm:$0xff]
      %v903 = vld [vmem:[%s901 + $0x8] sm:$0xff]
      %v904 = vld [vmem:[%s901 + $0x10] sm:$0xff]
      %v905 = vld [vmem:[%s901 + $0x18] sm:$0xff]
      %v906 = vunpack.c.l.bf16 %v902
      %v907 = vunpack.c.h.bf16 %v902
      %v908 = vunpack.c.l.bf16 %v903
      %v909 = vunpack.c.h.bf16 %v903
      %v910 = vunpack.c.l.bf16 %v904
      %v911 = vunpack.c.h.bf16 %v904
      %v912 = vunpack.c.l.bf16 %v905
      %v913 = vunpack.c.h.bf16 %v905
      %914 = vmatprep.subr.bf16.mxu0 %v382
      %915 = vmatpush1.bf16.msra.mxu0 %v381
      %916 = vmatprep.subr.bf16.mxu0 %v378
      %917 = vmatpush1.bf16.msra.mxu0 %v377
      %918 = vmatprep.subr.bf16.mxu0 %v374
      %919 = vmatpush1.bf16.msra.mxu0 %v373
      %920 = vmatprep.subr.bf16.mxu0 %v370
      %921 = vmatpush1.bf16.msra.mxu0 %v369
      %922 = vmatprep.subr.bf16.mxu0 %v366
      %923 = vmatpush1.bf16.msra.mxu0 %v365
      %924 = vmatprep.subr.bf16.mxu0 %v362
      %925 = vmatpush1.bf16.msra.mxu0 %v361
      %926 = vmatprep.subr.bf16.mxu0 %v358
      %927 = vmatpush1.bf16.msra.mxu0 %v357
      %928 = vmatprep.subr.bf16.mxu0 %v354
      %929 = vmatpush1.bf16.msra.mxu0 %v353
      %930 = vmatprep.subr.bf16.mxu0 0
      %931 = vmatpush2.bf16.msra.mxu0 0
      %932 = vmatprep.subr.bf16.mxu0 0
      %933 = vmatpush2.bf16.msra.mxu0 0
      %934 = vmatprep.subr.bf16.mxu0 0
      %935 = vmatpush2.bf16.msra.mxu0 0
      %936 = vmatprep.subr.bf16.mxu0 0
      %937 = vmatpush2.bf16.msra.mxu0 0
      %938 = vmatprep.subr.bf16.mxu0 0
      %939 = vmatpush2.bf16.msra.mxu0 0
      %940 = vmatprep.subr.bf16.mxu0 0
      %941 = vmatpush2.bf16.msra.mxu0 0
      %942 = vmatprep.subr.bf16.mxu0 0
      %943 = vmatpush2.bf16.msra.mxu0 0
      %944 = vmatprep.subr.bf16.mxu0 0
      %945 = vmatpush2.bf16.msra.mxu0 0
      %946 = vmatprep.mubr.bf16.mxu0 0
      %947 = vmatmul.mubr.bf16.gmra.mxu0 %v890
      %v948 = vpop.f32.mrf.mxu0
      %v949 = vadd.f32 0.0, %v948
      %v950 = vpop.f32.mrf.mxu0
      %v951 = vadd.f32 0.0, %v950
      %v952 = vpop.f32.mrf.mxu0
      %v953 = vadd.f32 0.0, %v952
      %v954 = vpop.f32.mrf.mxu0
      %v955 = vadd.f32 0.0, %v954
      %956 = vdwg.mxu0
      %957 = vmatprep.subr.bf16.mxu0 %v384
      %958 = vmatpush1.bf16.msra.mxu0 %v383
      %959 = vmatprep.subr.bf16.mxu0 %v380
      %960 = vmatpush1.bf16.msra.mxu0 %v379
      %961 = vmatprep.subr.bf16.mxu0 %v376
      %962 = vmatpush1.bf16.msra.mxu0 %v375
      %963 = vmatprep.subr.bf16.mxu0 %v372
      %964 = vmatpush1.bf16.msra.mxu0 %v371
      %965 = vmatprep.subr.bf16.mxu0 %v368
      %966 = vmatpush1.bf16.msra.mxu0 %v367
      %967 = vmatprep.subr.bf16.mxu0 %v364
      %968 = vmatpush1.bf16.msra.mxu0 %v363
      %969 = vmatprep.subr.bf16.mxu0 %v360
      %970 = vmatpush1.bf16.msra.mxu0 %v359
      %971 = vmatprep.subr.bf16.mxu0 %v356
      %972 = vmatpush1.bf16.msra.mxu0 %v355
      %973 = vmatprep.subr.bf16.mxu0 0
      %974 = vmatpush2.bf16.msra.mxu0 0
      %975 = vmatprep.subr.bf16.mxu0 0
      %976 = vmatpush2.bf16.msra.mxu0 0
      %977 = vmatprep.subr.bf16.mxu0 0
      %978 = vmatpush2.bf16.msra.mxu0 0
      %979 = vmatprep.subr.bf16.mxu0 0
      %980 = vmatpush2.bf16.msra.mxu0 0
      %981 = vmatprep.subr.bf16.mxu0 0
      %982 = vmatpush2.bf16.msra.mxu0 0
      %983 = vmatprep.subr.bf16.mxu0 0
      %984 = vmatpush2.bf16.msra.mxu0 0
      %985 = vmatprep.subr.bf16.mxu0 0
      %986 = vmatpush2.bf16.msra.mxu0 0
      %987 = vmatprep.subr.bf16.mxu0 0
      %988 = vmatpush2.bf16.msra.mxu0 0
      %989 = vmatprep.mubr.bf16.mxu0 0
      %990 = vmatmul.mubr.bf16.gmra.mxu0 %v890
      %v991 = vpop.f32.mrf.mxu0
      %v992 = vadd.f32 0.0, %v991
      %v993 = vpop.f32.mrf.mxu0
      %v994 = vadd.f32 0.0, %v993
      %v995 = vpop.f32.mrf.mxu0
      %v996 = vadd.f32 0.0, %v995
      %v997 = vpop.f32.mrf.mxu0
      %v998 = vadd.f32 0.0, %v997
      %999 = vdwg.mxu0
      %v1000 = vadd.f32 %v906, %v949
      %v1001 = vadd.f32 %v907, %v951
      %v1002 = vadd.f32 %v908, %v992
      %v1003 = vadd.f32 %v909, %v994
      %v1004 = vadd.f32 %v910, %v953
      %v1005 = vadd.f32 %v911, %v955
      %v1006 = vadd.f32 %v912, %v996
      %v1007 = vadd.f32 %v913, %v998
      %v1008 = vxor.u32 %v1000, 2147483648
      %v1009 = vxor.u32 %v1004, 2147483648
      %v1010 = vmul.f32 %v1008, 1.442695
      %v1011 = vpow.pop %v1010
      %v1012 = vmul.f32 %v1009, 1.442695
      %v1013 = vpow.pop %v1012
      %v1014 = vadd.f32 %v1011, 1.0
      %v1015 = vadd.f32 %v1013, 1.0
      %v1016 = vrcp.pop %v1014
      %v1017 = vmul.f32 1.0, %v1016
      %v1018 = vrcp.pop %v1015
      %v1019 = vmul.f32 1.0, %v1018
      %v1020 = vxor.u32 %v1001, 2147483648
      %v1021 = vxor.u32 %v1005, 2147483648
      %v1022 = vmul.f32 %v1020, 1.442695
      %v1023 = vpow.pop %v1022
      %v1024 = vmul.f32 %v1021, 1.442695
      %v1025 = vpow.pop %v1024
      %v1026 = vadd.f32 %v1023, 1.0
      %v1027 = vadd.f32 %v1025, 1.0
      %v1028 = vrcp.pop %v1026
      %v1029 = vmul.f32 1.0, %v1028
      %v1030 = vrcp.pop %v1027
      %v1031 = vmul.f32 1.0, %v1030
      %v1032 = vtanh.pop %v1002
      %v1033 = vtanh.pop %v1006
      %v1034 = vxor.u32 %v1003, 2147483648
      %v1035 = vxor.u32 %v1007, 2147483648
      %v1036 = vmul.f32 %v1034, 1.442695
      %v1037 = vpow.pop %v1036
      %v1038 = vmul.f32 %v1035, 1.442695
      %v1039 = vpow.pop %v1038
      %v1040 = vadd.f32 %v1037, 1.0
      %v1041 = vadd.f32 %v1039, 1.0
      %v1042 = vrcp.pop %v1040
      %v1043 = vmul.f32 1.0, %v1042
      %v1044 = vrcp.pop %v1041
      %v1045 = vmul.f32 1.0, %v1044
      %v1046 = vmul.f32 %v1029, %v884
      %v1047 = vmul.f32 %v1031, %v885
      %v1048 = vmul.f32 %v1017, %v1032
      %v1049 = vmul.f32 %v1019, %v1033
      %v1050 = vadd.f32 %v1046, %v1048
      %v1051 = vadd.f32 %v1047, %v1049
      %v1052 = vtanh.pop %v1050
      %v1053 = vtanh.pop %v1051
      %v1054 = vmul.f32 %v1043, %v1052
      %v1055 = vmul.f32 %v1045, %v1053
      %v1056 = vpack.c.bf16 %v1055, %v1054
      %v1058 = vunpack.c.l.b16 %v1056
      %v1059 = vunpack.c.h.b16 %v1056
      %v1060 = vpack.c.b16 %v1058, %v1058
      %v1061 = vpack.c.b16 %v1059, %v1059
      %s1064 = scalar_lea.vmem %s191, 24
      %1065 = vst [vmem:[%s1064] sm:$0xf] %v1060
      %1066 = vst [vmem:[%s1064 + $0x4] sm:$0xf] %v1061
      %s1067 = scalar_lea.vmem %s179, 128
      %v1068 = vld [vmem:[%s1067] sm:$0xff]
      %v1069 = vld [vmem:[%s1067 + $0x8] sm:$0xff]
      %v1070 = vld [vmem:[%s1067 + $0x10] sm:$0xff]
      %v1071 = vld [vmem:[%s1067 + $0x18] sm:$0xff]
      %v1072 = vunpack.c.l.bf16 %v1068
      %v1073 = vunpack.c.h.bf16 %v1068
      %v1074 = vunpack.c.l.bf16 %v1069
      %v1075 = vunpack.c.h.bf16 %v1069
      %v1076 = vunpack.c.l.bf16 %v1070
      %v1077 = vunpack.c.h.bf16 %v1070
      %v1078 = vunpack.c.l.bf16 %v1071
      %v1079 = vunpack.c.h.bf16 %v1071
      %1080 = vmatprep.subr.bf16.mxu0 %v382
      %1081 = vmatpush1.bf16.msra.mxu0 %v381
      %1082 = vmatprep.subr.bf16.mxu0 %v378
      %1083 = vmatpush1.bf16.msra.mxu0 %v377
      %1084 = vmatprep.subr.bf16.mxu0 %v374
      %1085 = vmatpush1.bf16.msra.mxu0 %v373
      %1086 = vmatprep.subr.bf16.mxu0 %v370
      %1087 = vmatpush1.bf16.msra.mxu0 %v369
      %1088 = vmatprep.subr.bf16.mxu0 %v366
      %1089 = vmatpush1.bf16.msra.mxu0 %v365
      %1090 = vmatprep.subr.bf16.mxu0 %v362
      %1091 = vmatpush1.bf16.msra.mxu0 %v361
      %1092 = vmatprep.subr.bf16.mxu0 %v358
      %1093 = vmatpush1.bf16.msra.mxu0 %v357
      %1094 = vmatprep.subr.bf16.mxu0 %v354
      %1095 = vmatpush1.bf16.msra.mxu0 %v353
      %1096 = vmatprep.subr.bf16.mxu0 0
      %1097 = vmatpush2.bf16.msra.mxu0 0
      %1098 = vmatprep.subr.bf16.mxu0 0
      %1099 = vmatpush2.bf16.msra.mxu0 0
      %1100 = vmatprep.subr.bf16.mxu0 0
      %1101 = vmatpush2.bf16.msra.mxu0 0
      %1102 = vmatprep.subr.bf16.mxu0 0
      %1103 = vmatpush2.bf16.msra.mxu0 0
      %1104 = vmatprep.subr.bf16.mxu0 0
      %1105 = vmatpush2.bf16.msra.mxu0 0
      %1106 = vmatprep.subr.bf16.mxu0 0
      %1107 = vmatpush2.bf16.msra.mxu0 0
      %1108 = vmatprep.subr.bf16.mxu0 0
      %1109 = vmatpush2.bf16.msra.mxu0 0
      %1110 = vmatprep.subr.bf16.mxu0 0
      %1111 = vmatpush2.bf16.msra.mxu0 0
      %1112 = vmatprep.mubr.bf16.mxu0 0
      %1113 = vmatmul.mubr.bf16.gmra.mxu0 %v1056
      %v1114 = vpop.f32.mrf.mxu0
      %v1115 = vadd.f32 0.0, %v1114
      %v1116 = vpop.f32.mrf.mxu0
      %v1117 = vadd.f32 0.0, %v1116
      %v1118 = vpop.f32.mrf.mxu0
      %v1119 = vadd.f32 0.0, %v1118
      %v1120 = vpop.f32.mrf.mxu0
      %v1121 = vadd.f32 0.0, %v1120
      %1122 = vdwg.mxu0
      %1123 = vmatprep.subr.bf16.mxu0 %v384
      %1124 = vmatpush1.bf16.msra.mxu0 %v383
      %1125 = vmatprep.subr.bf16.mxu0 %v380
      %1126 = vmatpush1.bf16.msra.mxu0 %v379
      %1127 = vmatprep.subr.bf16.mxu0 %v376
      %1128 = vmatpush1.bf16.msra.mxu0 %v375
      %1129 = vmatprep.subr.bf16.mxu0 %v372
      %1130 = vmatpush1.bf16.msra.mxu0 %v371
      %1131 = vmatprep.subr.bf16.mxu0 %v368
      %1132 = vmatpush1.bf16.msra.mxu0 %v367
      %1133 = vmatprep.subr.bf16.mxu0 %v364
      %1134 = vmatpush1.bf16.msra.mxu0 %v363
      %1135 = vmatprep.subr.bf16.mxu0 %v360
      %1136 = vmatpush1.bf16.msra.mxu0 %v359
      %1137 = vmatprep.subr.bf16.mxu0 %v356
      %1138 = vmatpush1.bf16.msra.mxu0 %v355
      %1139 = vmatprep.subr.bf16.mxu0 0
      %1140 = vmatpush2.bf16.msra.mxu0 0
      %1141 = vmatprep.subr.bf16.mxu0 0
      %1142 = vmatpush2.bf16.msra.mxu0 0
      %1143 = vmatprep.subr.bf16.mxu0 0
      %1144 = vmatpush2.bf16.msra.mxu0 0
      %1145 = vmatprep.subr.bf16.mxu0 0
      %1146 = vmatpush2.bf16.msra.mxu0 0
      %1147 = vmatprep.subr.bf16.mxu0 0
      %1148 = vmatpush2.bf16.msra.mxu0 0
      %1149 = vmatprep.subr.bf16.mxu0 0
      %1150 = vmatpush2.bf16.msra.mxu0 0
      %1151 = vmatprep.subr.bf16.mxu0 0
      %1152 = vmatpush2.bf16.msra.mxu0 0
      %1153 = vmatprep.subr.bf16.mxu0 0
      %1154 = vmatpush2.bf16.msra.mxu0 0
      %1155 = vmatprep.mubr.bf16.mxu0 0
      %1156 = vmatmul.mubr.bf16.gmra.mxu0 %v1056
      %v1157 = vpop.f32.mrf.mxu0
      %v1158 = vadd.f32 0.0, %v1157
      %v1159 = vpop.f32.mrf.mxu0
      %v1160 = vadd.f32 0.0, %v1159
      %v1161 = vpop.f32.mrf.mxu0
      %v1162 = vadd.f32 0.0, %v1161
      %v1163 = vpop.f32.mrf.mxu0
      %v1164 = vadd.f32 0.0, %v1163
      %1165 = vdwg.mxu0
      %v1166 = vadd.f32 %v1072, %v1115
      %v1167 = vadd.f32 %v1073, %v1117
      %v1168 = vadd.f32 %v1074, %v1158
      %v1169 = vadd.f32 %v1075, %v1160
      %v1170 = vadd.f32 %v1076, %v1119
      %v1171 = vadd.f32 %v1077, %v1121
      %v1172 = vadd.f32 %v1078, %v1162
      %v1173 = vadd.f32 %v1079, %v1164
      %v1174 = vxor.u32 %v1166, 2147483648
      %v1175 = vxor.u32 %v1170, 2147483648
      %v1176 = vmul.f32 %v1174, 1.442695
      %v1177 = vpow.pop %v1176
      %v1178 = vmul.f32 %v1175, 1.442695
      %v1179 = vpow.pop %v1178
      %v1180 = vadd.f32 %v1177, 1.0
      %v1181 = vadd.f32 %v1179, 1.0
      %v1182 = vrcp.pop %v1180
      %v1183 = vmul.f32 1.0, %v1182
      %v1184 = vrcp.pop %v1181
      %v1185 = vmul.f32 1.0, %v1184
      %v1186 = vxor.u32 %v1167, 2147483648
      %v1187 = vxor.u32 %v1171, 2147483648
      %v1188 = vmul.f32 %v1186, 1.442695
      %v1189 = vpow.pop %v1188
      %v1190 = vmul.f32 %v1187, 1.442695
      %v1191 = vpow.pop %v1190
      %v1192 = vadd.f32 %v1189, 1.0
      %v1193 = vadd.f32 %v1191, 1.0
      %v1194 = vrcp.pop %v1192
      %v1195 = vmul.f32 1.0, %v1194
      %v1196 = vrcp.pop %v1193
      %v1197 = vmul.f32 1.0, %v1196
      %v1198 = vtanh.pop %v1168
      %v1199 = vtanh.pop %v1172
      %v1200 = vxor.u32 %v1169, 2147483648
      %v1201 = vxor.u32 %v1173, 2147483648
      %v1202 = vmul.f32 %v1200, 1.442695
      %v1203 = vpow.pop %v1202
      %v1204 = vmul.f32 %v1201, 1.442695
      %v1205 = vpow.pop %v1204
      %v1206 = vadd.f32 %v1203, 1.0
      %v1207 = vadd.f32 %v1205, 1.0
      %v1208 = vrcp.pop %v1206
      %v1209 = vmul.f32 1.0, %v1208
      %v1210 = vrcp.pop %v1207
      %v1211 = vmul.f32 1.0, %v1210
      %v1212 = vmul.f32 %v1195, %v1050
      %v1213 = vmul.f32 %v1197, %v1051
      %v1214 = vmul.f32 %v1183, %v1198
      %v1215 = vmul.f32 %v1185, %v1199
      %v1216 = vadd.f32 %v1212, %v1214
      %v1217 = vadd.f32 %v1213, %v1215
      %v1218 = vtanh.pop %v1216
      %v1219 = vtanh.pop %v1217
      %v1220 = vmul.f32 %v1209, %v1218
      %v1221 = vmul.f32 %v1211, %v1219
      %v1222 = vpack.c.bf16 %v1221, %v1220
      %v1224 = vunpack.c.l.b16 %v1222
      %v1225 = vunpack.c.h.b16 %v1222
      %v1226 = vpack.c.b16 %v1224, %v1224
      %v1227 = vpack.c.b16 %v1225, %v1225
      %s1230 = scalar_lea.vmem %s191, 32
      %1231 = vst [vmem:[%s1230] sm:$0xf] %v1226
      %1232 = vst [vmem:[%s1230 + $0x4] sm:$0xf] %v1227
      %s1233 = scalar_lea.vmem %s179, 160
      %v1234 = vld [vmem:[%s1233] sm:$0xff]
      %v1235 = vld [vmem:[%s1233 + $0x8] sm:$0xff]
      %v1236 = vld [vmem:[%s1233 + $0x10] sm:$0xff]
      %v1237 = vld [vmem:[%s1233 + $0x18] sm:$0xff]
      %v1238 = vunpack.c.l.bf16 %v1234
      %v1239 = vunpack.c.h.bf16 %v1234
      %v1240 = vunpack.c.l.bf16 %v1235
      %v1241 = vunpack.c.h.bf16 %v1235
      %v1242 = vunpack.c.l.bf16 %v1236
      %v1243 = vunpack.c.h.bf16 %v1236
      %v1244 = vunpack.c.l.bf16 %v1237
      %v1245 = vunpack.c.h.bf16 %v1237
      %1246 = vmatprep.subr.bf16.mxu0 %v382
      %1247 = vmatpush1.bf16.msra.mxu0 %v381
      %1248 = vmatprep.subr.bf16.mxu0 %v378
      %1249 = vmatpush1.bf16.msra.mxu0 %v377
      %1250 = vmatprep.subr.bf16.mxu0 %v374
      %1251 = vmatpush1.bf16.msra.mxu0 %v373
      %1252 = vmatprep.subr.bf16.mxu0 %v370
      %1253 = vmatpush1.bf16.msra.mxu0 %v369
      %1254 = vmatprep.subr.bf16.mxu0 %v366
      %1255 = vmatpush1.bf16.msra.mxu0 %v365
      %1256 = vmatprep.subr.bf16.mxu0 %v362
      %1257 = vmatpush1.bf16.msra.mxu0 %v361
      %1258 = vmatprep.subr.bf16.mxu0 %v358
      %1259 = vmatpush1.bf16.msra.mxu0 %v357
      %1260 = vmatprep.subr.bf16.mxu0 %v354
      %1261 = vmatpush1.bf16.msra.mxu0 %v353
      %1262 = vmatprep.subr.bf16.mxu0 0
      %1263 = vmatpush2.bf16.msra.mxu0 0
      %1264 = vmatprep.subr.bf16.mxu0 0
      %1265 = vmatpush2.bf16.msra.mxu0 0
      %1266 = vmatprep.subr.bf16.mxu0 0
      %1267 = vmatpush2.bf16.msra.mxu0 0
      %1268 = vmatprep.subr.bf16.mxu0 0
      %1269 = vmatpush2.bf16.msra.mxu0 0
      %1270 = vmatprep.subr.bf16.mxu0 0
      %1271 = vmatpush2.bf16.msra.mxu0 0
      %1272 = vmatprep.subr.bf16.mxu0 0
      %1273 = vmatpush2.bf16.msra.mxu0 0
      %1274 = vmatprep.subr.bf16.mxu0 0
      %1275 = vmatpush2.bf16.msra.mxu0 0
      %1276 = vmatprep.subr.bf16.mxu0 0
      %1277 = vmatpush2.bf16.msra.mxu0 0
      %1278 = vmatprep.mubr.bf16.mxu0 0
      %1279 = vmatmul.mubr.bf16.gmra.mxu0 %v1222
      %v1280 = vpop.f32.mrf.mxu0
      %v1281 = vadd.f32 0.0, %v1280
      %v1282 = vpop.f32.mrf.mxu0
      %v1283 = vadd.f32 0.0, %v1282
      %v1284 = vpop.f32.mrf.mxu0
      %v1285 = vadd.f32 0.0, %v1284
      %v1286 = vpop.f32.mrf.mxu0
      %v1287 = vadd.f32 0.0, %v1286
      %1288 = vdwg.mxu0
      %1289 = vmatprep.subr.bf16.mxu0 %v384
      %1290 = vmatpush1.bf16.msra.mxu0 %v383
      %1291 = vmatprep.subr.bf16.mxu0 %v380
      %1292 = vmatpush1.bf16.msra.mxu0 %v379
      %1293 = vmatprep.subr.bf16.mxu0 %v376
      %1294 = vmatpush1.bf16.msra.mxu0 %v375
      %1295 = vmatprep.subr.bf16.mxu0 %v372
      %1296 = vmatpush1.bf16.msra.mxu0 %v371
      %1297 = vmatprep.subr.bf16.mxu0 %v368
      %1298 = vmatpush1.bf16.msra.mxu0 %v367
      %1299 = vmatprep.subr.bf16.mxu0 %v364
      %1300 = vmatpush1.bf16.msra.mxu0 %v363
      %1301 = vmatprep.subr.bf16.mxu0 %v360
      %1302 = vmatpush1.bf16.msra.mxu0 %v359
      %1303 = vmatprep.subr.bf16.mxu0 %v356
      %1304 = vmatpush1.bf16.msra.mxu0 %v355
      %1305 = vmatprep.subr.bf16.mxu0 0
      %1306 = vmatpush2.bf16.msra.mxu0 0
      %1307 = vmatprep.subr.bf16.mxu0 0
      %1308 = vmatpush2.bf16.msra.mxu0 0
      %1309 = vmatprep.subr.bf16.mxu0 0
      %1310 = vmatpush2.bf16.msra.mxu0 0
      %1311 = vmatprep.subr.bf16.mxu0 0
      %1312 = vmatpush2.bf16.msra.mxu0 0
      %1313 = vmatprep.subr.bf16.mxu0 0
      %1314 = vmatpush2.bf16.msra.mxu0 0
      %1315 = vmatprep.subr.bf16.mxu0 0
      %1316 = vmatpush2.bf16.msra.mxu0 0
      %1317 = vmatprep.subr.bf16.mxu0 0
      %1318 = vmatpush2.bf16.msra.mxu0 0
      %1319 = vmatprep.subr.bf16.mxu0 0
      %1320 = vmatpush2.bf16.msra.mxu0 0
      %1321 = vmatprep.mubr.bf16.mxu0 0
      %1322 = vmatmul.mubr.bf16.gmra.mxu0 %v1222
      %v1323 = vpop.f32.mrf.mxu0
      %v1324 = vadd.f32 0.0, %v1323
      %v1325 = vpop.f32.mrf.mxu0
      %v1326 = vadd.f32 0.0, %v1325
      %v1327 = vpop.f32.mrf.mxu0
      %v1328 = vadd.f32 0.0, %v1327
      %v1329 = vpop.f32.mrf.mxu0
      %v1330 = vadd.f32 0.0, %v1329
      %1331 = vdwg.mxu0
      %v1332 = vadd.f32 %v1238, %v1281
      %v1333 = vadd.f32 %v1239, %v1283
      %v1334 = vadd.f32 %v1240, %v1324
      %v1335 = vadd.f32 %v1241, %v1326
      %v1336 = vadd.f32 %v1242, %v1285
      %v1337 = vadd.f32 %v1243, %v1287
      %v1338 = vadd.f32 %v1244, %v1328
      %v1339 = vadd.f32 %v1245, %v1330
      %v1340 = vxor.u32 %v1332, 2147483648
      %v1341 = vxor.u32 %v1336, 2147483648
      %v1342 = vmul.f32 %v1340, 1.442695
      %v1343 = vpow.pop %v1342
      %v1344 = vmul.f32 %v1341, 1.442695
      %v1345 = vpow.pop %v1344
      %v1346 = vadd.f32 %v1343, 1.0
      %v1347 = vadd.f32 %v1345, 1.0
      %v1348 = vrcp.pop %v1346
      %v1349 = vmul.f32 1.0, %v1348
      %v1350 = vrcp.pop %v1347
      %v1351 = vmul.f32 1.0, %v1350
      %v1352 = vxor.u32 %v1333, 2147483648
      %v1353 = vxor.u32 %v1337, 2147483648
      %v1354 = vmul.f32 %v1352, 1.442695
      %v1355 = vpow.pop %v1354
      %v1356 = vmul.f32 %v1353, 1.442695
      %v1357 = vpow.pop %v1356
      %v1358 = vadd.f32 %v1355, 1.0
      %v1359 = vadd.f32 %v1357, 1.0
      %v1360 = vrcp.pop %v1358
      %v1361 = vmul.f32 1.0, %v1360
      %v1362 = vrcp.pop %v1359
      %v1363 = vmul.f32 1.0, %v1362
      %v1364 = vtanh.pop %v1334
      %v1365 = vtanh.pop %v1338
      %v1366 = vxor.u32 %v1335, 2147483648
      %v1367 = vxor.u32 %v1339, 2147483648
      %v1368 = vmul.f32 %v1366, 1.442695
      %v1369 = vpow.pop %v1368
      %v1370 = vmul.f32 %v1367, 1.442695
      %v1371 = vpow.pop %v1370
      %v1372 = vadd.f32 %v1369, 1.0
      %v1373 = vadd.f32 %v1371, 1.0
      %v1374 = vrcp.pop %v1372
      %v1375 = vmul.f32 1.0, %v1374
      %v1376 = vrcp.pop %v1373
      %v1377 = vmul.f32 1.0, %v1376
      %v1378 = vmul.f32 %v1361, %v1216
      %v1379 = vmul.f32 %v1363, %v1217
      %v1380 = vmul.f32 %v1349, %v1364
      %v1381 = vmul.f32 %v1351, %v1365
      %v1382 = vadd.f32 %v1378, %v1380
      %v1383 = vadd.f32 %v1379, %v1381
      %v1384 = vtanh.pop %v1382
      %v1385 = vtanh.pop %v1383
      %v1386 = vmul.f32 %v1375, %v1384
      %v1387 = vmul.f32 %v1377, %v1385
      %v1388 = vpack.c.bf16 %v1387, %v1386
      %v1390 = vunpack.c.l.b16 %v1388
      %v1391 = vunpack.c.h.b16 %v1388
      %v1392 = vpack.c.b16 %v1390, %v1390
      %v1393 = vpack.c.b16 %v1391, %v1391
      %s1396 = scalar_lea.vmem %s191, 40
      %1397 = vst [vmem:[%s1396] sm:$0xf] %v1392
      %1398 = vst [vmem:[%s1396 + $0x4] sm:$0xf] %v1393
      %s1399 = scalar_lea.vmem %s179, 192
      %v1400 = vld [vmem:[%s1399] sm:$0xff]
      %v1401 = vld [vmem:[%s1399 + $0x8] sm:$0xff]
      %v1402 = vld [vmem:[%s1399 + $0x10] sm:$0xff]
      %v1403 = vld [vmem:[%s1399 + $0x18] sm:$0xff]
      %v1404 = vunpack.c.l.bf16 %v1400
      %v1405 = vunpack.c.h.bf16 %v1400
      %v1406 = vunpack.c.l.bf16 %v1401
      %v1407 = vunpack.c.h.bf16 %v1401
      %v1408 = vunpack.c.l.bf16 %v1402
      %v1409 = vunpack.c.h.bf16 %v1402
      %v1410 = vunpack.c.l.bf16 %v1403
      %v1411 = vunpack.c.h.bf16 %v1403
      %1412 = vmatprep.subr.bf16.mxu0 %v382
      %1413 = vmatpush1.bf16.msra.mxu0 %v381
      %1414 = vmatprep.subr.bf16.mxu0 %v378
      %1415 = vmatpush1.bf16.msra.mxu0 %v377
      %1416 = vmatprep.subr.bf16.mxu0 %v374
      %1417 = vmatpush1.bf16.msra.mxu0 %v373
      %1418 = vmatprep.subr.bf16.mxu0 %v370
      %1419 = vmatpush1.bf16.msra.mxu0 %v369
      %1420 = vmatprep.subr.bf16.mxu0 %v366
      %1421 = vmatpush1.bf16.msra.mxu0 %v365
      %1422 = vmatprep.subr.bf16.mxu0 %v362
      %1423 = vmatpush1.bf16.msra.mxu0 %v361
      %1424 = vmatprep.subr.bf16.mxu0 %v358
      %1425 = vmatpush1.bf16.msra.mxu0 %v357
      %1426 = vmatprep.subr.bf16.mxu0 %v354
      %1427 = vmatpush1.bf16.msra.mxu0 %v353
      %1428 = vmatprep.subr.bf16.mxu0 0
      %1429 = vmatpush2.bf16.msra.mxu0 0
      %1430 = vmatprep.subr.bf16.mxu0 0
      %1431 = vmatpush2.bf16.msra.mxu0 0
      %1432 = vmatprep.subr.bf16.mxu0 0
      %1433 = vmatpush2.bf16.msra.mxu0 0
      %1434 = vmatprep.subr.bf16.mxu0 0
      %1435 = vmatpush2.bf16.msra.mxu0 0
      %1436 = vmatprep.subr.bf16.mxu0 0
      %1437 = vmatpush2.bf16.msra.mxu0 0
      %1438 = vmatprep.subr.bf16.mxu0 0
      %1439 = vmatpush2.bf16.msra.mxu0 0
      %1440 = vmatprep.subr.bf16.mxu0 0
      %1441 = vmatpush2.bf16.msra.mxu0 0
      %1442 = vmatprep.subr.bf16.mxu0 0
      %1443 = vmatpush2.bf16.msra.mxu0 0
      %1444 = vmatprep.mubr.bf16.mxu0 0
      %1445 = vmatmul.mubr.bf16.gmra.mxu0 %v1388
      %v1446 = vpop.f32.mrf.mxu0
      %v1447 = vadd.f32 0.0, %v1446
      %v1448 = vpop.f32.mrf.mxu0
      %v1449 = vadd.f32 0.0, %v1448
      %v1450 = vpop.f32.mrf.mxu0
      %v1451 = vadd.f32 0.0, %v1450
      %v1452 = vpop.f32.mrf.mxu0
      %v1453 = vadd.f32 0.0, %v1452
      %1454 = vdwg.mxu0
      %1455 = vmatprep.subr.bf16.mxu0 %v384
      %1456 = vmatpush1.bf16.msra.mxu0 %v383
      %1457 = vmatprep.subr.bf16.mxu0 %v380
      %1458 = vmatpush1.bf16.msra.mxu0 %v379
      %1459 = vmatprep.subr.bf16.mxu0 %v376
      %1460 = vmatpush1.bf16.msra.mxu0 %v375
      %1461 = vmatprep.subr.bf16.mxu0 %v372
      %1462 = vmatpush1.bf16.msra.mxu0 %v371
      %1463 = vmatprep.subr.bf16.mxu0 %v368
      %1464 = vmatpush1.bf16.msra.mxu0 %v367
      %1465 = vmatprep.subr.bf16.mxu0 %v364
      %1466 = vmatpush1.bf16.msra.mxu0 %v363
      %1467 = vmatprep.subr.bf16.mxu0 %v360
      %1468 = vmatpush1.bf16.msra.mxu0 %v359
      %1469 = vmatprep.subr.bf16.mxu0 %v356
      %1470 = vmatpush1.bf16.msra.mxu0 %v355
      %1471 = vmatprep.subr.bf16.mxu0 0
      %1472 = vmatpush2.bf16.msra.mxu0 0
      %1473 = vmatprep.subr.bf16.mxu0 0
      %1474 = vmatpush2.bf16.msra.mxu0 0
      %1475 = vmatprep.subr.bf16.mxu0 0
      %1476 = vmatpush2.bf16.msra.mxu0 0
      %1477 = vmatprep.subr.bf16.mxu0 0
      %1478 = vmatpush2.bf16.msra.mxu0 0
      %1479 = vmatprep.subr.bf16.mxu0 0
      %1480 = vmatpush2.bf16.msra.mxu0 0
      %1481 = vmatprep.subr.bf16.mxu0 0
      %1482 = vmatpush2.bf16.msra.mxu0 0
      %1483 = vmatprep.subr.bf16.mxu0 0
      %1484 = vmatpush2.bf16.msra.mxu0 0
      %1485 = vmatprep.subr.bf16.mxu0 0
      %1486 = vmatpush2.bf16.msra.mxu0 0
      %1487 = vmatprep.mubr.bf16.mxu0 0
      %1488 = vmatmul.mubr.bf16.gmra.mxu0 %v1388
      %v1489 = vpop.f32.mrf.mxu0
      %v1490 = vadd.f32 0.0, %v1489
      %v1491 = vpop.f32.mrf.mxu0
      %v1492 = vadd.f32 0.0, %v1491
      %v1493 = vpop.f32.mrf.mxu0
      %v1494 = vadd.f32 0.0, %v1493
      %v1495 = vpop.f32.mrf.mxu0
      %v1496 = vadd.f32 0.0, %v1495
      %1497 = vdwg.mxu0
      %v1498 = vadd.f32 %v1404, %v1447
      %v1499 = vadd.f32 %v1405, %v1449
      %v1500 = vadd.f32 %v1406, %v1490
      %v1501 = vadd.f32 %v1407, %v1492
      %v1502 = vadd.f32 %v1408, %v1451
      %v1503 = vadd.f32 %v1409, %v1453
      %v1504 = vadd.f32 %v1410, %v1494
      %v1505 = vadd.f32 %v1411, %v1496
      %v1506 = vxor.u32 %v1498, 2147483648
      %v1507 = vxor.u32 %v1502, 2147483648
      %v1508 = vmul.f32 %v1506, 1.442695
      %v1509 = vpow.pop %v1508
      %v1510 = vmul.f32 %v1507, 1.442695
      %v1511 = vpow.pop %v1510
      %v1512 = vadd.f32 %v1509, 1.0
      %v1513 = vadd.f32 %v1511, 1.0
      %v1514 = vrcp.pop %v1512
      %v1515 = vmul.f32 1.0, %v1514
      %v1516 = vrcp.pop %v1513
      %v1517 = vmul.f32 1.0, %v1516
      %v1518 = vxor.u32 %v1499, 2147483648
      %v1519 = vxor.u32 %v1503, 2147483648
      %v1520 = vmul.f32 %v1518, 1.442695
      %v1521 = vpow.pop %v1520
      %v1522 = vmul.f32 %v1519, 1.442695
      %v1523 = vpow.pop %v1522
      %v1524 = vadd.f32 %v1521, 1.0
      %v1525 = vadd.f32 %v1523, 1.0
      %v1526 = vrcp.pop %v1524
      %v1527 = vmul.f32 1.0, %v1526
      %v1528 = vrcp.pop %v1525
      %v1529 = vmul.f32 1.0, %v1528
      %v1530 = vtanh.pop %v1500
      %v1531 = vtanh.pop %v1504
      %v1532 = vxor.u32 %v1501, 2147483648
      %v1533 = vxor.u32 %v1505, 2147483648
      %v1534 = vmul.f32 %v1532, 1.442695
      %v1535 = vpow.pop %v1534
      %v1536 = vmul.f32 %v1533, 1.442695
      %v1537 = vpow.pop %v1536
      %v1538 = vadd.f32 %v1535, 1.0
      %v1539 = vadd.f32 %v1537, 1.0
      %v1540 = vrcp.pop %v1538
      %v1541 = vmul.f32 1.0, %v1540
      %v1542 = vrcp.pop %v1539
      %v1543 = vmul.f32 1.0, %v1542
      %v1544 = vmul.f32 %v1527, %v1382
      %v1545 = vmul.f32 %v1529, %v1383
      %v1546 = vmul.f32 %v1515, %v1530
      %v1547 = vmul.f32 %v1517, %v1531
      %v1548 = vadd.f32 %v1544, %v1546
      %v1549 = vadd.f32 %v1545, %v1547
      %v1550 = vtanh.pop %v1548
      %v1551 = vtanh.pop %v1549
      %v1552 = vmul.f32 %v1541, %v1550
      %v1553 = vmul.f32 %v1543, %v1551
      %v1554 = vpack.c.bf16 %v1553, %v1552
      %v1556 = vunpack.c.l.b16 %v1554
      %v1557 = vunpack.c.h.b16 %v1554
      %v1558 = vpack.c.b16 %v1556, %v1556
      %v1559 = vpack.c.b16 %v1557, %v1557
      %s1562 = scalar_lea.vmem %s191, 48
      %1563 = vst [vmem:[%s1562] sm:$0xf] %v1558
      %1564 = vst [vmem:[%s1562 + $0x4] sm:$0xf] %v1559
      %s1565 = scalar_lea.vmem %s179, 224
      %v1566 = vld [vmem:[%s1565] sm:$0xff]
      %v1567 = vld [vmem:[%s1565 + $0x8] sm:$0xff]
      %v1568 = vld [vmem:[%s1565 + $0x10] sm:$0xff]
      %v1569 = vld [vmem:[%s1565 + $0x18] sm:$0xff]
      %v1570 = vunpack.c.l.bf16 %v1566
      %v1571 = vunpack.c.h.bf16 %v1566
      %v1572 = vunpack.c.l.bf16 %v1567
      %v1573 = vunpack.c.h.bf16 %v1567
      %v1574 = vunpack.c.l.bf16 %v1568
      %v1575 = vunpack.c.h.bf16 %v1568
      %v1576 = vunpack.c.l.bf16 %v1569
      %v1577 = vunpack.c.h.bf16 %v1569
      %1578 = vmatprep.subr.bf16.mxu0 %v382
      %1579 = vmatpush1.bf16.msra.mxu0 %v381
      %1580 = vmatprep.subr.bf16.mxu0 %v378
      %1581 = vmatpush1.bf16.msra.mxu0 %v377
      %1582 = vmatprep.subr.bf16.mxu0 %v374
      %1583 = vmatpush1.bf16.msra.mxu0 %v373
      %1584 = vmatprep.subr.bf16.mxu0 %v370
      %1585 = vmatpush1.bf16.msra.mxu0 %v369
      %1586 = vmatprep.subr.bf16.mxu0 %v366
      %1587 = vmatpush1.bf16.msra.mxu0 %v365
      %1588 = vmatprep.subr.bf16.mxu0 %v362
      %1589 = vmatpush1.bf16.msra.mxu0 %v361
      %1590 = vmatprep.subr.bf16.mxu0 %v358
      %1591 = vmatpush1.bf16.msra.mxu0 %v357
      %1592 = vmatprep.subr.bf16.mxu0 %v354
      %1593 = vmatpush1.bf16.msra.mxu0 %v353
      %1594 = vmatprep.subr.bf16.mxu0 0
      %1595 = vmatpush2.bf16.msra.mxu0 0
      %1596 = vmatprep.subr.bf16.mxu0 0
      %1597 = vmatpush2.bf16.msra.mxu0 0
      %1598 = vmatprep.subr.bf16.mxu0 0
      %1599 = vmatpush2.bf16.msra.mxu0 0
      %1600 = vmatprep.subr.bf16.mxu0 0
      %1601 = vmatpush2.bf16.msra.mxu0 0
      %1602 = vmatprep.subr.bf16.mxu0 0
      %1603 = vmatpush2.bf16.msra.mxu0 0
      %1604 = vmatprep.subr.bf16.mxu0 0
      %1605 = vmatpush2.bf16.msra.mxu0 0
      %1606 = vmatprep.subr.bf16.mxu0 0
      %1607 = vmatpush2.bf16.msra.mxu0 0
      %1608 = vmatprep.subr.bf16.mxu0 0
      %1609 = vmatpush2.bf16.msra.mxu0 0
      %1610 = vmatprep.mubr.bf16.mxu0 0
      %1611 = vmatmul.mubr.bf16.gmra.mxu0 %v1554
      %v1612 = vpop.f32.mrf.mxu0
      %v1613 = vadd.f32 0.0, %v1612
      %v1614 = vpop.f32.mrf.mxu0
      %v1615 = vadd.f32 0.0, %v1614
      %v1616 = vpop.f32.mrf.mxu0
      %v1617 = vadd.f32 0.0, %v1616
      %v1618 = vpop.f32.mrf.mxu0
      %v1619 = vadd.f32 0.0, %v1618
      %1620 = vdwg.mxu0
      %1621 = vmatprep.subr.bf16.mxu0 %v384
      %1622 = vmatpush1.bf16.msra.mxu0 %v383
      %1623 = vmatprep.subr.bf16.mxu0 %v380
      %1624 = vmatpush1.bf16.msra.mxu0 %v379
      %1625 = vmatprep.subr.bf16.mxu0 %v376
      %1626 = vmatpush1.bf16.msra.mxu0 %v375
      %1627 = vmatprep.subr.bf16.mxu0 %v372
      %1628 = vmatpush1.bf16.msra.mxu0 %v371
      %1629 = vmatprep.subr.bf16.mxu0 %v368
      %1630 = vmatpush1.bf16.msra.mxu0 %v367
      %1631 = vmatprep.subr.bf16.mxu0 %v364
      %1632 = vmatpush1.bf16.msra.mxu0 %v363
      %1633 = vmatprep.subr.bf16.mxu0 %v360
      %1634 = vmatpush1.bf16.msra.mxu0 %v359
      %1635 = vmatprep.subr.bf16.mxu0 %v356
      %1636 = vmatpush1.bf16.msra.mxu0 %v355
      %1637 = vmatprep.subr.bf16.mxu0 0
      %1638 = vmatpush2.bf16.msra.mxu0 0
      %1639 = vmatprep.subr.bf16.mxu0 0
      %1640 = vmatpush2.bf16.msra.mxu0 0
      %1641 = vmatprep.subr.bf16.mxu0 0
      %1642 = vmatpush2.bf16.msra.mxu0 0
      %1643 = vmatprep.subr.bf16.mxu0 0
      %1644 = vmatpush2.bf16.msra.mxu0 0
      %1645 = vmatprep.subr.bf16.mxu0 0
      %1646 = vmatpush2.bf16.msra.mxu0 0
      %1647 = vmatprep.subr.bf16.mxu0 0
      %1648 = vmatpush2.bf16.msra.mxu0 0
      %1649 = vmatprep.subr.bf16.mxu0 0
      %1650 = vmatpush2.bf16.msra.mxu0 0
      %1651 = vmatprep.subr.bf16.mxu0 0
      %1652 = vmatpush2.bf16.msra.mxu0 0
      %1653 = vmatprep.mubr.bf16.mxu0 0
      %1654 = vmatmul.mubr.bf16.gmra.mxu0 %v1554
      %v1655 = vpop.f32.mrf.mxu0
      %v1656 = vadd.f32 0.0, %v1655
      %v1657 = vpop.f32.mrf.mxu0
      %v1658 = vadd.f32 0.0, %v1657
      %v1659 = vpop.f32.mrf.mxu0
      %v1660 = vadd.f32 0.0, %v1659
      %v1661 = vpop.f32.mrf.mxu0
      %v1662 = vadd.f32 0.0, %v1661
      %1663 = vdwg.mxu0
      %v1664 = vadd.f32 %v1570, %v1613
      %v1665 = vadd.f32 %v1571, %v1615
      %v1666 = vadd.f32 %v1572, %v1656
      %v1667 = vadd.f32 %v1573, %v1658
      %v1668 = vadd.f32 %v1574, %v1617
      %v1669 = vadd.f32 %v1575, %v1619
      %v1670 = vadd.f32 %v1576, %v1660
      %v1671 = vadd.f32 %v1577, %v1662
      %v1672 = vxor.u32 %v1664, 2147483648
      %v1673 = vxor.u32 %v1668, 2147483648
      %v1674 = vmul.f32 %v1672, 1.442695
      %v1675 = vpow.pop %v1674
      %v1676 = vmul.f32 %v1673, 1.442695
      %v1677 = vpow.pop %v1676
      %v1678 = vadd.f32 %v1675, 1.0
      %v1679 = vadd.f32 %v1677, 1.0
      %v1680 = vrcp.pop %v1678
      %v1681 = vmul.f32 1.0, %v1680
      %v1682 = vrcp.pop %v1679
      %v1683 = vmul.f32 1.0, %v1682
      %v1684 = vxor.u32 %v1665, 2147483648
      %v1685 = vxor.u32 %v1669, 2147483648
      %v1686 = vmul.f32 %v1684, 1.442695
      %v1687 = vpow.pop %v1686
      %v1688 = vmul.f32 %v1685, 1.442695
      %v1689 = vpow.pop %v1688
      %v1690 = vadd.f32 %v1687, 1.0
      %v1691 = vadd.f32 %v1689, 1.0
      %v1692 = vrcp.pop %v1690
      %v1693 = vmul.f32 1.0, %v1692
      %v1694 = vrcp.pop %v1691
      %v1695 = vmul.f32 1.0, %v1694
      %v1696 = vtanh.pop %v1666
      %v1697 = vtanh.pop %v1670
      %v1698 = vxor.u32 %v1667, 2147483648
      %v1699 = vxor.u32 %v1671, 2147483648
      %v1700 = vmul.f32 %v1698, 1.442695
      %v1701 = vpow.pop %v1700
      %v1702 = vmul.f32 %v1699, 1.442695
      %v1703 = vpow.pop %v1702
      %v1704 = vadd.f32 %v1701, 1.0
      %v1705 = vadd.f32 %v1703, 1.0
      %v1706 = vrcp.pop %v1704
      %v1707 = vmul.f32 1.0, %v1706
      %v1708 = vrcp.pop %v1705
      %v1709 = vmul.f32 1.0, %v1708
      %v1710 = vmul.f32 %v1693, %v1548
      %v1711 = vmul.f32 %v1695, %v1549
      %v1712 = vmul.f32 %v1681, %v1696
      %v1713 = vmul.f32 %v1683, %v1697
      %v1714 = vadd.f32 %v1710, %v1712
      %v1715 = vadd.f32 %v1711, %v1713
      %v1716 = vtanh.pop %v1714
      %v1717 = vtanh.pop %v1715
      %v1718 = vmul.f32 %v1707, %v1716
      %v1719 = vmul.f32 %v1709, %v1717
      %v1720 = vpack.c.bf16 %v1719, %v1718
      %v1722 = vunpack.c.l.b16 %v1720
      %v1723 = vunpack.c.h.b16 %v1720
      %v1724 = vpack.c.b16 %v1722, %v1722
      %v1725 = vpack.c.b16 %v1723, %v1723
      %s1728 = scalar_lea.vmem %s191, 56
      %1729 = vst [vmem:[%s1728] sm:$0xf] %v1724
      %1730 = vst [vmem:[%s1728 + $0x4] sm:$0xf] %v1725
      %1731 = vst [vmem:[#allocation2] sm:$0xf] %v1724
      %1732 = vst [vmem:[#allocation2 + $0x4] sm:$0xf] %v1725
      %1733 = vst [vmem:[#allocation3] sm:$0xff] %v1714
      %1734 = vst [vmem:[#allocation3 + $0x8] sm:$0xff] %v1715
      %s1735 = smul.u32 8, %s18
      %s1736 = smul.u32 2, %s17
      %p1737 = scmp.lt.s32.totalorder %s1735, 15
      %s1738 = scalar_select %p1737, %s1735, 15
      %p1739 = scmp.lt.s32.totalorder %s1736, 1
      %s1740 = scalar_select %p1739, %s1736, 1
      %s1741 = smul.addr %s1738, 2
      %s1742 = sadd.s32 %s1740, %s1741
      %s1743 = smul.addr %s1742, 4
      %s1744 = scalar_lea.vmem %s2, %s1743
      // Predicated region
      $region33: #{image_captioning_forward.4} parent=27 // pred_check
        %p1745 = pneg %p94
      $region34: #{image_captioning_forward.4} parent=27 // pred_check_branch
        %1747 = sbr.rel (%p1745) target = $region36
      $region35: #{image_captioning_forward.4} parent=27 // pred_region
        %s1748 = smul.u32 8, %s18
        %s1749 = smul.u32 2, %s17
      $region36: #{image_captioning_forward.4} parent=27 // pred_fallthru
        _
    $region28: #{image_captioning_forward.4} parent=5 // pred_fallthru
      _
    %p1750 = scmp.le.s32.totalorder 2, %s8
    // Predicated region
    $region37: #{image_captioning_forward.4} parent=5 // pred_check
      %p1751 = pneg %p1750
    $region38: #{image_captioning_forward.4} parent=5 // pred_check_branch
      %1753 = sbr.rel (%p1751) target = $region40
    $region39: #{image_captioning_forward.4} parent=5 // pred_region
      %s1754 = ssub.s32 %s8, 2
      // Predicated region
      $region41: #{image_captioning_forward.4} parent=39 // pred_check
        %p1755 = pneg %p100
      $region42: #{image_captioning_forward.4} parent=39 // pred_check_branch
        %1757 = sbr.rel (%p1755) target = $region44
      $region43: #{image_captioning_forward.4} parent=39 // pred_region
        %s1758 = smul.u32 8, %s20
        %s1759 = smul.u32 2, %s19
        %p1760 = scmp.lt.s32.totalorder %s1758, 15
        %s1761 = scalar_select %p1760, %s1758, 15
        %p1762 = scmp.lt.s32.totalorder %s1759, 1
        %s1763 = scalar_select %p1762, %s1759, 1
        %s1764 = smul.addr %s1761, 2
        %s1765 = sadd.s32 %s1763, %s1764
        %s1766 = smul.addr %s1765, 4
        %s1767 = scalar_lea.vmem %s2, %s1766
      $region44: #{image_captioning_forward.4} parent=39 // pred_fallthru
        _
    $region40: #{image_captioning_forward.4} parent=5 // pred_fallthru
      _
  $region6: #{image_captioning_forward.4} parent=0 // loop_footer
    %s12 = sadd.s32 1, %s8
  $region7: #{image_captioning_forward.4} parent=0 // loop_footer_branch
    %7 = sbr.rel target = $region3
  $region8: #{image_captioning_forward.4} parent=0 // loop_exit
    _

// kernel: image_captioning_forward.5
$region0: #{image_captioning_forward.5}
  #allocation0 [shape = 'u32[]', space=smem, size = 0x4, offset = 0x4, fixed_abs, tag = 'smem constant byte address 0x4 - core index']
  #allocation1 [shape = 'u32[144,128]{1,0:T(1,128)}', space=vmem, size = 0x12000, scoped, tag = 'internal scratch']
  %s0 = inlined_call_operand.vmem [shape: bf16[144,128], index: 0, kind: input, shape index: {}]
  %s1 = inlined_call_operand.vmem [shape: bf16[128,1024], index: 1, kind: input, shape index: {}]
  %s2 = inlined_call_operand.vmem [shape: f32[1,1024], index: 2, kind: input, shape index: {}]
  %s3 = inlined_call_operand.vmem [shape: f32[144,1024], index: 3, kind: output, shape index: {}]
  %s4 = sld [smem:[#allocation0]]
  $region22: #{image_captioning_forward.5} parent=0
    _
  %s6 = ssub.s32 1, %s4
  %s7 = scalar_select 0, %s6, %s4
  // Predicated region
  $region2: #{image_captioning_forward.5} parent=0 // pred_check
    _
  $region3: #{image_captioning_forward.5} parent=0 // pred_check_branch
    %9 = sbr.rel (0) target = $region5
  $region4: #{image_captioning_forward.5} parent=0 // pred_region
    _
  $region5: #{image_captioning_forward.5} parent=0 // pred_fallthru
    _
  // Predicated region
  $region6: #{image_captioning_forward.5} parent=0 // pred_check
    _
  $region7: #{image_captioning_forward.5} parent=0 // pred_check_branch
    %11 = sbr.rel (0) target = $region9
  $region8: #{image_captioning_forward.5} parent=0 // pred_region
    _
  $region9: #{image_captioning_forward.5} parent=0 // pred_fallthru
    _
  // Predicated region
  $region10: #{image_captioning_forward.5} parent=0 // pred_check
    _
  $region11: #{image_captioning_forward.5} parent=0 // pred_check_branch
    %13 = sbr.rel (0) target = $region13
  $region12: #{image_captioning_forward.5} parent=0 // pred_region
    _
  $region13: #{image_captioning_forward.5} parent=0 // pred_fallthru
    _
  %v15 = vld [vmem:[%s0] sm:$0xf]
  %v16 = vld [vmem:[%s0 + $0x4] sm:$0xf]
  %v17 = vld [vmem:[%s0 + $0x8] sm:$0xf]
  %v18 = vld [vmem:[%s0 + $0xc] sm:$0xf]
  %v19 = vld [vmem:[%s0 + $0x10] sm:$0xf]
  %v20 = vld [vmem:[%s0 + $0x14] sm:$0xf]
  %v21 = vld [vmem:[%s0 + $0x18] sm:$0xf]
  %v22 = vld [vmem:[%s0 + $0x1c] sm:$0xf]
  %v23 = vld [vmem:[%s0 + $0x20] sm:$0xf]
  %v24 = vld [vmem:[%s0 + $0x24] sm:$0xf]
  %v25 = vld [vmem:[%s0 + $0x28] sm:$0xf]
  %v26 = vld [vmem:[%s0 + $0x2c] sm:$0xf]
  %v27 = vld [vmem:[%s0 + $0x30] sm:$0xf]
  %v28 = vld [vmem:[%s0 + $0x34] sm:$0xf]
  %v29 = vld [vmem:[%s0 + $0x38] sm:$0xf]
  %v30 = vld [vmem:[%s0 + $0x3c] sm:$0xf]
  %v31 = vld [vmem:[%s0 + $0x40] sm:$0xf]
  %v32 = vld [vmem:[%s0 + $0x44] sm:$0xf]
  %v33 = vld [vmem:[%s1] sm:$0xff]
  %v34 = vld [vmem:[%s1 + $0x8] sm:$0xff]
  %v35 = vld [vmem:[%s1 + $0x10] sm:$0xff]
  %v36 = vld [vmem:[%s1 + $0x18] sm:$0xff]
  %v37 = vld [vmem:[%s1 + $0x20] sm:$0xff]
  %v38 = vld [vmem:[%s1 + $0x28] sm:$0xff]
  %v39 = vld [vmem:[%s1 + $0x30] sm:$0xff]
  %v40 = vld [vmem:[%s1 + $0x38] sm:$0xff]
  %v41 = vld [vmem:[%s1 + $0x40] sm:$0xff]
  %v42 = vld [vmem:[%s1 + $0x48] sm:$0xff]
  %v43 = vld [vmem:[%s1 + $0x50] sm:$0xff]
  %v44 = vld [vmem:[%s1 + $0x58] sm:$0xff]
  %v45 = vld [vmem:[%s1 + $0x60] sm:$0xff]
  %v46 = vld [vmem:[%s1 + $0x68] sm:$0xff]
  %v47 = vld [vmem:[%s1 + $0x70] sm:$0xff]
  %v48 = vld [vmem:[%s1 + $0x78] sm:$0xff]
  %v49 = vld [vmem:[%s1 + $0x80] sm:$0xff]
  %v50 = vld [vmem:[%s1 + $0x88] sm:$0xff]
  %v51 = vld [vmem:[%s1 + $0x90] sm:$0xff]
  %v52 = vld [vmem:[%s1 + $0x98] sm:$0xff]
  %v53 = vld [vmem:[%s1 + $0xa0] sm:$0xff]
  %v54 = vld [vmem:[%s1 + $0xa8] sm:$0xff]
  %v55 = vld [vmem:[%s1 + $0xb0] sm:$0xff]
  %v56 = vld [vmem:[%s1 + $0xb8] sm:$0xff]
  %v57 = vld [vmem:[%s1 + $0xc0] sm:$0xff]
  %v58 = vld [vmem:[%s1 + $0xc8] sm:$0xff]
  %v59 = vld [vmem:[%s1 + $0xd0] sm:$0xff]
  %v60 = vld [vmem:[%s1 + $0xd8] sm:$0xff]
  %v61 = vld [vmem:[%s1 + $0xe0] sm:$0xff]
  %v62 = vld [vmem:[%s1 + $0xe8] sm:$0xff]
  %v63 = vld [vmem:[%s1 + $0xf0] sm:$0xff]
  %v64 = vld [vmem:[%s1 + $0xf8] sm:$0xff]
  %v65 = vld [vmem:[%s1 + $0x100] sm:$0xff]
  %v66 = vld [vmem:[%s1 + $0x108] sm:$0xff]
  %v67 = vld [vmem:[%s1 + $0x110] sm:$0xff]
  %v68 = vld [vmem:[%s1 + $0x118] sm:$0xff]
  %v69 = vld [vmem:[%s1 + $0x120] sm:$0xff]
  %v70 = vld [vmem:[%s1 + $0x128] sm:$0xff]
  %v71 = vld [vmem:[%s1 + $0x130] sm:$0xff]
  %v72 = vld [vmem:[%s1 + $0x138] sm:$0xff]
  %v73 = vld [vmem:[%s1 + $0x140] sm:$0xff]
  %v74 = vld [vmem:[%s1 + $0x148] sm:$0xff]
  %v75 = vld [vmem:[%s1 + $0x150] sm:$0xff]
  %v76 = vld [vmem:[%s1 + $0x158] sm:$0xff]
  %v77 = vld [vmem:[%s1 + $0x160] sm:$0xff]
  %v78 = vld [vmem:[%s1 + $0x168] sm:$0xff]
  %v79 = vld [vmem:[%s1 + $0x170] sm:$0xff]
  %v80 = vld [vmem:[%s1 + $0x178] sm:$0xff]
  %v81 = vld [vmem:[%s1 + $0x180] sm:$0xff]
  %v82 = vld [vmem:[%s1 + $0x188] sm:$0xff]
  %v83 = vld [vmem:[%s1 + $0x190] sm:$0xff]
  %v84 = vld [vmem:[%s1 + $0x198] sm:$0xff]
  %v85 = vld [vmem:[%s1 + $0x1a0] sm:$0xff]
  %v86 = vld [vmem:[%s1 + $0x1a8] sm:$0xff]
  %v87 = vld [vmem:[%s1 + $0x1b0] sm:$0xff]
  %v88 = vld [vmem:[%s1 + $0x1b8] sm:$0xff]
  %v89 = vld [vmem:[%s1 + $0x1c0] sm:$0xff]
  %v90 = vld [vmem:[%s1 + $0x1c8] sm:$0xff]
  %v91 = vld [vmem:[%s1 + $0x1d0] sm:$0xff]
  %v92 = vld [vmem:[%s1 + $0x1d8] sm:$0xff]
  %v93 = vld [vmem:[%s1 + $0x1e0] sm:$0xff]
  %v94 = vld [vmem:[%s1 + $0x1e8] sm:$0xff]
  %v95 = vld [vmem:[%s1 + $0x1f0] sm:$0xff]
  %v96 = vld [vmem:[%s1 + $0x1f8] sm:$0xff]
  %v97 = vld [vmem:[%s2] sm:$0xff]
  %v99 = vlaneseq
  %v100 = vshrl.u32 %v99, 7
  %v101 = vsub.s32 0, %v100
  %v102 = vrot.slane %v97, %v101
  %v103 = vlaneseq
  %v104 = vshrl.u32 %v103, 7
  %v105 = vsub.s32 1, %v104
  %v106 = vrot.slane %v97, %v105
  %v107 = vlaneseq
  %v108 = vshrl.u32 %v107, 7
  %v109 = vsub.s32 2, %v108
  %v110 = vrot.slane %v97, %v109
  %v111 = vlaneseq
  %v112 = vshrl.u32 %v111, 7
  %v113 = vsub.s32 3, %v112
  %v114 = vrot.slane %v97, %v113
  %v115 = vlaneseq
  %v116 = vshrl.u32 %v115, 7
  %v117 = vsub.s32 4, %v116
  %v118 = vrot.slane %v97, %v117
  %v119 = vlaneseq
  %v120 = vshrl.u32 %v119, 7
  %v121 = vsub.s32 5, %v120
  %v122 = vrot.slane %v97, %v121
  %v123 = vlaneseq
  %v124 = vshrl.u32 %v123, 7
  %v125 = vsub.s32 6, %v124
  %v126 = vrot.slane %v97, %v125
  %v127 = vlaneseq
  %v128 = vshrl.u32 %v127, 7
  %v129 = vsub.s32 7, %v128
  %v130 = vrot.slane %v97, %v129
  %v157 = vunpack.c.l.b16 %v15
  %v158 = vunpack.c.l.b16 %v16
  %v159 = vunpack.c.l.b16 %v17
  %v160 = vunpack.c.l.b16 %v18
  %v161 = vunpack.c.l.b16 %v19
  %v162 = vunpack.c.l.b16 %v20
  %v163 = vunpack.c.l.b16 %v21
  %v164 = vunpack.c.l.b16 %v22
  %v165 = vunpack.c.l.b16 %v23
  %v166 = vunpack.c.l.b16 %v24
  %v167 = vunpack.c.l.b16 %v25
  %v168 = vunpack.c.l.b16 %v26
  %v169 = vunpack.c.l.b16 %v27
  %v170 = vunpack.c.l.b16 %v28
  %v171 = vunpack.c.l.b16 %v29
  %v172 = vunpack.c.l.b16 %v30
  %v173 = vunpack.c.l.b16 %v31
  %v174 = vunpack.c.l.b16 %v32
  %v175 = vpack.c.b16 %v158, %v157
  %v176 = vpack.c.b16 %v160, %v159
  %v177 = vpack.c.b16 %v162, %v161
  %v178 = vpack.c.b16 %v164, %v163
  %v179 = vpack.c.b16 %v166, %v165
  %v180 = vpack.c.b16 %v168, %v167
  %v181 = vpack.c.b16 %v170, %v169
  %v182 = vpack.c.b16 %v172, %v171
  %v183 = vpack.c.b16 %v174, %v173
  %v257 = vunpack.c.l.b16 %v33
  %v258 = vunpack.c.h.b16 %v33
  %v259 = vunpack.c.l.b16 %v34
  %v260 = vunpack.c.h.b16 %v34
  %v261 = vunpack.c.l.b16 %v35
  %v262 = vunpack.c.h.b16 %v35
  %v263 = vunpack.c.l.b16 %v36
  %v264 = vunpack.c.h.b16 %v36
  %v265 = vunpack.c.l.b16 %v37
  %v266 = vunpack.c.h.b16 %v37
  %v267 = vunpack.c.l.b16 %v38
  %v268 = vunpack.c.h.b16 %v38
  %v269 = vunpack.c.l.b16 %v39
  %v270 = vunpack.c.h.b16 %v39
  %v271 = vunpack.c.l.b16 %v40
  %v272 = vunpack.c.h.b16 %v40
  %v273 = vunpack.c.l.b16 %v41
  %v274 = vunpack.c.h.b16 %v41
  %v275 = vunpack.c.l.b16 %v42
  %v276 = vunpack.c.h.b16 %v42
  %v277 = vunpack.c.l.b16 %v43
  %v278 = vunpack.c.h.b16 %v43
  %v279 = vunpack.c.l.b16 %v44
  %v280 = vunpack.c.h.b16 %v44
  %v281 = vunpack.c.l.b16 %v45
  %v282 = vunpack.c.h.b16 %v45
  %v283 = vunpack.c.l.b16 %v46
  %v284 = vunpack.c.h.b16 %v46
  %v285 = vunpack.c.l.b16 %v47
  %v286 = vunpack.c.h.b16 %v47
  %v287 = vunpack.c.l.b16 %v48
  %v288 = vunpack.c.h.b16 %v48
  %v289 = vunpack.c.l.b16 %v49
  %v290 = vunpack.c.h.b16 %v49
  %v291 = vunpack.c.l.b16 %v50
  %v292 = vunpack.c.h.b16 %v50
  %v293 = vunpack.c.l.b16 %v51
  %v294 = vunpack.c.h.b16 %v51
  %v295 = vunpack.c.l.b16 %v52
  %v296 = vunpack.c.h.b16 %v52
  %v297 = vunpack.c.l.b16 %v53
  %v298 = vunpack.c.h.b16 %v53
  %v299 = vunpack.c.l.b16 %v54
  %v300 = vunpack.c.h.b16 %v54
  %v301 = vunpack.c.l.b16 %v55
  %v302 = vunpack.c.h.b16 %v55
  %v303 = vunpack.c.l.b16 %v56
  %v304 = vunpack.c.h.b16 %v56
  %v305 = vunpack.c.l.b16 %v57
  %v306 = vunpack.c.h.b16 %v57
  %v307 = vunpack.c.l.b16 %v58
  %v308 = vunpack.c.h.b16 %v58
  %v309 = vunpack.c.l.b16 %v59
  %v310 = vunpack.c.h.b16 %v59
  %v311 = vunpack.c.l.b16 %v60
  %v312 = vunpack.c.h.b16 %v60
  %v313 = vunpack.c.l.b16 %v61
  %v314 = vunpack.c.h.b16 %v61
  %v315 = vunpack.c.l.b16 %v62
  %v316 = vunpack.c.h.b16 %v62
  %v317 = vunpack.c.l.b16 %v63
  %v318 = vunpack.c.h.b16 %v63
  %v319 = vunpack.c.l.b16 %v64
  %v320 = vunpack.c.h.b16 %v64
  %v321 = vunpack.c.l.b16 %v65
  %v322 = vunpack.c.h.b16 %v65
  %v323 = vunpack.c.l.b16 %v66
  %v324 = vunpack.c.h.b16 %v66
  %v325 = vunpack.c.l.b16 %v67
  %v326 = vunpack.c.h.b16 %v67
  %v327 = vunpack.c.l.b16 %v68
  %v328 = vunpack.c.h.b16 %v68
  %v329 = vunpack.c.l.b16 %v69
  %v330 = vunpack.c.h.b16 %v69
  %v331 = vunpack.c.l.b16 %v70
  %v332 = vunpack.c.h.b16 %v70
  %v333 = vunpack.c.l.b16 %v71
  %v334 = vunpack.c.h.b16 %v71
  %v335 = vunpack.c.l.b16 %v72
  %v336 = vunpack.c.h.b16 %v72
  %v337 = vunpack.c.l.b16 %v73
  %v338 = vunpack.c.h.b16 %v73
  %v339 = vunpack.c.l.b16 %v74
  %v340 = vunpack.c.h.b16 %v74
  %v341 = vunpack.c.l.b16 %v75
  %v342 = vunpack.c.h.b16 %v75
  %v343 = vunpack.c.l.b16 %v76
  %v344 = vunpack.c.h.b16 %v76
  %v345 = vunpack.c.l.b16 %v77
  %v346 = vunpack.c.h.b16 %v77
  %v347 = vunpack.c.l.b16 %v78
  %v348 = vunpack.c.h.b16 %v78
  %v349 = vunpack.c.l.b16 %v79
  %v350 = vunpack.c.h.b16 %v79
  %v351 = vunpack.c.l.b16 %v80
  %v352 = vunpack.c.h.b16 %v80
  %v353 = vunpack.c.l.b16 %v81
  %v354 = vunpack.c.h.b16 %v81
  %v355 = vunpack.c.l.b16 %v82
  %v356 = vunpack.c.h.b16 %v82
  %v357 = vunpack.c.l.b16 %v83
  %v358 = vunpack.c.h.b16 %v83
  %v359 = vunpack.c.l.b16 %v84
  %v360 = vunpack.c.h.b16 %v84
  %v361 = vunpack.c.l.b16 %v85
  %v362 = vunpack.c.h.b16 %v85
  %v363 = vunpack.c.l.b16 %v86
  %v364 = vunpack.c.h.b16 %v86
  %v365 = vunpack.c.l.b16 %v87
  %v366 = vunpack.c.h.b16 %v87
  %v367 = vunpack.c.l.b16 %v88
  %v368 = vunpack.c.h.b16 %v88
  %v369 = vunpack.c.l.b16 %v89
  %v370 = vunpack.c.h.b16 %v89
  %v371 = vunpack.c.l.b16 %v90
  %v372 = vunpack.c.h.b16 %v90
  %v373 = vunpack.c.l.b16 %v91
  %v374 = vunpack.c.h.b16 %v91
  %v375 = vunpack.c.l.b16 %v92
  %v376 = vunpack.c.h.b16 %v92
  %v377 = vunpack.c.l.b16 %v93
  %v378 = vunpack.c.h.b16 %v93
  %v379 = vunpack.c.l.b16 %v94
  %v380 = vunpack.c.h.b16 %v94
  %v381 = vunpack.c.l.b16 %v95
  %v382 = vunpack.c.h.b16 %v95
  %v383 = vunpack.c.l.b16 %v96
  %v384 = vunpack.c.h.b16 %v96
  %v385 = vpack.c.b16 %v265, %v257
  %v386 = vpack.c.b16 %v266, %v258
  %v387 = vpack.c.b16 %v267, %v259
  %v388 = vpack.c.b16 %v268, %v260
  %v389 = vpack.c.b16 %v269, %v261
  %v390 = vpack.c.b16 %v270, %v262
  %v391 = vpack.c.b16 %v271, %v263
  %v392 = vpack.c.b16 %v272, %v264
  %v393 = vpack.c.b16 %v281, %v273
  %v394 = vpack.c.b16 %v282, %v274
  %v395 = vpack.c.b16 %v283, %v275
  %v396 = vpack.c.b16 %v284, %v276
  %v397 = vpack.c.b16 %v285, %v277
  %v398 = vpack.c.b16 %v286, %v278
  %v399 = vpack.c.b16 %v287, %v279
  %v400 = vpack.c.b16 %v288, %v280
  %v401 = vpack.c.b16 %v297, %v289
  %v402 = vpack.c.b16 %v298, %v290
  %v403 = vpack.c.b16 %v299, %v291
  %v404 = vpack.c.b16 %v300, %v292
  %v405 = vpack.c.b16 %v301, %v293
  %v406 = vpack.c.b16 %v302, %v294
  %v407 = vpack.c.b16 %v303, %v295
  %v408 = vpack.c.b16 %v304, %v296
  %v409 = vpack.c.b16 %v313, %v305
  %v410 = vpack.c.b16 %v314, %v306
  %v411 = vpack.c.b16 %v315, %v307
  %v412 = vpack.c.b16 %v316, %v308
  %v413 = vpack.c.b16 %v317, %v309
  %v414 = vpack.c.b16 %v318, %v310
  %v415 = vpack.c.b16 %v319, %v311
  %v416 = vpack.c.b16 %v320, %v312
  %v417 = vpack.c.b16 %v329, %v321
  %v418 = vpack.c.b16 %v330, %v322
  %v419 = vpack.c.b16 %v331, %v323
  %v420 = vpack.c.b16 %v332, %v324
  %v421 = vpack.c.b16 %v333, %v325
  %v422 = vpack.c.b16 %v334, %v326
  %v423 = vpack.c.b16 %v335, %v327
  %v424 = vpack.c.b16 %v336, %v328
  %v425 = vpack.c.b16 %v345, %v337
  %v426 = vpack.c.b16 %v346, %v338
  %v427 = vpack.c.b16 %v347, %v339
  %v428 = vpack.c.b16 %v348, %v340
  %v429 = vpack.c.b16 %v349, %v341
  %v430 = vpack.c.b16 %v350, %v342
  %v431 = vpack.c.b16 %v351, %v343
  %v432 = vpack.c.b16 %v352, %v344
  %v433 = vpack.c.b16 %v361, %v353
  %v434 = vpack.c.b16 %v362, %v354
  %v435 = vpack.c.b16 %v363, %v355
  %v436 = vpack.c.b16 %v364, %v356
  %v437 = vpack.c.b16 %v365, %v357
  %v438 = vpack.c.b16 %v366, %v358
  %v439 = vpack.c.b16 %v367, %v359
  %v440 = vpack.c.b16 %v368, %v360
  %v441 = vpack.c.b16 %v377, %v369
  %v442 = vpack.c.b16 %v378, %v370
  %v443 = vpack.c.b16 %v379, %v371
  %v444 = vpack.c.b16 %v380, %v372
  %v445 = vpack.c.b16 %v381, %v373
  %v446 = vpack.c.b16 %v382, %v374
  %v447 = vpack.c.b16 %v383, %v375
  %v448 = vpack.c.b16 %v384, %v376
  %513 = vmatprep.subr.bf16.mxu0 %v442
  %514 = vmatpush1.bf16.msra.mxu0 %v441
  %515 = vmatprep.subr.bf16.mxu0 %v434
  %516 = vmatpush1.bf16.msra.mxu0 %v433
  %517 = vmatprep.subr.bf16.mxu0 %v426
  %518 = vmatpush1.bf16.msra.mxu0 %v425
  %519 = vmatprep.subr.bf16.mxu0 %v418
  %520 = vmatpush1.bf16.msra.mxu0 %v417
  %521 = vmatprep.subr.bf16.mxu0 %v410
  %522 = vmatpush1.bf16.msra.mxu0 %v409
  %523 = vmatprep.subr.bf16.mxu0 %v402
  %524 = vmatpush1.bf16.msra.mxu0 %v401
  %525 = vmatprep.subr.bf16.mxu0 %v394
  %526 = vmatpush1.bf16.msra.mxu0 %v393
  %527 = vmatprep.subr.bf16.mxu0 %v386
  %528 = vmatpush1.bf16.msra.mxu0 %v385
  %529 = vmatprep.subr.bf16.mxu0 0
  %530 = vmatpush2.bf16.msra.mxu0 0
  %531 = vmatprep.subr.bf16.mxu0 0
  %532 = vmatpush2.bf16.msra.mxu0 0
  %533 = vmatprep.subr.bf16.mxu0 0
  %534 = vmatpush2.bf16.msra.mxu0 0
  %535 = vmatprep.subr.bf16.mxu0 0
  %536 = vmatpush2.bf16.msra.mxu0 0
  %537 = vmatprep.subr.bf16.mxu0 0
  %538 = vmatpush2.bf16.msra.mxu0 0
  %539 = vmatprep.subr.bf16.mxu0 0
  %540 = vmatpush2.bf16.msra.mxu0 0
  %541 = vmatprep.subr.bf16.mxu0 0
  %542 = vmatpush2.bf16.msra.mxu0 0
  %543 = vmatprep.subr.bf16.mxu0 0
  %544 = vmatpush2.bf16.msra.mxu0 0
  %545 = vmatprep.mubr.bf16.mxu0 0
  %546 = vmatmul.mubr.bf16.gmra.mxu0 %v175
  %v547 = vpop.f32.mrf.mxu0
  %v548 = vadd.f32 %v102, %v547
  %v549 = vpop.f32.mrf.mxu0
  %v550 = vadd.f32 %v106, %v549
  %v551 = vpop.f32.mrf.mxu0
  %v552 = vadd.f32 %v102, %v551
  %v553 = vpop.f32.mrf.mxu0
  %v554 = vadd.f32 %v106, %v553
  %555 = vmatprep.mubr.bf16.mxu0 0
  %556 = vmatmul.mubr.bf16.gmra.mxu0 %v176
  %v557 = vpop.f32.mrf.mxu0
  %v558 = vadd.f32 %v102, %v557
  %v559 = vpop.f32.mrf.mxu0
  %v560 = vadd.f32 %v106, %v559
  %v561 = vpop.f32.mrf.mxu0
  %v562 = vadd.f32 %v102, %v561
  %v563 = vpop.f32.mrf.mxu0
  %v564 = vadd.f32 %v106, %v563
  %565 = vmatprep.mubr.bf16.mxu0 0
  %566 = vmatmul.mubr.bf16.gmra.mxu0 %v177
  %v567 = vpop.f32.mrf.mxu0
  %v568 = vadd.f32 %v102, %v567
  %v569 = vpop.f32.mrf.mxu0
  %v570 = vadd.f32 %v106, %v569
  %v571 = vpop.f32.mrf.mxu0
  %v572 = vadd.f32 %v102, %v571
  %v573 = vpop.f32.mrf.mxu0
  %v574 = vadd.f32 %v106, %v573
  %575 = vmatprep.mubr.bf16.mxu0 0
  %576 = vmatmul.mubr.bf16.gmra.mxu0 %v178
  %v577 = vpop.f32.mrf.mxu0
  %v578 = vadd.f32 %v102, %v577
  %v579 = vpop.f32.mrf.mxu0
  %v580 = vadd.f32 %v106, %v579
  %v581 = vpop.f32.mrf.mxu0
  %v582 = vadd.f32 %v102, %v581
  %v583 = vpop.f32.mrf.mxu0
  %v584 = vadd.f32 %v106, %v583
  %585 = vmatprep.mubr.bf16.mxu0 0
  %586 = vmatmul.mubr.bf16.gmra.mxu0 %v179
  %v587 = vpop.f32.mrf.mxu0
  %v588 = vadd.f32 %v102, %v587
  %v589 = vpop.f32.mrf.mxu0
  %v590 = vadd.f32 %v106, %v589
  %v591 = vpop.f32.mrf.mxu0
  %v592 = vadd.f32 %v102, %v591
  %v593 = vpop.f32.mrf.mxu0
  %v594 = vadd.f32 %v106, %v593
  %595 = vmatprep.mubr.bf16.mxu0 0
  %596 = vmatmul.mubr.bf16.gmra.mxu0 %v180
  %v597 = vpop.f32.mrf.mxu0
  %v598 = vadd.f32 %v102, %v597
  %v599 = vpop.f32.mrf.mxu0
  %v600 = vadd.f32 %v106, %v599
  %v601 = vpop.f32.mrf.mxu0
  %v602 = vadd.f32 %v102, %v601
  %v603 = vpop.f32.mrf.mxu0
  %v604 = vadd.f32 %v106, %v603
  %605 = vmatprep.mubr.bf16.mxu0 0
  %606 = vmatmul.mubr.bf16.gmra.mxu0 %v181
  %v607 = vpop.f32.mrf.mxu0
  %v608 = vadd.f32 %v102, %v607
  %v609 = vpop.f32.mrf.mxu0
  %v610 = vadd.f32 %v106, %v609
  %v611 = vpop.f32.mrf.mxu0
  %v612 = vadd.f32 %v102, %v611
  %v613 = vpop.f32.mrf.mxu0
  %v614 = vadd.f32 %v106, %v613
  %615 = vmatprep.mubr.bf16.mxu0 0
  %616 = vmatmul.mubr.bf16.gmra.mxu0 %v182
  %v617 = vpop.f32.mrf.mxu0
  %v618 = vadd.f32 %v102, %v617
  %v619 = vpop.f32.mrf.mxu0
  %v620 = vadd.f32 %v106, %v619
  %v621 = vpop.f32.mrf.mxu0
  %v622 = vadd.f32 %v102, %v621
  %v623 = vpop.f32.mrf.mxu0
  %v624 = vadd.f32 %v106, %v623
  %625 = vmatprep.mubr.bf16.mxu0 0
  %626 = vmatmul.mubr.bf16.gmra.mxu0 %v183
  %v627 = vpop.f32.mrf.mxu0
  %v628 = vadd.f32 %v102, %v627
  %v629 = vpop.f32.mrf.mxu0
  %v630 = vadd.f32 %v106, %v629
  %v631 = vpop.f32.mrf.mxu0
  %v632 = vadd.f32 %v102, %v631
  %v633 = vpop.f32.mrf.mxu0
  %v634 = vadd.f32 %v106, %v633
  %635 = vdwg.mxu0
  %636 = vmatprep.subr.bf16.mxu0 %v444
  %637 = vmatpush1.bf16.msra.mxu0 %v443
  %638 = vmatprep.subr.bf16.mxu0 %v436
  %639 = vmatpush1.bf16.msra.mxu0 %v435
  %640 = vmatprep.subr.bf16.mxu0 %v428
  %641 = vmatpush1.bf16.msra.mxu0 %v427
  %642 = vmatprep.subr.bf16.mxu0 %v420
  %643 = vmatpush1.bf16.msra.mxu0 %v419
  %644 = vmatprep.subr.bf16.mxu0 %v412
  %645 = vmatpush1.bf16.msra.mxu0 %v411
  %646 = vmatprep.subr.bf16.mxu0 %v404
  %647 = vmatpush1.bf16.msra.mxu0 %v403
  %648 = vmatprep.subr.bf16.mxu0 %v396
  %649 = vmatpush1.bf16.msra.mxu0 %v395
  %650 = vmatprep.subr.bf16.mxu0 %v388
  %651 = vmatpush1.bf16.msra.mxu0 %v387
  %652 = vmatprep.subr.bf16.mxu0 0
  %653 = vmatpush2.bf16.msra.mxu0 0
  %654 = vmatprep.subr.bf16.mxu0 0
  %655 = vmatpush2.bf16.msra.mxu0 0
  %656 = vmatprep.subr.bf16.mxu0 0
  %657 = vmatpush2.bf16.msra.mxu0 0
  %658 = vmatprep.subr.bf16.mxu0 0
  %659 = vmatpush2.bf16.msra.mxu0 0
  %660 = vmatprep.subr.bf16.mxu0 0
  %661 = vmatpush2.bf16.msra.mxu0 0
  %662 = vmatprep.subr.bf16.mxu0 0
  %663 = vmatpush2.bf16.msra.mxu0 0
  %664 = vmatprep.subr.bf16.mxu0 0
  %665 = vmatpush2.bf16.msra.mxu0 0
  %666 = vmatprep.subr.bf16.mxu0 0
  %667 = vmatpush2.bf16.msra.mxu0 0
  %668 = vmatprep.mubr.bf16.mxu0 0
  %669 = vmatmul.mubr.bf16.gmra.mxu0 %v175
  %v670 = vpop.f32.mrf.mxu0
  %v671 = vadd.f32 %v110, %v670
  %v672 = vpop.f32.mrf.mxu0
  %v673 = vadd.f32 %v114, %v672
  %v674 = vpop.f32.mrf.mxu0
  %v675 = vadd.f32 %v110, %v674
  %v676 = vpop.f32.mrf.mxu0
  %v677 = vadd.f32 %v114, %v676
  %678 = vmatprep.mubr.bf16.mxu0 0
  %679 = vmatmul.mubr.bf16.gmra.mxu0 %v176
  %v680 = vpop.f32.mrf.mxu0
  %v681 = vadd.f32 %v110, %v680
  %v682 = vpop.f32.mrf.mxu0
  %v683 = vadd.f32 %v114, %v682
  %v684 = vpop.f32.mrf.mxu0
  %v685 = vadd.f32 %v110, %v684
  %v686 = vpop.f32.mrf.mxu0
  %v687 = vadd.f32 %v114, %v686
  %688 = vmatprep.mubr.bf16.mxu0 0
  %689 = vmatmul.mubr.bf16.gmra.mxu0 %v177
  %v690 = vpop.f32.mrf.mxu0
  %v691 = vadd.f32 %v110, %v690
  %v692 = vpop.f32.mrf.mxu0
  %v693 = vadd.f32 %v114, %v692
  %v694 = vpop.f32.mrf.mxu0
  %v695 = vadd.f32 %v110, %v694
  %v696 = vpop.f32.mrf.mxu0
  %v697 = vadd.f32 %v114, %v696
  %698 = vmatprep.mubr.bf16.mxu0 0
  %699 = vmatmul.mubr.bf16.gmra.mxu0 %v178
  %v700 = vpop.f32.mrf.mxu0
  %v701 = vadd.f32 %v110, %v700
  %v702 = vpop.f32.mrf.mxu0
  %v703 = vadd.f32 %v114, %v702
  %v704 = vpop.f32.mrf.mxu0
  %v705 = vadd.f32 %v110, %v704
  %v706 = vpop.f32.mrf.mxu0
  %v707 = vadd.f32 %v114, %v706
  %708 = vmatprep.mubr.bf16.mxu0 0
  %709 = vmatmul.mubr.bf16.gmra.mxu0 %v179
  %v710 = vpop.f32.mrf.mxu0
  %v711 = vadd.f32 %v110, %v710
  %v712 = vpop.f32.mrf.mxu0
  %v713 = vadd.f32 %v114, %v712
  %v714 = vpop.f32.mrf.mxu0
  %v715 = vadd.f32 %v110, %v714
  %v716 = vpop.f32.mrf.mxu0
  %v717 = vadd.f32 %v114, %v716
  %718 = vmatprep.mubr.bf16.mxu0 0
  %719 = vmatmul.mubr.bf16.gmra.mxu0 %v180
  %v720 = vpop.f32.mrf.mxu0
  %v721 = vadd.f32 %v110, %v720
  %v722 = vpop.f32.mrf.mxu0
  %v723 = vadd.f32 %v114, %v722
  %v724 = vpop.f32.mrf.mxu0
  %v725 = vadd.f32 %v110, %v724
  %v726 = vpop.f32.mrf.mxu0
  %v727 = vadd.f32 %v114, %v726
  %728 = vmatprep.mubr.bf16.mxu0 0
  %729 = vmatmul.mubr.bf16.gmra.mxu0 %v181
  %v730 = vpop.f32.mrf.mxu0
  %v731 = vadd.f32 %v110, %v730
  %v732 = vpop.f32.mrf.mxu0
  %v733 = vadd.f32 %v114, %v732
  %v734 = vpop.f32.mrf.mxu0
  %v735 = vadd.f32 %v110, %v734
  %v736 = vpop.f32.mrf.mxu0
  %v737 = vadd.f32 %v114, %v736
  %738 = vmatprep.mubr.bf16.mxu0 0
  %739 = vmatmul.mubr.bf16.gmra.mxu0 %v182
  %v740 = vpop.f32.mrf.mxu0
  %v741 = vadd.f32 %v110, %v740
  %v742 = vpop.f32.mrf.mxu0
  %v743 = vadd.f32 %v114, %v742
  %v744 = vpop.f32.mrf.mxu0
  %v745 = vadd.f32 %v110, %v744
  %v746 = vpop.f32.mrf.mxu0
  %v747 = vadd.f32 %v114, %v746
  %748 = vmatprep.mubr.bf16.mxu0 0
  %749 = vmatmul.mubr.bf16.gmra.mxu0 %v183
  %v750 = vpop.f32.mrf.mxu0
  %v751 = vadd.f32 %v110, %v750
  %v752 = vpop.f32.mrf.mxu0
  %v753 = vadd.f32 %v114, %v752
  %v754 = vpop.f32.mrf.mxu0
  %v755 = vadd.f32 %v110, %v754
  %v756 = vpop.f32.mrf.mxu0
  %v757 = vadd.f32 %v114, %v756
  %758 = vdwg.mxu0
  %759 = vmatprep.subr.bf16.mxu0 %v446
  %760 = vmatpush1.bf16.msra.mxu0 %v445
  %761 = vmatprep.subr.bf16.mxu0 %v438
  %762 = vmatpush1.bf16.msra.mxu0 %v437
  %763 = vmatprep.subr.bf16.mxu0 %v430
  %764 = vmatpush1.bf16.msra.mxu0 %v429
  %765 = vmatprep.subr.bf16.mxu0 %v422
  %766 = vmatpush1.bf16.msra.mxu0 %v421
  %767 = vmatprep.subr.bf16.mxu0 %v414
  %768 = vmatpush1.bf16.msra.mxu0 %v413
  %769 = vmatprep.subr.bf16.mxu0 %v406
  %770 = vmatpush1.bf16.msra.mxu0 %v405
  %771 = vmatprep.subr.bf16.mxu0 %v398
  %772 = vmatpush1.bf16.msra.mxu0 %v397
  %773 = vmatprep.subr.bf16.mxu0 %v390
  %774 = vmatpush1.bf16.msra.mxu0 %v389
  %775 = vmatprep.subr.bf16.mxu0 0
  %776 = vmatpush2.bf16.msra.mxu0 0
  %777 = vmatprep.subr.bf16.mxu0 0
  %778 = vmatpush2.bf16.msra.mxu0 0
  %779 = vmatprep.subr.bf16.mxu0 0
  %780 = vmatpush2.bf16.msra.mxu0 0
  %781 = vmatprep.subr.bf16.mxu0 0
  %782 = vmatpush2.bf16.msra.mxu0 0
  %783 = vmatprep.subr.bf16.mxu0 0
  %784 = vmatpush2.bf16.msra.mxu0 0
  %785 = vmatprep.subr.bf16.mxu0 0
  %786 = vmatpush2.bf16.msra.mxu0 0
  %787 = vmatprep.subr.bf16.mxu0 0
  %788 = vmatpush2.bf16.msra.mxu0 0
  %789 = vmatprep.subr.bf16.mxu0 0
  %790 = vmatpush2.bf16.msra.mxu0 0
  %791 = vmatprep.mubr.bf16.mxu0 0
  %792 = vmatmul.mubr.bf16.gmra.mxu0 %v175
  %v793 = vpop.f32.mrf.mxu0
  %v794 = vadd.f32 %v118, %v793
  %v795 = vpop.f32.mrf.mxu0
  %v796 = vadd.f32 %v122, %v795
  %v797 = vpop.f32.mrf.mxu0
  %v798 = vadd.f32 %v118, %v797
  %v799 = vpop.f32.mrf.mxu0
  %v800 = vadd.f32 %v122, %v799
  %801 = vmatprep.mubr.bf16.mxu0 0
  %802 = vmatmul.mubr.bf16.gmra.mxu0 %v176
  %v803 = vpop.f32.mrf.mxu0
  %v804 = vadd.f32 %v118, %v803
  %v805 = vpop.f32.mrf.mxu0
  %v806 = vadd.f32 %v122, %v805
  %v807 = vpop.f32.mrf.mxu0
  %v808 = vadd.f32 %v118, %v807
  %v809 = vpop.f32.mrf.mxu0
  %v810 = vadd.f32 %v122, %v809
  %811 = vmatprep.mubr.bf16.mxu0 0
  %812 = vmatmul.mubr.bf16.gmra.mxu0 %v177
  %v813 = vpop.f32.mrf.mxu0
  %v814 = vadd.f32 %v118, %v813
  %v815 = vpop.f32.mrf.mxu0
  %v816 = vadd.f32 %v122, %v815
  %v817 = vpop.f32.mrf.mxu0
  %v818 = vadd.f32 %v118, %v817
  %v819 = vpop.f32.mrf.mxu0
  %v820 = vadd.f32 %v122, %v819
  %821 = vmatprep.mubr.bf16.mxu0 0
  %822 = vmatmul.mubr.bf16.gmra.mxu0 %v178
  %v823 = vpop.f32.mrf.mxu0
  %v824 = vadd.f32 %v118, %v823
  %v825 = vpop.f32.mrf.mxu0
  %v826 = vadd.f32 %v122, %v825
  %v827 = vpop.f32.mrf.mxu0
  %v828 = vadd.f32 %v118, %v827
  %v829 = vpop.f32.mrf.mxu0
  %v830 = vadd.f32 %v122, %v829
  %831 = vmatprep.mubr.bf16.mxu0 0
  %832 = vmatmul.mubr.bf16.gmra.mxu0 %v179
  %v833 = vpop.f32.mrf.mxu0
  %v834 = vadd.f32 %v118, %v833
  %v835 = vpop.f32.mrf.mxu0
  %v836 = vadd.f32 %v122, %v835
  %v837 = vpop.f32.mrf.mxu0
  %v838 = vadd.f32 %v118, %v837
  %v839 = vpop.f32.mrf.mxu0
  %v840 = vadd.f32 %v122, %v839
  %841 = vmatprep.mubr.bf16.mxu0 0
  %842 = vmatmul.mubr.bf16.gmra.mxu0 %v180
  %v843 = vpop.f32.mrf.mxu0
  %v844 = vadd.f32 %v118, %v843
  %v845 = vpop.f32.mrf.mxu0
  %v846 = vadd.f32 %v122, %v845
  %v847 = vpop.f32.mrf.mxu0
  %v848 = vadd.f32 %v118, %v847
  %v849 = vpop.f32.mrf.mxu0
  %v850 = vadd.f32 %v122, %v849
  %851 = vmatprep.mubr.bf16.mxu0 0
  %852 = vmatmul.mubr.bf16.gmra.mxu0 %v181
  %v853 = vpop.f32.mrf.mxu0
  %v854 = vadd.f32 %v118, %v853
  %v855 = vpop.f32.mrf.mxu0
  %v856 = vadd.f32 %v122, %v855
  %v857 = vpop.f32.mrf.mxu0
  %v858 = vadd.f32 %v118, %v857
  %v859 = vpop.f32.mrf.mxu0
  %v860 = vadd.f32 %v122, %v859
  %861 = vmatprep.mubr.bf16.mxu0 0
  %862 = vmatmul.mubr.bf16.gmra.mxu0 %v182
  %v863 = vpop.f32.mrf.mxu0
  %v864 = vadd.f32 %v118, %v863
  %v865 = vpop.f32.mrf.mxu0
  %v866 = vadd.f32 %v122, %v865
  %v867 = vpop.f32.mrf.mxu0
  %v868 = vadd.f32 %v118, %v867
  %v869 = vpop.f32.mrf.mxu0
  %v870 = vadd.f32 %v122, %v869
  %871 = vmatprep.mubr.bf16.mxu0 0
  %872 = vmatmul.mubr.bf16.gmra.mxu0 %v183
  %v873 = vpop.f32.mrf.mxu0
  %v874 = vadd.f32 %v118, %v873
  %v875 = vpop.f32.mrf.mxu0
  %v876 = vadd.f32 %v122, %v875
  %v877 = vpop.f32.mrf.mxu0
  %v878 = vadd.f32 %v118, %v877
  %v879 = vpop.f32.mrf.mxu0
  %v880 = vadd.f32 %v122, %v879
  %881 = vdwg.mxu0
  %882 = vmatprep.subr.bf16.mxu0 %v448
  %883 = vmatpush1.bf16.msra.mxu0 %v447
  %884 = vmatprep.subr.bf16.mxu0 %v440
  %885 = vmatpush1.bf16.msra.mxu0 %v439
  %886 = vmatprep.subr.bf16.mxu0 %v432
  %887 = vmatpush1.bf16.msra.mxu0 %v431
  %888 = vmatprep.subr.bf16.mxu0 %v424
  %889 = vmatpush1.bf16.msra.mxu0 %v423
  %890 = vmatprep.subr.bf16.mxu0 %v416
  %891 = vmatpush1.bf16.msra.mxu0 %v415
  %892 = vmatprep.subr.bf16.mxu0 %v408
  %893 = vmatpush1.bf16.msra.mxu0 %v407
  %894 = vmatprep.subr.bf16.mxu0 %v400
  %895 = vmatpush1.bf16.msra.mxu0 %v399
  %896 = vmatprep.subr.bf16.mxu0 %v392
  %897 = vmatpush1.bf16.msra.mxu0 %v391
  %898 = vmatprep.subr.bf16.mxu0 0
  %899 = vmatpush2.bf16.msra.mxu0 0
  %900 = vmatprep.subr.bf16.mxu0 0
  %901 = vmatpush2.bf16.msra.mxu0 0
  %902 = vmatprep.subr.bf16.mxu0 0
  %903 = vmatpush2.bf16.msra.mxu0 0
  %904 = vmatprep.subr.bf16.mxu0 0
  %905 = vmatpush2.bf16.msra.mxu0 0
  %906 = vmatprep.subr.bf16.mxu0 0
  %907 = vmatpush2.bf16.msra.mxu0 0
  %908 = vmatprep.subr.bf16.mxu0 0
  %909 = vmatpush2.bf16.msra.mxu0 0
  %910 = vmatprep.subr.bf16.mxu0 0
  %911 = vmatpush2.bf16.msra.mxu0 0
  %912 = vmatprep.subr.bf16.mxu0 0
  %913 = vmatpush2.bf16.msra.mxu0 0
  %914 = vmatprep.mubr.bf16.mxu0 0
  %915 = vmatmul.mubr.bf16.gmra.mxu0 %v175
  %v916 = vpop.f32.mrf.mxu0
  %v917 = vadd.f32 %v126, %v916
  %v918 = vpop.f32.mrf.mxu0
  %v919 = vadd.f32 %v130, %v918
  %v920 = vpop.f32.mrf.mxu0
  %v921 = vadd.f32 %v126, %v920
  %v922 = vpop.f32.mrf.mxu0
  %v923 = vadd.f32 %v130, %v922
  %924 = vmatprep.mubr.bf16.mxu0 0
  %925 = vmatmul.mubr.bf16.gmra.mxu0 %v176
  %v926 = vpop.f32.mrf.mxu0
  %v927 = vadd.f32 %v126, %v926
  %v928 = vpop.f32.mrf.mxu0
  %v929 = vadd.f32 %v130, %v928
  %v930 = vpop.f32.mrf.mxu0
  %v931 = vadd.f32 %v126, %v930
  %v932 = vpop.f32.mrf.mxu0
  %v933 = vadd.f32 %v130, %v932
  %934 = vmatprep.mubr.bf16.mxu0 0
  %935 = vmatmul.mubr.bf16.gmra.mxu0 %v177
  %v936 = vpop.f32.mrf.mxu0
  %v937 = vadd.f32 %v126, %v936
  %v938 = vpop.f32.mrf.mxu0
  %v939 = vadd.f32 %v130, %v938
  %v940 = vpop.f32.mrf.mxu0
  %v941 = vadd.f32 %v126, %v940
  %v942 = vpop.f32.mrf.mxu0
  %v943 = vadd.f32 %v130, %v942
  %944 = vmatprep.mubr.bf16.mxu0 0
  %945 = vmatmul.mubr.bf16.gmra.mxu0 %v178
  %v946 = vpop.f32.mrf.mxu0
  %v947 = vadd.f32 %v126, %v946
  %v948 = vpop.f32.mrf.mxu0
  %v949 = vadd.f32 %v130, %v948
  %v950 = vpop.f32.mrf.mxu0
  %v951 = vadd.f32 %v126, %v950
  %v952 = vpop.f32.mrf.mxu0
  %v953 = vadd.f32 %v130, %v952
  %954 = vmatprep.mubr.bf16.mxu0 0
  %955 = vmatmul.mubr.bf16.gmra.mxu0 %v179
  %v956 = vpop.f32.mrf.mxu0
  %v957 = vadd.f32 %v126, %v956
  %v958 = vpop.f32.mrf.mxu0
  %v959 = vadd.f32 %v130, %v958
  %v960 = vpop.f32.mrf.mxu0
  %v961 = vadd.f32 %v126, %v960
  %v962 = vpop.f32.mrf.mxu0
  %v963 = vadd.f32 %v130, %v962
  %964 = vmatprep.mubr.bf16.mxu0 0
  %965 = vmatmul.mubr.bf16.gmra.mxu0 %v180
  %v966 = vpop.f32.mrf.mxu0
  %v967 = vadd.f32 %v126, %v966
  %v968 = vpop.f32.mrf.mxu0
  %v969 = vadd.f32 %v130, %v968
  %v970 = vpop.f32.mrf.mxu0
  %v971 = vadd.f32 %v126, %v970
  %v972 = vpop.f32.mrf.mxu0
  %v973 = vadd.f32 %v130, %v972
  %974 = vmatprep.mubr.bf16.mxu0 0
  %975 = vmatmul.mubr.bf16.gmra.mxu0 %v181
  %v976 = vpop.f32.mrf.mxu0
  %v977 = vadd.f32 %v126, %v976
  %v978 = vpop.f32.mrf.mxu0
  %v979 = vadd.f32 %v130, %v978
  %v980 = vpop.f32.mrf.mxu0
  %v981 = vadd.f32 %v126, %v980
  %v982 = vpop.f32.mrf.mxu0
  %v983 = vadd.f32 %v130, %v982
  %984 = vmatprep.mubr.bf16.mxu0 0
  %985 = vmatmul.mubr.bf16.gmra.mxu0 %v182
  %v986 = vpop.f32.mrf.mxu0
  %v987 = vadd.f32 %v126, %v986
  %v988 = vpop.f32.mrf.mxu0
  %v989 = vadd.f32 %v130, %v988
  %v990 = vpop.f32.mrf.mxu0
  %v991 = vadd.f32 %v126, %v990
  %v992 = vpop.f32.mrf.mxu0
  %v993 = vadd.f32 %v130, %v992
  %994 = vmatprep.mubr.bf16.mxu0 0
  %995 = vmatmul.mubr.bf16.gmra.mxu0 %v183
  %v996 = vpop.f32.mrf.mxu0
  %v997 = vadd.f32 %v126, %v996
  %v998 = vpop.f32.mrf.mxu0
  %v999 = vadd.f32 %v130, %v998
  %v1000 = vpop.f32.mrf.mxu0
  %v1001 = vadd.f32 %v126, %v1000
  %v1002 = vpop.f32.mrf.mxu0
  %v1003 = vadd.f32 %v130, %v1002
  %1004 = vdwg.mxu0
  %1005 = vst [vmem:[%s3] sm:$0xff] %v548
  %1006 = vst [vmem:[%s3 + $0x8] sm:$0xff] %v550
  %1007 = vst [vmem:[%s3 + $0x10] sm:$0xff] %v671
  %1008 = vst [vmem:[%s3 + $0x18] sm:$0xff] %v673
  %1009 = vst [vmem:[%s3 + $0x20] sm:$0xff] %v794
  %1010 = vst [vmem:[%s3 + $0x28] sm:$0xff] %v796
  %1011 = vst [vmem:[%s3 + $0x30] sm:$0xff] %v917
  %1012 = vst [vmem:[%s3 + $0x38] sm:$0xff] %v919
  %1013 = vst [vmem:[%s3 + $0x40] sm:$0xff] %v552
  %1014 = vst [vmem:[%s3 + $0x48] sm:$0xff] %v554
  %1015 = vst [vmem:[%s3 + $0x50] sm:$0xff] %v675
  %1016 = vst [vmem:[%s3 + $0x58] sm:$0xff] %v677
  %1017 = vst [vmem:[%s3 + $0x60] sm:$0xff] %v798
  %1018 = vst [vmem:[%s3 + $0x68] sm:$0xff] %v800
  %1019 = vst [vmem:[%s3 + $0x70] sm:$0xff] %v921
  %1020 = vst [vmem:[%s3 + $0x78] sm:$0xff] %v923
  %1021 = vst [vmem:[%s3 + $0x80] sm:$0xff] %v558
  %1022 = vst [vmem:[%s3 + $0x88] sm:$0xff] %v560
  %1023 = vst [vmem:[%s3 + $0x90] sm:$0xff] %v681
  %1024 = vst [vmem:[%s3 + $0x98] sm:$0xff] %v683
  %1025 = vst [vmem:[%s3 + $0xa0] sm:$0xff] %v804
  %1026 = vst [vmem:[%s3 + $0xa8] sm:$0xff] %v806
  %1027 = vst [vmem:[%s3 + $0xb0] sm:$0xff] %v927
  %1028 = vst [vmem:[%s3 + $0xb8] sm:$0xff] %v929
  %1029 = vst [vmem:[%s3 + $0xc0] sm:$0xff] %v562
  %1030 = vst [vmem:[%s3 + $0xc8] sm:$0xff] %v564
  %1031 = vst [vmem:[%s3 + $0xd0] sm:$0xff] %v685
  %1032 = vst [vmem:[%s3 + $0xd8] sm:$0xff] %v687
  %1033 = vst [vmem:[%s3 + $0xe0] sm:$0xff] %v808
  %1034 = vst [vmem:[%s3 + $0xe8] sm:$0xff] %v810
  %1035 = vst [vmem:[%s3 + $0xf0] sm:$0xff] %v931
  %1036 = vst [vmem:[%s3 + $0xf8] sm:$0xff] %v933
  %1037 = vst [vmem:[%s3 + $0x100] sm:$0xff] %v568
  %1038 = vst [vmem:[%s3 + $0x108] sm:$0xff] %v570
  %1039 = vst [vmem:[%s3 + $0x110] sm:$0xff] %v691
  %1040 = vst [vmem:[%s3 + $0x118] sm:$0xff] %v693
  %1041 = vst [vmem:[%s3 + $0x120] sm:$0xff] %v814
  %1042 = vst [vmem:[%s3 + $0x128] sm:$0xff] %v816
  %1043 = vst [vmem:[%s3 + $0x130] sm:$0xff] %v937
  %1044 = vst [vmem:[%s3 + $0x138] sm:$0xff] %v939
  %1045 = vst [vmem:[%s3 + $0x140] sm:$0xff] %v572
  %1046 = vst [vmem:[%s3 + $0x148] sm:$0xff] %v574
  %1047 = vst [vmem:[%s3 + $0x150] sm:$0xff] %v695
  %1048 = vst [vmem:[%s3 + $0x158] sm:$0xff] %v697
  %1049 = vst [vmem:[%s3 + $0x160] sm:$0xff] %v818
  %1050 = vst [vmem:[%s3 + $0x168] sm:$0xff] %v820
  %1051 = vst [vmem:[%s3 + $0x170] sm:$0xff] %v941
  %1052 = vst [vmem:[%s3 + $0x178] sm:$0xff] %v943
  %1053 = vst [vmem:[%s3 + $0x180] sm:$0xff] %v578
  %1054 = vst [vmem:[%s3 + $0x188] sm:$0xff] %v580
  %1055 = vst [vmem:[%s3 + $0x190] sm:$0xff] %v701
  %1056 = vst [vmem:[%s3 + $0x198] sm:$0xff] %v703
  %1057 = vst [vmem:[%s3 + $0x1a0] sm:$0xff] %v824
  %1058 = vst [vmem:[%s3 + $0x1a8] sm:$0xff] %v826
  %1059 = vst [vmem:[%s3 + $0x1b0] sm:$0xff] %v947
  %1060 = vst [vmem:[%s3 + $0x1b8] sm:$0xff] %v949
  %1061 = vst [vmem:[%s3 + $0x1c0] sm:$0xff] %v582
  %1062 = vst [vmem:[%s3 + $0x1c8] sm:$0xff] %v584
  %1063 = vst [vmem:[%s3 + $0x1d0] sm:$0xff] %v705
  %1064 = vst [vmem:[%s3 + $0x1d8] sm:$0xff] %v707
  %1065 = vst [vmem:[%s3 + $0x1e0] sm:$0xff] %v828
  %1066 = vst [vmem:[%s3 + $0x1e8] sm:$0xff] %v830
  %1067 = vst [vmem:[%s3 + $0x1f0] sm:$0xff] %v951
  %1068 = vst [vmem:[%s3 + $0x1f8] sm:$0xff] %v953
  %1069 = vst [vmem:[%s3 + $0x200] sm:$0xff] %v588
  %1070 = vst [vmem:[%s3 + $0x208] sm:$0xff] %v590
  %1071 = vst [vmem:[%s3 + $0x210] sm:$0xff] %v711
  %1072 = vst [vmem:[%s3 + $0x218] sm:$0xff] %v713
  %1073 = vst [vmem:[%s3 + $0x220] sm:$0xff] %v834
  %1074 = vst [vmem:[%s3 + $0x228] sm:$0xff] %v836
  %1075 = vst [vmem:[%s3 + $0x230] sm:$0xff] %v957
  %1076 = vst [vmem:[%s3 + $0x238] sm:$0xff] %v959
  %1077 = vst [vmem:[%s3 + $0x240] sm:$0xff] %v592
  %1078 = vst [vmem:[%s3 + $0x248] sm:$0xff] %v594
  %1079 = vst [vmem:[%s3 + $0x250] sm:$0xff] %v715
  %1080 = vst [vmem:[%s3 + $0x258] sm:$0xff] %v717
  %1081 = vst [vmem:[%s3 + $0x260] sm:$0xff] %v838
  %1082 = vst [vmem:[%s3 + $0x268] sm:$0xff] %v840
  %1083 = vst [vmem:[%s3 + $0x270] sm:$0xff] %v961
  %1084 = vst [vmem:[%s3 + $0x278] sm:$0xff] %v963
  %1085 = vst [vmem:[%s3 + $0x280] sm:$0xff] %v598
  %1086 = vst [vmem:[%s3 + $0x288] sm:$0xff] %v600
  %1087 = vst [vmem:[%s3 + $0x290] sm:$0xff] %v721
  %1088 = vst [vmem:[%s3 + $0x298] sm:$0xff] %v723
  %1089 = vst [vmem:[%s3 + $0x2a0] sm:$0xff] %v844
  %1090 = vst [vmem:[%s3 + $0x2a8] sm:$0xff] %v846
  %1091 = vst [vmem:[%s3 + $0x2b0] sm:$0xff] %v967
  %1092 = vst [vmem:[%s3 + $0x2b8] sm:$0xff] %v969
  %1093 = vst [vmem:[%s3 + $0x2c0] sm:$0xff] %v602
  %1094 = vst [vmem:[%s3 + $0x2c8] sm:$0xff] %v604
  %1095 = vst [vmem:[%s3 + $0x2d0] sm:$0xff] %v725
  %1096 = vst [vmem:[%s3 + $0x2d8] sm:$0xff] %v727
  %1097 = vst [vmem:[%s3 + $0x2e0] sm:$0xff] %v848
  %1098 = vst [vmem:[%s3 + $0x2e8] sm:$0xff] %v850
  %1099 = vst [vmem:[%s3 + $0x2f0] sm:$0xff] %v971
  %1100 = vst [vmem:[%s3 + $0x2f8] sm:$0xff] %v973
  %1101 = vst [vmem:[%s3 + $0x300] sm:$0xff] %v608
  %1102 = vst [vmem:[%s3 + $0x308] sm:$0xff] %v610
  %1103 = vst [vmem:[%s3 + $0x310] sm:$0xff] %v731
  %1104 = vst [vmem:[%s3 + $0x318] sm:$0xff] %v733
  %1105 = vst [vmem:[%s3 + $0x320] sm:$0xff] %v854
  %1106 = vst [vmem:[%s3 + $0x328] sm:$0xff] %v856
  %1107 = vst [vmem:[%s3 + $0x330] sm:$0xff] %v977
  %1108 = vst [vmem:[%s3 + $0x338] sm:$0xff] %v979
  %1109 = vst [vmem:[%s3 + $0x340] sm:$0xff] %v612
  %1110 = vst [vmem:[%s3 + $0x348] sm:$0xff] %v614
  %1111 = vst [vmem:[%s3 + $0x350] sm:$0xff] %v735
  %1112 = vst [vmem:[%s3 + $0x358] sm:$0xff] %v737
  %1113 = vst [vmem:[%s3 + $0x360] sm:$0xff] %v858
  %1114 = vst [vmem:[%s3 + $0x368] sm:$0xff] %v860
  %1115 = vst [vmem:[%s3 + $0x370] sm:$0xff] %v981
  %1116 = vst [vmem:[%s3 + $0x378] sm:$0xff] %v983
  %1117 = vst [vmem:[%s3 + $0x380] sm:$0xff] %v618
  %1118 = vst [vmem:[%s3 + $0x388] sm:$0xff] %v620
  %1119 = vst [vmem:[%s3 + $0x390] sm:$0xff] %v741
  %1120 = vst [vmem:[%s3 + $0x398] sm:$0xff] %v743
  %1121 = vst [vmem:[%s3 + $0x3a0] sm:$0xff] %v864
  %1122 = vst [vmem:[%s3 + $0x3a8] sm:$0xff] %v866
  %1123 = vst [vmem:[%s3 + $0x3b0] sm:$0xff] %v987
  %1124 = vst [vmem:[%s3 + $0x3b8] sm:$0xff] %v989
  %1125 = vst [vmem:[%s3 + $0x3c0] sm:$0xff] %v622
  %1126 = vst [vmem:[%s3 + $0x3c8] sm:$0xff] %v624
  %1127 = vst [vmem:[%s3 + $0x3d0] sm:$0xff] %v745
  %1128 = vst [vmem:[%s3 + $0x3d8] sm:$0xff] %v747
  %1129 = vst [vmem:[%s3 + $0x3e0] sm:$0xff] %v868
  %1130 = vst [vmem:[%s3 + $0x3e8] sm:$0xff] %v870
  %1131 = vst [vmem:[%s3 + $0x3f0] sm:$0xff] %v991
  %1132 = vst [vmem:[%s3 + $0x3f8] sm:$0xff] %v993
  %1133 = vst [vmem:[%s3 + $0x400] sm:$0xff] %v628
  %1134 = vst [vmem:[%s3 + $0x408] sm:$0xff] %v630
  %1135 = vst [vmem:[%s3 + $0x410] sm:$0xff] %v751
  %1136 = vst [vmem:[%s3 + $0x418] sm:$0xff] %v753
  %1137 = vst [vmem:[%s3 + $0x420] sm:$0xff] %v874
  %1138 = vst [vmem:[%s3 + $0x428] sm:$0xff] %v876
  %1139 = vst [vmem:[%s3 + $0x430] sm:$0xff] %v997
  %1140 = vst [vmem:[%s3 + $0x438] sm:$0xff] %v999
  %1141 = vst [vmem:[%s3 + $0x440] sm:$0xff] %v632
  %1142 = vst [vmem:[%s3 + $0x448] sm:$0xff] %v634
  %1143 = vst [vmem:[%s3 + $0x450] sm:$0xff] %v755
  %1144 = vst [vmem:[%s3 + $0x458] sm:$0xff] %v757
  %1145 = vst [vmem:[%s3 + $0x460] sm:$0xff] %v878
  %1146 = vst [vmem:[%s3 + $0x468] sm:$0xff] %v880
  %1147 = vst [vmem:[%s3 + $0x470] sm:$0xff] %v1001
  %1148 = vst [vmem:[%s3 + $0x478] sm:$0xff] %v1003
  // Predicated region
  $region14: #{image_captioning_forward.5} parent=0 // pred_check
    _
  $region15: #{image_captioning_forward.5} parent=0 // pred_check_branch
    %1150 = sbr.rel (0) target = $region17
  $region16: #{image_captioning_forward.5} parent=0 // pred_region
    _
  $region17: #{image_captioning_forward.5} parent=0 // pred_fallthru
    _
  // Predicated region
  $region18: #{image_captioning_forward.5} parent=0 // pred_check
    _
  $region19: #{image_captioning_forward.5} parent=0 // pred_check_branch
    %1152 = sbr.rel (0) target = $region21
  $region20: #{image_captioning_forward.5} parent=0 // pred_region
    _
  $region21: #{image_captioning_forward.5} parent=0 // pred_fallthru
    _

</llo_original>
